<compile_context>
chip_gen: v6e
topology: v6e:2x2x1
jax: 0.10.0
libtpu: 0.0.40
codegen_flags: <defaults>
</compile_context>

<pallas_src>
import jax
import jax.numpy as jnp
from jax.experimental import pallas as pl
from jax.experimental.pallas import tpu as pltpu

DROPOUT = 0.5            # training-only, unused at inference
HIDDEN_DIM = 64
HIDDEN_LAYERS = 2
WORD_EMBEDDING_DIM = 300


# ----------------------------- Pallas kernel --------------------------------
def _textlstm_kernel(gx0_ref, whh0_ref, w1f_ref, w1b_ref, whh1f_ref,
                     b1f_ref, b1b_ref, out_ref, y0_sc):
    """Fused 2-layer bidirectional LSTM recurrence (inference).

    gx0_ref   : (T, Bp, 8H) layer-0 precomputed input gates, fwd/bwd interleaved
                per gate block, columns (i_f,i_b,f_f,f_b,o_f,o_b,g_f,g_b); the
                bwd half is pre-reversed in time so step t carries bwd time T-1-t.
    whh0_ref  : (2H, 8H) block-diagonal fwd/bwd layer-0 hidden-hidden weight.
    w1f_ref/w1b_ref : (2H, 4H) layer-1 input-hidden weights (transposed, i,f,o,g).
    whh1f_ref : (H, 4H)  layer-1 forward hidden-hidden weight.
    b1f_ref/b1b_ref : (1, 4H) layer-1 combined biases.
    out_ref   : (Bp, 2H) final-timestep output [h1_fwd, h1_bwd].
    y0_sc     : (T*Bp, 2H) VMEM scratch holding the layer-0 output, time-major.
    """
    T, Bp, G2 = gx0_ref.shape
    H2 = G2 // 4            # = 2H (both directions)
    H = H2 // 2
    f32 = jnp.float32

    def cell(gates, c, nH):
        # gate column order (i, f, o, g), each block nH wide:
        # one contiguous sigmoid over 3*nH lanes, one tanh over nH lanes.
        s = jax.nn.sigmoid(gates[:, :3 * nH])
        g = jnp.tanh(gates[:, 3 * nH:])
        i = s[:, 0 * nH:1 * nH]
        f = s[:, 1 * nH:2 * nH]
        o = s[:, 2 * nH:3 * nH]
        c_new = f * c + i * g
        return o * jnp.tanh(c_new), c_new

    # ---- layer 0: forward & backward directions fused into ONE recurrence ----
    h = jnp.zeros((Bp, H2), f32)        # [h_fwd | h_bwd]
    c = jnp.zeros((Bp, H2), f32)        # [c_fwd | c_bwd]
    for t in range(T):
        gates = gx0_ref[t] + jnp.dot(h, whh0_ref[...],
                                     preferred_element_type=f32)
        h, c = cell(gates, c, H2)
        # fwd hidden belongs to time t, bwd hidden to time T-1-t
        y0_sc[t * Bp:(t + 1) * Bp, 0:H] = h[:, 0:H]
        y0_sc[(T - 1 - t) * Bp:(T - t) * Bp, H:2 * H] = h[:, H:2 * H]

    # ---- layer 1: batched input projection over all T*Bp rows (one MXU pass) --
    y0 = y0_sc[...]                                             # (T*Bp, 2H)
    g1f = jnp.dot(y0, w1f_ref[...], preferred_element_type=f32) + b1f_ref[...]

    # layer-1 forward recurrence; only the final hidden state is needed
    h1 = jnp.zeros((Bp, H), f32)
    c1 = jnp.zeros((Bp, H), f32)
    for t in range(T):
        gates = g1f[t * Bp:(t + 1) * Bp, :] + jnp.dot(
            h1, whh1f_ref[...], preferred_element_type=f32)
        h1, c1 = cell(gates, c1, H)

    # layer-1 backward hidden at the last position == its first step from a zero
    # state, so the h @ W_hh term vanishes: one cell evaluation suffices.
    g1b_last = jnp.dot(y0_sc[(T - 1) * Bp:T * Bp, :], w1b_ref[...],
                       preferred_element_type=f32) + b1b_ref[...]
    h1b, _ = cell(g1b_last, jnp.zeros((Bp, H), f32), H)

    out_ref[:, 0:H] = h1
    out_ref[:, H:2 * H] = h1b


# ----------------------------- host-side helpers ----------------------------
def _reorder_ifog(a):
    """Reorder last-axis gate blocks from PyTorch (i,f,g,o) to (i,f,o,g)."""
    H = a.shape[-1] // 4
    return jnp.concatenate([a[..., :2 * H], a[..., 3 * H:], a[..., 2 * H:3 * H]],
                           axis=-1)


def _interleave_dirs(af, ab):
    """fwd/bwd (..., 4H) arrays (both in i,f,o,g order) -> (..., 8H) with
    columns (i_f,i_b,f_f,f_b,o_f,o_b,g_f,g_b)."""
    H = af.shape[-1] // 4
    lead = af.shape[:-1]
    af4 = af.reshape(*lead, 4, H)
    ab4 = ab.reshape(*lead, 4, H)
    return jnp.stack([af4, ab4], axis=-2).reshape(*lead, 8 * H)


@jax.jit
def text_lstm_forward(params, token_ids):
    """token_ids: (B, T) int32 -> (B, 2*HIDDEN_DIM), matching PyTorch out[:, -1, :]."""
    B, T = token_ids.shape
    H = HIDDEN_DIM
    Bp = ((B + 7) // 8) * 8                                  # pad batch to sublane multiple

    # Embedding gather + transpose to time-major (plain-JAX glue, not the hot path).
    emb = jnp.take(params["embedding"], token_ids, axis=0)   # (B, T, E)
    x = jnp.transpose(emb, (1, 0, 2)).astype(jnp.float32)    # (T, B, E)
    x = jnp.pad(x, ((0, 0), (0, Bp - B), (0, 0)))            # (T, Bp, E)
    x_flat = x.reshape(T * Bp, -1)                           # (T*Bp, E)

    p0, p1 = params["lstm"]

    # Hoisted layer-0 input projections: one big batched matmul per direction,
    # with bias folded in and gate columns reordered to (i,f,o,g).
    def proj(w_ih, b_ih, b_hh):
        w = _reorder_ifog(jnp.asarray(w_ih, jnp.float32).T)               # (E, 4H)
        b = _reorder_ifog((b_ih + b_hh).astype(jnp.float32))[None, :]     # (1, 4H)
        return (x_flat @ w + b).reshape(T, Bp, 4 * H)

    gx0f = proj(p0["w_ih_f"], p0["b_ih_f"], p0["b_hh_f"])    # (T, Bp, 4H)
    gx0b = proj(p0["w_ih_b"], p0["b_ih_b"], p0["b_hh_b"])    # (T, Bp, 4H)
    # Interleave directions; reverse the bwd gates over time so combined step t
    # carries fwd time t and bwd time T-1-t.
    gx0 = _interleave_dirs(gx0f, gx0b[::-1])                 # (T, Bp, 8H)

    # Block-diagonal fwd/bwd hidden-hidden weight for the fused layer-0 step.
    whh0f_r = _reorder_ifog(jnp.asarray(p0["w_hh_f"], jnp.float32).T)     # (H, 4H)
    whh0b_r = _reorder_ifog(jnp.asarray(p0["w_hh_b"], jnp.float32).T)     # (H, 4H)
    zeros_h = jnp.zeros_like(whh0f_r)
    whh0 = jnp.concatenate([_interleave_dirs(whh0f_r, zeros_h),
                            _interleave_dirs(zeros_h, whh0b_r)], axis=0)  # (2H, 8H)

    w1f = _reorder_ifog(jnp.asarray(p1["w_ih_f"], jnp.float32).T)         # (2H, 4H)
    w1b = _reorder_ifog(jnp.asarray(p1["w_ih_b"], jnp.float32).T)         # (2H, 4H)
    whh1f = _reorder_ifog(jnp.asarray(p1["w_hh_f"], jnp.float32).T)       # (H, 4H)
    b1f = _reorder_ifog((p1["b_ih_f"] + p1["b_hh_f"]).astype(jnp.float32))[None, :]
    b1b = _reorder_ifog((p1["b_ih_b"] + p1["b_hh_b"]).astype(jnp.float32))[None, :]

    out = pl.pallas_call(
        _textlstm_kernel,
        out_shape=jax.ShapeDtypeStruct((Bp, 2 * H), jnp.float32),
        grid_spec=pltpu.PrefetchScalarGridSpec(
            num_scalar_prefetch=0,
            grid=(1,),
            in_specs=[
                pl.BlockSpec((T, Bp, 8 * H), lambda i: (0, 0, 0)),   # gx0
                pl.BlockSpec((2 * H, 8 * H), lambda i: (0, 0)),      # whh0 (block-diag)
                pl.BlockSpec((2 * H, 4 * H), lambda i: (0, 0)),      # w1f
                pl.BlockSpec((2 * H, 4 * H), lambda i: (0, 0)),      # w1b
                pl.BlockSpec((H, 4 * H), lambda i: (0, 0)),          # whh1f
                pl.BlockSpec((1, 4 * H), lambda i: (0, 0)),          # b1f
                pl.BlockSpec((1, 4 * H), lambda i: (0, 0)),          # b1b
            ],
            out_specs=pl.BlockSpec((Bp, 2 * H), lambda i: (0, 0)),
            scratch_shapes=[
                pltpu.VMEM((T * Bp, 2 * H), jnp.float32),            # layer-0 output
            ],
        ),
        compiler_params=pltpu.CompilerParams(
            dimension_semantics=("arbitrary",)),
    )(gx0, whh0, w1f, w1b, whh1f, b1f, b1b)

    return out[:B]                                            # (B, 2H) == out[:, -1, :]


# ----------------------------- reference (pure JAX) -------------------------
def _lstm_ref_dir(x_tbd, w_ih, w_hh, b_ih, b_hh):
    H = w_hh.shape[1]
    B = x_tbd.shape[1]

    def step(carry, x_t):
        h, c = carry
        gates = x_t @ w_ih.T + h @ w_hh.T + b_ih + b_hh
        i = jax.nn.sigmoid(gates[:, :H])
        f = jax.nn.sigmoid(gates[:, H:2 * H])
        g = jnp.tanh(gates[:, 2 * H:3 * H])
        o = jax.nn.sigmoid(gates[:, 3 * H:])
        c = f * c + i * g
        h = o * jnp.tanh(c)
        return (h, c), h

    init = (jnp.zeros((B, H), jnp.float32), jnp.zeros((B, H), jnp.float32))
    _, hs = jax.lax.scan(step, init, x_tbd)
    return hs


def text_lstm_ref(params, token_ids):
    emb = jnp.take(params["embedding"], token_ids, axis=0)
    x = jnp.transpose(emb, (1, 0, 2)).astype(jnp.float32)
    for p in params["lstm"]:
        fwd = _lstm_ref_dir(x, p["w_ih_f"], p["w_hh_f"], p["b_ih_f"], p["b_hh_f"])
        bwd = _lstm_ref_dir(x[::-1], p["w_ih_b"], p["w_hh_b"], p["b_ih_b"], p["b_hh_b"])[::-1]
        x = jnp.concatenate([fwd, bwd], axis=-1)
    return x[-1]


# ----------------------------- parameter init -------------------------------
def init_params(key, vocab_size):
    """Deterministic synthetic parameters matching nn.Embedding + nn.LSTM shapes."""
    H, E = HIDDEN_DIM, WORD_EMBEDDING_DIM
    bound = 1.0 / jnp.sqrt(jnp.float32(H))
    keys = iter(jax.random.split(key, 1 + 8 * HIDDEN_LAYERS))

    params = {"embedding": jax.random.normal(next(keys), (vocab_size, E), jnp.float32) * 0.1,
              "lstm": []}
    for layer in range(HIDDEN_LAYERS):
        in_dim = E if layer == 0 else 2 * H

        def u(k, shape):
            return jax.random.uniform(k, shape, jnp.float32, -bound, bound)

        params["lstm"].append({
            "w_ih_f": u(next(keys), (4 * H, in_dim)),
            "w_hh_f": u(next(keys), (4 * H, H)),
            "b_ih_f": u(next(keys), (4 * H,)),
            "b_hh_f": u(next(keys), (4 * H,)),
            "w_ih_b": u(next(keys), (4 * H, in_dim)),
            "w_hh_b": u(next(keys), (4 * H, H)),
            "b_ih_b": u(next(keys), (4 * H,)),
            "b_hh_b": u(next(keys), (4 * H,)),
        })
    return params


# ----------------------------------- main ------------------------------------
if __name__ == "__main__":
    B, T, VOCAB = 2, 8, 50
    key = jax.random.PRNGKey(0)
    k_params, k_ids = jax.random.split(key)

    params = init_params(k_params, VOCAB)
    token_ids = jax.random.randint(k_ids, (B, T), 0, VOCAB, dtype=jnp.int32)

    out = text_lstm_forward(params, token_ids)
    out = jax.block_until_ready(out)

    assert out.shape == (B, HIDDEN_DIM * HIDDEN_LAYERS), out.shape   # (2, 128)

    ref = jax.block_until_ready(text_lstm_ref(params, token_ids))
    assert jnp.allclose(out, ref, rtol=1e-2, atol=1e-2), "mismatch vs pure-JAX reference"

    print("KERNEL_OK")
</pallas_src>

<mosaic_0001>
module attributes {stable_mosaic.version = 11 : i64} {
  func.func @_textlstm_kernel(%arg0: i32, %arg1: memref<8x8x512xf32, #tpu.memory_space<vmem>>, %arg2: memref<128x512xf32, #tpu.memory_space<vmem>>, %arg3: memref<128x256xf32, #tpu.memory_space<vmem>>, %arg4: memref<128x256xf32, #tpu.memory_space<vmem>>, %arg5: memref<64x256xf32, #tpu.memory_space<vmem>>, %arg6: memref<1x256xf32, #tpu.memory_space<vmem>>, %arg7: memref<1x256xf32, #tpu.memory_space<vmem>>, %arg8: memref<8x128xf32, #tpu.memory_space<vmem>>, %arg9: memref<64x128xf32, #tpu.memory_space<vmem>>) attributes {dimension_semantics = [#tpu.dimension_semantics<arbitrary>], iteration_bounds = array<i64: 1>, scalar_prefetch = 0 : i64, scratch_operands = 1 : i64, tpu.core_type = #tpu.core_type<tc>, window_params = [{pipeline_mode = #tpu.pipeline_mode<synchronous>, transform_indices = @transform_0, window_bounds = array<i64: 8, 8, 512>}, {pipeline_mode = #tpu.pipeline_mode<synchronous>, transform_indices = @transform_1, window_bounds = array<i64: 128, 512>}, {pipeline_mode = #tpu.pipeline_mode<synchronous>, transform_indices = @transform_2, window_bounds = array<i64: 128, 256>}, {pipeline_mode = #tpu.pipeline_mode<synchronous>, transform_indices = @transform_3, window_bounds = array<i64: 128, 256>}, {pipeline_mode = #tpu.pipeline_mode<synchronous>, transform_indices = @transform_4, window_bounds = array<i64: 64, 256>}, {pipeline_mode = #tpu.pipeline_mode<synchronous>, transform_indices = @transform_5, window_bounds = array<i64: 1, 256>}, {pipeline_mode = #tpu.pipeline_mode<synchronous>, transform_indices = @transform_6, window_bounds = array<i64: 1, 256>}, {pipeline_mode = #tpu.pipeline_mode<synchronous>, transform_indices = @transform_7, window_bounds = array<i64: 8, 128>}]} {
    %cst = arith.constant 0.000000e+00 : f32
    %0 = vector.broadcast %cst : f32 to vector<8x128xf32>
    %cst_0 = arith.constant 0.000000e+00 : f32
    %1 = vector.broadcast %cst_0 : f32 to vector<8x128xf32>
    %c0 = arith.constant 0 : index
    %c0_1 = arith.constant 0 : index
    %c0_2 = arith.constant 0 : index
    %2 = vector.load %arg1[%c0, %c0_1, %c0_2] : memref<8x8x512xf32, #tpu.memory_space<vmem>>, vector<1x8x512xf32>
    %3 = vector.shape_cast %2 : vector<1x8x512xf32> to vector<8x512xf32>
    %c0_3 = arith.constant 0 : index
    %c0_4 = arith.constant 0 : index
    %4 = vector.load %arg2[%c0_3, %c0_4] : memref<128x512xf32, #tpu.memory_space<vmem>>, vector<128x512xf32>
    %cst_5 = arith.constant dense<0.000000e+00> : vector<8x512xf32>
    %5 = tpu.matmul %0, %4, %cst_5 {dimension_numbers = #tpu.dot_dimension_numbers<[1], [0], [0], [1], [0, 0, 1, 1], [], []>} : vector<8x128xf32>, vector<128x512xf32>, vector<8x512xf32> -> vector<8x512xf32>
    %6 = arith.addf %3, %5 : vector<8x512xf32>
    %7 = vector.extract_strided_slice %6 {offsets = [0, 0], sizes = [8, 384], strides = [1, 1]} : vector<8x512xf32> to vector<8x384xf32>
    %8 = arith.negf %7 : vector<8x384xf32>
    %9 = math.exp %8 : vector<8x384xf32>
    %cst_6 = arith.constant 1.000000e+00 : f32
    %10 = vector.broadcast %cst_6 : f32 to vector<8x384xf32>
    %11 = arith.addf %10, %9 : vector<8x384xf32>
    %12 = arith.divf %10, %11 : vector<8x384xf32>
    %13 = vector.extract_strided_slice %6 {offsets = [0, 384], sizes = [8, 128], strides = [1, 1]} : vector<8x512xf32> to vector<8x128xf32>
    %14 = math.tanh %13 : vector<8x128xf32>
    %15 = vector.extract_strided_slice %12 {offsets = [0, 0], sizes = [8, 128], strides = [1, 1]} : vector<8x384xf32> to vector<8x128xf32>
    %16 = vector.extract_strided_slice %12 {offsets = [0, 128], sizes = [8, 128], strides = [1, 1]} : vector<8x384xf32> to vector<8x128xf32>
    %17 = vector.extract_strided_slice %12 {offsets = [0, 256], sizes = [8, 128], strides = [1, 1]} : vector<8x384xf32> to vector<8x128xf32>
    %18 = arith.mulf %16, %1 : vector<8x128xf32>
    %19 = arith.mulf %15, %14 : vector<8x128xf32>
    %20 = arith.addf %18, %19 : vector<8x128xf32>
    %21 = math.tanh %20 : vector<8x128xf32>
    %22 = arith.mulf %17, %21 : vector<8x128xf32>
    %23 = vector.extract_strided_slice %22 {offsets = [0, 0], sizes = [8, 64], strides = [1, 1]} : vector<8x128xf32> to vector<8x64xf32>
    %c0_7 = arith.constant 0 : index
    %c0_8 = arith.constant 0 : index
    %24 = vector.load %arg9[%c0_7, %c0_8] : memref<64x128xf32, #tpu.memory_space<vmem>>, vector<8x64xf32>
    tpu.vector_store %arg9[%c0_7, %c0_8], %23 {strides = array<i32>} : memref<64x128xf32, #tpu.memory_space<vmem>>, vector<8x64xf32>,
    %25 = vector.extract_strided_slice %22 {offsets = [0, 64], sizes = [8, 64], strides = [1, 1]} : vector<8x128xf32> to vector<8x64xf32>
    %c56 = arith.constant 56 : index
    %c64 = arith.constant 64 : index
    %26 = vector.load %arg9[%c56, %c64] : memref<64x128xf32, #tpu.memory_space<vmem>>, vector<8x64xf32>
    tpu.vector_store %arg9[%c56, %c64], %25 {strides = array<i32>} : memref<64x128xf32, #tpu.memory_space<vmem>>, vector<8x64xf32>,
    %c1 = arith.constant 1 : index
    %c0_9 = arith.constant 0 : index
    %c0_10 = arith.constant 0 : index
    %27 = vector.load %arg1[%c1, %c0_9, %c0_10] : memref<8x8x512xf32, #tpu.memory_space<vmem>>, vector<1x8x512xf32>
    %28 = vector.shape_cast %27 : vector<1x8x512xf32> to vector<8x512xf32>
    %c0_11 = arith.constant 0 : index
    %c0_12 = arith.constant 0 : index
    %29 = vector.load %arg2[%c0_11, %c0_12] : memref<128x512xf32, #tpu.memory_space<vmem>>, vector<128x512xf32>
    %cst_13 = arith.constant dense<0.000000e+00> : vector<8x512xf32>
    %30 = tpu.matmul %22, %29, %cst_13 {dimension_numbers = #tpu.dot_dimension_numbers<[1], [0], [0], [1], [0, 0, 1, 1], [], []>} : vector<8x128xf32>, vector<128x512xf32>, vector<8x512xf32> -> vector<8x512xf32>
    %31 = arith.addf %28, %30 : vector<8x512xf32>
    %32 = vector.extract_strided_slice %31 {offsets = [0, 0], sizes = [8, 384], strides = [1, 1]} : vector<8x512xf32> to vector<8x384xf32>
    %33 = arith.negf %32 : vector<8x384xf32>
    %34 = math.exp %33 : vector<8x384xf32>
    %cst_14 = arith.constant 1.000000e+00 : f32
    %35 = vector.broadcast %cst_14 : f32 to vector<8x384xf32>
    %36 = arith.addf %35, %34 : vector<8x384xf32>
    %37 = arith.divf %35, %36 : vector<8x384xf32>
    %38 = vector.extract_strided_slice %31 {offsets = [0, 384], sizes = [8, 128], strides = [1, 1]} : vector<8x512xf32> to vector<8x128xf32>
    %39 = math.tanh %38 : vector<8x128xf32>
    %40 = vector.extract_strided_slice %37 {offsets = [0, 0], sizes = [8, 128], strides = [1, 1]} : vector<8x384xf32> to vector<8x128xf32>
    %41 = vector.extract_strided_slice %37 {offsets = [0, 128], sizes = [8, 128], strides = [1, 1]} : vector<8x384xf32> to vector<8x128xf32>
    %42 = vector.extract_strided_slice %37 {offsets = [0, 256], sizes = [8, 128], strides = [1, 1]} : vector<8x384xf32> to vector<8x128xf32>
    %43 = arith.mulf %41, %20 : vector<8x128xf32>
    %44 = arith.mulf %40, %39 : vector<8x128xf32>
    %45 = arith.addf %43, %44 : vector<8x128xf32>
    %46 = math.tanh %45 : vector<8x128xf32>
    %47 = arith.mulf %42, %46 : vector<8x128xf32>
    %48 = vector.extract_strided_slice %47 {offsets = [0, 0], sizes = [8, 64], strides = [1, 1]} : vector<8x128xf32> to vector<8x64xf32>
    %c8 = arith.constant 8 : index
    %c0_15 = arith.constant 0 : index
    %49 = vector.load %arg9[%c8, %c0_15] : memref<64x128xf32, #tpu.memory_space<vmem>>, vector<8x64xf32>
    tpu.vector_store %arg9[%c8, %c0_15], %48 {strides = array<i32>} : memref<64x128xf32, #tpu.memory_space<vmem>>, vector<8x64xf32>,
    %50 = vector.extract_strided_slice %47 {offsets = [0, 64], sizes = [8, 64], strides = [1, 1]} : vector<8x128xf32> to vector<8x64xf32>
    %c48 = arith.constant 48 : index
    %c64_16 = arith.constant 64 : index
    %51 = vector.load %arg9[%c48, %c64_16] : memref<64x128xf32, #tpu.memory_space<vmem>>, vector<8x64xf32>
    tpu.vector_store %arg9[%c48, %c64_16], %50 {strides = array<i32>} : memref<64x128xf32, #tpu.memory_space<vmem>>, vector<8x64xf32>,
    %c2 = arith.constant 2 : index
    %c0_17 = arith.constant 0 : index
    %c0_18 = arith.constant 0 : index
    %52 = vector.load %arg1[%c2, %c0_17, %c0_18] : memref<8x8x512xf32, #tpu.memory_space<vmem>>, vector<1x8x512xf32>
    %53 = vector.shape_cast %52 : vector<1x8x512xf32> to vector<8x512xf32>
    %c0_19 = arith.constant 0 : index
    %c0_20 = arith.constant 0 : index
    %54 = vector.load %arg2[%c0_19, %c0_20] : memref<128x512xf32, #tpu.memory_space<vmem>>, vector<128x512xf32>
    %cst_21 = arith.constant dense<0.000000e+00> : vector<8x512xf32>
    %55 = tpu.matmul %47, %54, %cst_21 {dimension_numbers = #tpu.dot_dimension_numbers<[1], [0], [0], [1], [0, 0, 1, 1], [], []>} : vector<8x128xf32>, vector<128x512xf32>, vector<8x512xf32> -> vector<8x512xf32>
    %56 = arith.addf %53, %55 : vector<8x512xf32>
    %57 = vector.extract_strided_slice %56 {offsets = [0, 0], sizes = [8, 384], strides = [1, 1]} : vector<8x512xf32> to vector<8x384xf32>
    %58 = arith.negf %57 : vector<8x384xf32>
    %59 = math.exp %58 : vector<8x384xf32>
    %cst_22 = arith.constant 1.000000e+00 : f32
    %60 = vector.broadcast %cst_22 : f32 to vector<8x384xf32>
    %61 = arith.addf %60, %59 : vector<8x384xf32>
    %62 = arith.divf %60, %61 : vector<8x384xf32>
    %63 = vector.extract_strided_slice %56 {offsets = [0, 384], sizes = [8, 128], strides = [1, 1]} : vector<8x512xf32> to vector<8x128xf32>
    %64 = math.tanh %63 : vector<8x128xf32>
    %65 = vector.extract_strided_slice %62 {offsets = [0, 0], sizes = [8, 128], strides = [1, 1]} : vector<8x384xf32> to vector<8x128xf32>
    %66 = vector.extract_strided_slice %62 {offsets = [0, 128], sizes = [8, 128], strides = [1, 1]} : vector<8x384xf32> to vector<8x128xf32>
    %67 = vector.extract_strided_slice %62 {offsets = [0, 256], sizes = [8, 128], strides = [1, 1]} : vector<8x384xf32> to vector<8x128xf32>
    %68 = arith.mulf %66, %45 : vector<8x128xf32>
    %69 = arith.mulf %65, %64 : vector<8x128xf32>
    %70 = arith.addf %68, %69 : vector<8x128xf32>
    %71 = math.tanh %70 : vector<8x128xf32>
    %72 = arith.mulf %67, %71 : vector<8x128xf32>
    %73 = vector.extract_strided_slice %72 {offsets = [0, 0], sizes = [8, 64], strides = [1, 1]} : vector<8x128xf32> to vector<8x64xf32>
    %c16 = arith.constant 16 : index
    %c0_23 = arith.constant 0 : index
    %74 = vector.load %arg9[%c16, %c0_23] : memref<64x128xf32, #tpu.memory_space<vmem>>, vector<8x64xf32>
    tpu.vector_store %arg9[%c16, %c0_23], %73 {strides = array<i32>} : memref<64x128xf32, #tpu.memory_space<vmem>>, vector<8x64xf32>,
    %75 = vector.extract_strided_slice %72 {offsets = [0, 64], sizes = [8, 64], strides = [1, 1]} : vector<8x128xf32> to vector<8x64xf32>
    %c40 = arith.constant 40 : index
    %c64_24 = arith.constant 64 : index
    %76 = vector.load %arg9[%c40, %c64_24] : memref<64x128xf32, #tpu.memory_space<vmem>>, vector<8x64xf32>
    tpu.vector_store %arg9[%c40, %c64_24], %75 {strides = array<i32>} : memref<64x128xf32, #tpu.memory_space<vmem>>, vector<8x64xf32>,
    %c3 = arith.constant 3 : index
    %c0_25 = arith.constant 0 : index
    %c0_26 = arith.constant 0 : index
    %77 = vector.load %arg1[%c3, %c0_25, %c0_26] : memref<8x8x512xf32, #tpu.memory_space<vmem>>, vector<1x8x512xf32>
    %78 = vector.shape_cast %77 : vector<1x8x512xf32> to vector<8x512xf32>
    %c0_27 = arith.constant 0 : index
    %c0_28 = arith.constant 0 : index
    %79 = vector.load %arg2[%c0_27, %c0_28] : memref<128x512xf32, #tpu.memory_space<vmem>>, vector<128x512xf32>
    %cst_29 = arith.constant dense<0.000000e+00> : vector<8x512xf32>
    %80 = tpu.matmul %72, %79, %cst_29 {dimension_numbers = #tpu.dot_dimension_numbers<[1], [0], [0], [1], [0, 0, 1, 1], [], []>} : vector<8x128xf32>, vector<128x512xf32>, vector<8x512xf32> -> vector<8x512xf32>
    %81 = arith.addf %78, %80 : vector<8x512xf32>
    %82 = vector.extract_strided_slice %81 {offsets = [0, 0], sizes = [8, 384], strides = [1, 1]} : vector<8x512xf32> to vector<8x384xf32>
    %83 = arith.negf %82 : vector<8x384xf32>
    %84 = math.exp %83 : vector<8x384xf32>
    %cst_30 = arith.constant 1.000000e+00 : f32
    %85 = vector.broadcast %cst_30 : f32 to vector<8x384xf32>
    %86 = arith.addf %85, %84 : vector<8x384xf32>
    %87 = arith.divf %85, %86 : vector<8x384xf32>
    %88 = vector.extract_strided_slice %81 {offsets = [0, 384], sizes = [8, 128], strides = [1, 1]} : vector<8x512xf32> to vector<8x128xf32>
    %89 = math.tanh %88 : vector<8x128xf32>
    %90 = vector.extract_strided_slice %87 {offsets = [0, 0], sizes = [8, 128], strides = [1, 1]} : vector<8x384xf32> to vector<8x128xf32>
    %91 = vector.extract_strided_slice %87 {offsets = [0, 128], sizes = [8, 128], strides = [1, 1]} : vector<8x384xf32> to vector<8x128xf32>
    %92 = vector.extract_strided_slice %87 {offsets = [0, 256], sizes = [8, 128], strides = [1, 1]} : vector<8x384xf32> to vector<8x128xf32>
    %93 = arith.mulf %91, %70 : vector<8x128xf32>
    %94 = arith.mulf %90, %89 : vector<8x128xf32>
    %95 = arith.addf %93, %94 : vector<8x128xf32>
    %96 = math.tanh %95 : vector<8x128xf32>
    %97 = arith.mulf %92, %96 : vector<8x128xf32>
    %98 = vector.extract_strided_slice %97 {offsets = [0, 0], sizes = [8, 64], strides = [1, 1]} : vector<8x128xf32> to vector<8x64xf32>
    %c24 = arith.constant 24 : index
    %c0_31 = arith.constant 0 : index
    %99 = vector.load %arg9[%c24, %c0_31] : memref<64x128xf32, #tpu.memory_space<vmem>>, vector<8x64xf32>
    tpu.vector_store %arg9[%c24, %c0_31], %98 {strides = array<i32>} : memref<64x128xf32, #tpu.memory_space<vmem>>, vector<8x64xf32>,
    %100 = vector.extract_strided_slice %97 {offsets = [0, 64], sizes = [8, 64], strides = [1, 1]} : vector<8x128xf32> to vector<8x64xf32>
    %c32 = arith.constant 32 : index
    %c64_32 = arith.constant 64 : index
    %101 = vector.load %arg9[%c32, %c64_32] : memref<64x128xf32, #tpu.memory_space<vmem>>, vector<8x64xf32>
    tpu.vector_store %arg9[%c32, %c64_32], %100 {strides = array<i32>} : memref<64x128xf32, #tpu.memory_space<vmem>>, vector<8x64xf32>,
    %c4 = arith.constant 4 : index
    %c0_33 = arith.constant 0 : index
    %c0_34 = arith.constant 0 : index
    %102 = vector.load %arg1[%c4, %c0_33, %c0_34] : memref<8x8x512xf32, #tpu.memory_space<vmem>>, vector<1x8x512xf32>
    %103 = vector.shape_cast %102 : vector<1x8x512xf32> to vector<8x512xf32>
    %c0_35 = arith.constant 0 : index
    %c0_36 = arith.constant 0 : index
    %104 = vector.load %arg2[%c0_35, %c0_36] : memref<128x512xf32, #tpu.memory_space<vmem>>, vector<128x512xf32>
    %cst_37 = arith.constant dense<0.000000e+00> : vector<8x512xf32>
    %105 = tpu.matmul %97, %104, %cst_37 {dimension_numbers = #tpu.dot_dimension_numbers<[1], [0], [0], [1], [0, 0, 1, 1], [], []>} : vector<8x128xf32>, vector<128x512xf32>, vector<8x512xf32> -> vector<8x512xf32>
    %106 = arith.addf %103, %105 : vector<8x512xf32>
    %107 = vector.extract_strided_slice %106 {offsets = [0, 0], sizes = [8, 384], strides = [1, 1]} : vector<8x512xf32> to vector<8x384xf32>
    %108 = arith.negf %107 : vector<8x384xf32>
    %109 = math.exp %108 : vector<8x384xf32>
    %cst_38 = arith.constant 1.000000e+00 : f32
    %110 = vector.broadcast %cst_38 : f32 to vector<8x384xf32>
    %111 = arith.addf %110, %109 : vector<8x384xf32>
    %112 = arith.divf %110, %111 : vector<8x384xf32>
    %113 = vector.extract_strided_slice %106 {offsets = [0, 384], sizes = [8, 128], strides = [1, 1]} : vector<8x512xf32> to vector<8x128xf32>
    %114 = math.tanh %113 : vector<8x128xf32>
    %115 = vector.extract_strided_slice %112 {offsets = [0, 0], sizes = [8, 128], strides = [1, 1]} : vector<8x384xf32> to vector<8x128xf32>
    %116 = vector.extract_strided_slice %112 {offsets = [0, 128], sizes = [8, 128], strides = [1, 1]} : vector<8x384xf32> to vector<8x128xf32>
    %117 = vector.extract_strided_slice %112 {offsets = [0, 256], sizes = [8, 128], strides = [1, 1]} : vector<8x384xf32> to vector<8x128xf32>
    %118 = arith.mulf %116, %95 : vector<8x128xf32>
    %119 = arith.mulf %115, %114 : vector<8x128xf32>
    %120 = arith.addf %118, %119 : vector<8x128xf32>
    %121 = math.tanh %120 : vector<8x128xf32>
    %122 = arith.mulf %117, %121 : vector<8x128xf32>
    %123 = vector.extract_strided_slice %122 {offsets = [0, 0], sizes = [8, 64], strides = [1, 1]} : vector<8x128xf32> to vector<8x64xf32>
    %c32_39 = arith.constant 32 : index
    %c0_40 = arith.constant 0 : index
    %124 = vector.load %arg9[%c32_39, %c0_40] : memref<64x128xf32, #tpu.memory_space<vmem>>, vector<8x64xf32>
    tpu.vector_store %arg9[%c32_39, %c0_40], %123 {strides = array<i32>} : memref<64x128xf32, #tpu.memory_space<vmem>>, vector<8x64xf32>,
    %125 = vector.extract_strided_slice %122 {offsets = [0, 64], sizes = [8, 64], strides = [1, 1]} : vector<8x128xf32> to vector<8x64xf32>
    %c24_41 = arith.constant 24 : index
    %c64_42 = arith.constant 64 : index
    %126 = vector.load %arg9[%c24_41, %c64_42] : memref<64x128xf32, #tpu.memory_space<vmem>>, vector<8x64xf32>
    tpu.vector_store %arg9[%c24_41, %c64_42], %125 {strides = array<i32>} : memref<64x128xf32, #tpu.memory_space<vmem>>, vector<8x64xf32>,
    %c5 = arith.constant 5 : index
    %c0_43 = arith.constant 0 : index
    %c0_44 = arith.constant 0 : index
    %127 = vector.load %arg1[%c5, %c0_43, %c0_44] : memref<8x8x512xf32, #tpu.memory_space<vmem>>, vector<1x8x512xf32>
    %128 = vector.shape_cast %127 : vector<1x8x512xf32> to vector<8x512xf32>
    %c0_45 = arith.constant 0 : index
    %c0_46 = arith.constant 0 : index
    %129 = vector.load %arg2[%c0_45, %c0_46] : memref<128x512xf32, #tpu.memory_space<vmem>>, vector<128x512xf32>
    %cst_47 = arith.constant dense<0.000000e+00> : vector<8x512xf32>
    %130 = tpu.matmul %122, %129, %cst_47 {dimension_numbers = #tpu.dot_dimension_numbers<[1], [0], [0], [1], [0, 0, 1, 1], [], []>} : vector<8x128xf32>, vector<128x512xf32>, vector<8x512xf32> -> vector<8x512xf32>
    %131 = arith.addf %128, %130 : vector<8x512xf32>
    %132 = vector.extract_strided_slice %131 {offsets = [0, 0], sizes = [8, 384], strides = [1, 1]} : vector<8x512xf32> to vector<8x384xf32>
    %133 = arith.negf %132 : vector<8x384xf32>
    %134 = math.exp %133 : vector<8x384xf32>
    %cst_48 = arith.constant 1.000000e+00 : f32
    %135 = vector.broadcast %cst_48 : f32 to vector<8x384xf32>
    %136 = arith.addf %135, %134 : vector<8x384xf32>
    %137 = arith.divf %135, %136 : vector<8x384xf32>
    %138 = vector.extract_strided_slice %131 {offsets = [0, 384], sizes = [8, 128], strides = [1, 1]} : vector<8x512xf32> to vector<8x128xf32>
    %139 = math.tanh %138 : vector<8x128xf32>
    %140 = vector.extract_strided_slice %137 {offsets = [0, 0], sizes = [8, 128], strides = [1, 1]} : vector<8x384xf32> to vector<8x128xf32>
    %141 = vector.extract_strided_slice %137 {offsets = [0, 128], sizes = [8, 128], strides = [1, 1]} : vector<8x384xf32> to vector<8x128xf32>
    %142 = vector.extract_strided_slice %137 {offsets = [0, 256], sizes = [8, 128], strides = [1, 1]} : vector<8x384xf32> to vector<8x128xf32>
    %143 = arith.mulf %141, %120 : vector<8x128xf32>
    %144 = arith.mulf %140, %139 : vector<8x128xf32>
    %145 = arith.addf %143, %144 : vector<8x128xf32>
    %146 = math.tanh %145 : vector<8x128xf32>
    %147 = arith.mulf %142, %146 : vector<8x128xf32>
    %148 = vector.extract_strided_slice %147 {offsets = [0, 0], sizes = [8, 64], strides = [1, 1]} : vector<8x128xf32> to vector<8x64xf32>
    %c40_49 = arith.constant 40 : index
    %c0_50 = arith.constant 0 : index
    %149 = vector.load %arg9[%c40_49, %c0_50] : memref<64x128xf32, #tpu.memory_space<vmem>>, vector<8x64xf32>
    tpu.vector_store %arg9[%c40_49, %c0_50], %148 {strides = array<i32>} : memref<64x128xf32, #tpu.memory_space<vmem>>, vector<8x64xf32>,
    %150 = vector.extract_strided_slice %147 {offsets = [0, 64], sizes = [8, 64], strides = [1, 1]} : vector<8x128xf32> to vector<8x64xf32>
    %c16_51 = arith.constant 16 : index
    %c64_52 = arith.constant 64 : index
    %151 = vector.load %arg9[%c16_51, %c64_52] : memref<64x128xf32, #tpu.memory_space<vmem>>, vector<8x64xf32>
    tpu.vector_store %arg9[%c16_51, %c64_52], %150 {strides = array<i32>} : memref<64x128xf32, #tpu.memory_space<vmem>>, vector<8x64xf32>,
    %c6 = arith.constant 6 : index
    %c0_53 = arith.constant 0 : index
    %c0_54 = arith.constant 0 : index
    %152 = vector.load %arg1[%c6, %c0_53, %c0_54] : memref<8x8x512xf32, #tpu.memory_space<vmem>>, vector<1x8x512xf32>
    %153 = vector.shape_cast %152 : vector<1x8x512xf32> to vector<8x512xf32>
    %c0_55 = arith.constant 0 : index
    %c0_56 = arith.constant 0 : index
    %154 = vector.load %arg2[%c0_55, %c0_56] : memref<128x512xf32, #tpu.memory_space<vmem>>, vector<128x512xf32>
    %cst_57 = arith.constant dense<0.000000e+00> : vector<8x512xf32>
    %155 = tpu.matmul %147, %154, %cst_57 {dimension_numbers = #tpu.dot_dimension_numbers<[1], [0], [0], [1], [0, 0, 1, 1], [], []>} : vector<8x128xf32>, vector<128x512xf32>, vector<8x512xf32> -> vector<8x512xf32>
    %156 = arith.addf %153, %155 : vector<8x512xf32>
    %157 = vector.extract_strided_slice %156 {offsets = [0, 0], sizes = [8, 384], strides = [1, 1]} : vector<8x512xf32> to vector<8x384xf32>
    %158 = arith.negf %157 : vector<8x384xf32>
    %159 = math.exp %158 : vector<8x384xf32>
    %cst_58 = arith.constant 1.000000e+00 : f32
    %160 = vector.broadcast %cst_58 : f32 to vector<8x384xf32>
    %161 = arith.addf %160, %159 : vector<8x384xf32>
    %162 = arith.divf %160, %161 : vector<8x384xf32>
    %163 = vector.extract_strided_slice %156 {offsets = [0, 384], sizes = [8, 128], strides = [1, 1]} : vector<8x512xf32> to vector<8x128xf32>
    %164 = math.tanh %163 : vector<8x128xf32>
    %165 = vector.extract_strided_slice %162 {offsets = [0, 0], sizes = [8, 128], strides = [1, 1]} : vector<8x384xf32> to vector<8x128xf32>
    %166 = vector.extract_strided_slice %162 {offsets = [0, 128], sizes = [8, 128], strides = [1, 1]} : vector<8x384xf32> to vector<8x128xf32>
    %167 = vector.extract_strided_slice %162 {offsets = [0, 256], sizes = [8, 128], strides = [1, 1]} : vector<8x384xf32> to vector<8x128xf32>
    %168 = arith.mulf %166, %145 : vector<8x128xf32>
    %169 = arith.mulf %165, %164 : vector<8x128xf32>
    %170 = arith.addf %168, %169 : vector<8x128xf32>
    %171 = math.tanh %170 : vector<8x128xf32>
    %172 = arith.mulf %167, %171 : vector<8x128xf32>
    %173 = vector.extract_strided_slice %172 {offsets = [0, 0], sizes = [8, 64], strides = [1, 1]} : vector<8x128xf32> to vector<8x64xf32>
    %c48_59 = arith.constant 48 : index
    %c0_60 = arith.constant 0 : index
    %174 = vector.load %arg9[%c48_59, %c0_60] : memref<64x128xf32, #tpu.memory_space<vmem>>, vector<8x64xf32>
    tpu.vector_store %arg9[%c48_59, %c0_60], %173 {strides = array<i32>} : memref<64x128xf32, #tpu.memory_space<vmem>>, vector<8x64xf32>,
    %175 = vector.extract_strided_slice %172 {offsets = [0, 64], sizes = [8, 64], strides = [1, 1]} : vector<8x128xf32> to vector<8x64xf32>
    %c8_61 = arith.constant 8 : index
    %c64_62 = arith.constant 64 : index
    %176 = vector.load %arg9[%c8_61, %c64_62] : memref<64x128xf32, #tpu.memory_space<vmem>>, vector<8x64xf32>
    tpu.vector_store %arg9[%c8_61, %c64_62], %175 {strides = array<i32>} : memref<64x128xf32, #tpu.memory_space<vmem>>, vector<8x64xf32>,
    %c7 = arith.constant 7 : index
    %c0_63 = arith.constant 0 : index
    %c0_64 = arith.constant 0 : index
    %177 = vector.load %arg1[%c7, %c0_63, %c0_64] : memref<8x8x512xf32, #tpu.memory_space<vmem>>, vector<1x8x512xf32>
    %178 = vector.shape_cast %177 : vector<1x8x512xf32> to vector<8x512xf32>
    %c0_65 = arith.constant 0 : index
    %c0_66 = arith.constant 0 : index
    %179 = vector.load %arg2[%c0_65, %c0_66] : memref<128x512xf32, #tpu.memory_space<vmem>>, vector<128x512xf32>
    %cst_67 = arith.constant dense<0.000000e+00> : vector<8x512xf32>
    %180 = tpu.matmul %172, %179, %cst_67 {dimension_numbers = #tpu.dot_dimension_numbers<[1], [0], [0], [1], [0, 0, 1, 1], [], []>} : vector<8x128xf32>, vector<128x512xf32>, vector<8x512xf32> -> vector<8x512xf32>
    %181 = arith.addf %178, %180 : vector<8x512xf32>
    %182 = vector.extract_strided_slice %181 {offsets = [0, 0], sizes = [8, 384], strides = [1, 1]} : vector<8x512xf32> to vector<8x384xf32>
    %183 = arith.negf %182 : vector<8x384xf32>
    %184 = math.exp %183 : vector<8x384xf32>
    %cst_68 = arith.constant 1.000000e+00 : f32
    %185 = vector.broadcast %cst_68 : f32 to vector<8x384xf32>
    %186 = arith.addf %185, %184 : vector<8x384xf32>
    %187 = arith.divf %185, %186 : vector<8x384xf32>
    %188 = vector.extract_strided_slice %181 {offsets = [0, 384], sizes = [8, 128], strides = [1, 1]} : vector<8x512xf32> to vector<8x128xf32>
    %189 = math.tanh %188 : vector<8x128xf32>
    %190 = vector.extract_strided_slice %187 {offsets = [0, 0], sizes = [8, 128], strides = [1, 1]} : vector<8x384xf32> to vector<8x128xf32>
    %191 = vector.extract_strided_slice %187 {offsets = [0, 128], sizes = [8, 128], strides = [1, 1]} : vector<8x384xf32> to vector<8x128xf32>
    %192 = vector.extract_strided_slice %187 {offsets = [0, 256], sizes = [8, 128], strides = [1, 1]} : vector<8x384xf32> to vector<8x128xf32>
    %193 = arith.mulf %191, %170 : vector<8x128xf32>
    %194 = arith.mulf %190, %189 : vector<8x128xf32>
    %195 = arith.addf %193, %194 : vector<8x128xf32>
    %196 = math.tanh %195 : vector<8x128xf32>
    %197 = arith.mulf %192, %196 : vector<8x128xf32>
    %198 = vector.extract_strided_slice %197 {offsets = [0, 0], sizes = [8, 64], strides = [1, 1]} : vector<8x128xf32> to vector<8x64xf32>
    %c56_69 = arith.constant 56 : index
    %c0_70 = arith.constant 0 : index
    %199 = vector.load %arg9[%c56_69, %c0_70] : memref<64x128xf32, #tpu.memory_space<vmem>>, vector<8x64xf32>
    tpu.vector_store %arg9[%c56_69, %c0_70], %198 {strides = array<i32>} : memref<64x128xf32, #tpu.memory_space<vmem>>, vector<8x64xf32>,
    %200 = vector.extract_strided_slice %197 {offsets = [0, 64], sizes = [8, 64], strides = [1, 1]} : vector<8x128xf32> to vector<8x64xf32>
    %c0_71 = arith.constant 0 : index
    %c64_72 = arith.constant 64 : index
    %201 = vector.load %arg9[%c0_71, %c64_72] : memref<64x128xf32, #tpu.memory_space<vmem>>, vector<8x64xf32>
    tpu.vector_store %arg9[%c0_71, %c64_72], %200 {strides = array<i32>} : memref<64x128xf32, #tpu.memory_space<vmem>>, vector<8x64xf32>,
    %c0_73 = arith.constant 0 : index
    %c0_74 = arith.constant 0 : index
    %202 = vector.load %arg9[%c0_73, %c0_74] : memref<64x128xf32, #tpu.memory_space<vmem>>, vector<64x128xf32>
    %c0_75 = arith.constant 0 : index
    %c0_76 = arith.constant 0 : index
    %203 = vector.load %arg3[%c0_75, %c0_76] : memref<128x256xf32, #tpu.memory_space<vmem>>, vector<128x256xf32>
    %cst_77 = arith.constant dense<0.000000e+00> : vector<64x256xf32>
    %204 = tpu.matmul %202, %203, %cst_77 {dimension_numbers = #tpu.dot_dimension_numbers<[1], [0], [0], [1], [0, 0, 1, 1], [], []>} : vector<64x128xf32>, vector<128x256xf32>, vector<64x256xf32> -> vector<64x256xf32>
    %c0_78 = arith.constant 0 : index
    %c0_79 = arith.constant 0 : index
    %205 = vector.load %arg6[%c0_78, %c0_79] : memref<1x256xf32, #tpu.memory_space<vmem>>, vector<1x256xf32>
    %206 = vector.broadcast %205 : vector<1x256xf32> to vector<64x256xf32>
    %207 = arith.addf %204, %206 : vector<64x256xf32>
    %cst_80 = arith.constant 0.000000e+00 : f32
    %208 = vector.broadcast %cst_80 : f32 to vector<8x64xf32>
    %cst_81 = arith.constant 0.000000e+00 : f32
    %209 = vector.broadcast %cst_81 : f32 to vector<8x64xf32>
    %210 = vector.extract_strided_slice %207 {offsets = [0, 0], sizes = [8, 256], strides = [1, 1]} : vector<64x256xf32> to vector<8x256xf32>
    %c0_82 = arith.constant 0 : index
    %c0_83 = arith.constant 0 : index
    %211 = vector.load %arg5[%c0_82, %c0_83] : memref<64x256xf32, #tpu.memory_space<vmem>>, vector<64x256xf32>
    %cst_84 = arith.constant dense<0.000000e+00> : vector<8x256xf32>
    %212 = tpu.matmul %208, %211, %cst_84 {dimension_numbers = #tpu.dot_dimension_numbers<[1], [0], [0], [1], [0, 0, 1, 1], [], []>} : vector<8x64xf32>, vector<64x256xf32>, vector<8x256xf32> -> vector<8x256xf32>
    %213 = arith.addf %210, %212 : vector<8x256xf32>
    %214 = vector.extract_strided_slice %213 {offsets = [0, 0], sizes = [8, 192], strides = [1, 1]} : vector<8x256xf32> to vector<8x192xf32>
    %215 = arith.negf %214 : vector<8x192xf32>
    %216 = math.exp %215 : vector<8x192xf32>
    %cst_85 = arith.constant 1.000000e+00 : f32
    %217 = vector.broadcast %cst_85 : f32 to vector<8x192xf32>
    %218 = arith.addf %217, %216 : vector<8x192xf32>
    %219 = arith.divf %217, %218 : vector<8x192xf32>
    %220 = vector.extract_strided_slice %213 {offsets = [0, 192], sizes = [8, 64], strides = [1, 1]} : vector<8x256xf32> to vector<8x64xf32>
    %221 = math.tanh %220 : vector<8x64xf32>
    %222 = vector.extract_strided_slice %219 {offsets = [0, 0], sizes = [8, 64], strides = [1, 1]} : vector<8x192xf32> to vector<8x64xf32>
    %223 = vector.extract_strided_slice %219 {offsets = [0, 64], sizes = [8, 64], strides = [1, 1]} : vector<8x192xf32> to vector<8x64xf32>
    %224 = vector.extract_strided_slice %219 {offsets = [0, 128], sizes = [8, 64], strides = [1, 1]} : vector<8x192xf32> to vector<8x64xf32>
    %225 = arith.mulf %223, %209 : vector<8x64xf32>
    %226 = arith.mulf %222, %221 : vector<8x64xf32>
    %227 = arith.addf %225, %226 : vector<8x64xf32>
    %228 = math.tanh %227 : vector<8x64xf32>
    %229 = arith.mulf %224, %228 : vector<8x64xf32>
    %230 = vector.extract_strided_slice %207 {offsets = [8, 0], sizes = [8, 256], strides = [1, 1]} : vector<64x256xf32> to vector<8x256xf32>
    %c0_86 = arith.constant 0 : index
    %c0_87 = arith.constant 0 : index
    %231 = vector.load %arg5[%c0_86, %c0_87] : memref<64x256xf32, #tpu.memory_space<vmem>>, vector<64x256xf32>
    %cst_88 = arith.constant dense<0.000000e+00> : vector<8x256xf32>
    %232 = tpu.matmul %229, %231, %cst_88 {dimension_numbers = #tpu.dot_dimension_numbers<[1], [0], [0], [1], [0, 0, 1, 1], [], []>} : vector<8x64xf32>, vector<64x256xf32>, vector<8x256xf32> -> vector<8x256xf32>
    %233 = arith.addf %230, %232 : vector<8x256xf32>
    %234 = vector.extract_strided_slice %233 {offsets = [0, 0], sizes = [8, 192], strides = [1, 1]} : vector<8x256xf32> to vector<8x192xf32>
    %235 = arith.negf %234 : vector<8x192xf32>
    %236 = math.exp %235 : vector<8x192xf32>
    %cst_89 = arith.constant 1.000000e+00 : f32
    %237 = vector.broadcast %cst_89 : f32 to vector<8x192xf32>
    %238 = arith.addf %237, %236 : vector<8x192xf32>
    %239 = arith.divf %237, %238 : vector<8x192xf32>
    %240 = vector.extract_strided_slice %233 {offsets = [0, 192], sizes = [8, 64], strides = [1, 1]} : vector<8x256xf32> to vector<8x64xf32>
    %241 = math.tanh %240 : vector<8x64xf32>
    %242 = vector.extract_strided_slice %239 {offsets = [0, 0], sizes = [8, 64], strides = [1, 1]} : vector<8x192xf32> to vector<8x64xf32>
    %243 = vector.extract_strided_slice %239 {offsets = [0, 64], sizes = [8, 64], strides = [1, 1]} : vector<8x192xf32> to vector<8x64xf32>
    %244 = vector.extract_strided_slice %239 {offsets = [0, 128], sizes = [8, 64], strides = [1, 1]} : vector<8x192xf32> to vector<8x64xf32>
    %245 = arith.mulf %243, %227 : vector<8x64xf32>
    %246 = arith.mulf %242, %241 : vector<8x64xf32>
    %247 = arith.addf %245, %246 : vector<8x64xf32>
    %248 = math.tanh %247 : vector<8x64xf32>
    %249 = arith.mulf %244, %248 : vector<8x64xf32>
    %250 = vector.extract_strided_slice %207 {offsets = [16, 0], sizes = [8, 256], strides = [1, 1]} : vector<64x256xf32> to vector<8x256xf32>
    %c0_90 = arith.constant 0 : index
    %c0_91 = arith.constant 0 : index
    %251 = vector.load %arg5[%c0_90, %c0_91] : memref<64x256xf32, #tpu.memory_space<vmem>>, vector<64x256xf32>
    %cst_92 = arith.constant dense<0.000000e+00> : vector<8x256xf32>
    %252 = tpu.matmul %249, %251, %cst_92 {dimension_numbers = #tpu.dot_dimension_numbers<[1], [0], [0], [1], [0, 0, 1, 1], [], []>} : vector<8x64xf32>, vector<64x256xf32>, vector<8x256xf32> -> vector<8x256xf32>
    %253 = arith.addf %250, %252 : vector<8x256xf32>
    %254 = vector.extract_strided_slice %253 {offsets = [0, 0], sizes = [8, 192], strides = [1, 1]} : vector<8x256xf32> to vector<8x192xf32>
    %255 = arith.negf %254 : vector<8x192xf32>
    %256 = math.exp %255 : vector<8x192xf32>
    %cst_93 = arith.constant 1.000000e+00 : f32
    %257 = vector.broadcast %cst_93 : f32 to vector<8x192xf32>
    %258 = arith.addf %257, %256 : vector<8x192xf32>
    %259 = arith.divf %257, %258 : vector<8x192xf32>
    %260 = vector.extract_strided_slice %253 {offsets = [0, 192], sizes = [8, 64], strides = [1, 1]} : vector<8x256xf32> to vector<8x64xf32>
    %261 = math.tanh %260 : vector<8x64xf32>
    %262 = vector.extract_strided_slice %259 {offsets = [0, 0], sizes = [8, 64], strides = [1, 1]} : vector<8x192xf32> to vector<8x64xf32>
    %263 = vector.extract_strided_slice %259 {offsets = [0, 64], sizes = [8, 64], strides = [1, 1]} : vector<8x192xf32> to vector<8x64xf32>
    %264 = vector.extract_strided_slice %259 {offsets = [0, 128], sizes = [8, 64], strides = [1, 1]} : vector<8x192xf32> to vector<8x64xf32>
    %265 = arith.mulf %263, %247 : vector<8x64xf32>
    %266 = arith.mulf %262, %261 : vector<8x64xf32>
    %267 = arith.addf %265, %266 : vector<8x64xf32>
    %268 = math.tanh %267 : vector<8x64xf32>
    %269 = arith.mulf %264, %268 : vector<8x64xf32>
    %270 = vector.extract_strided_slice %207 {offsets = [24, 0], sizes = [8, 256], strides = [1, 1]} : vector<64x256xf32> to vector<8x256xf32>
    %c0_94 = arith.constant 0 : index
    %c0_95 = arith.constant 0 : index
    %271 = vector.load %arg5[%c0_94, %c0_95] : memref<64x256xf32, #tpu.memory_space<vmem>>, vector<64x256xf32>
    %cst_96 = arith.constant dense<0.000000e+00> : vector<8x256xf32>
    %272 = tpu.matmul %269, %271, %cst_96 {dimension_numbers = #tpu.dot_dimension_numbers<[1], [0], [0], [1], [0, 0, 1, 1], [], []>} : vector<8x64xf32>, vector<64x256xf32>, vector<8x256xf32> -> vector<8x256xf32>
    %273 = arith.addf %270, %272 : vector<8x256xf32>
    %274 = vector.extract_strided_slice %273 {offsets = [0, 0], sizes = [8, 192], strides = [1, 1]} : vector<8x256xf32> to vector<8x192xf32>
    %275 = arith.negf %274 : vector<8x192xf32>
    %276 = math.exp %275 : vector<8x192xf32>
    %cst_97 = arith.constant 1.000000e+00 : f32
    %277 = vector.broadcast %cst_97 : f32 to vector<8x192xf32>
    %278 = arith.addf %277, %276 : vector<8x192xf32>
    %279 = arith.divf %277, %278 : vector<8x192xf32>
    %280 = vector.extract_strided_slice %273 {offsets = [0, 192], sizes = [8, 64], strides = [1, 1]} : vector<8x256xf32> to vector<8x64xf32>
    %281 = math.tanh %280 : vector<8x64xf32>
    %282 = vector.extract_strided_slice %279 {offsets = [0, 0], sizes = [8, 64], strides = [1, 1]} : vector<8x192xf32> to vector<8x64xf32>
    %283 = vector.extract_strided_slice %279 {offsets = [0, 64], sizes = [8, 64], strides = [1, 1]} : vector<8x192xf32> to vector<8x64xf32>
    %284 = vector.extract_strided_slice %279 {offsets = [0, 128], sizes = [8, 64], strides = [1, 1]} : vector<8x192xf32> to vector<8x64xf32>
    %285 = arith.mulf %283, %267 : vector<8x64xf32>
    %286 = arith.mulf %282, %281 : vector<8x64xf32>
    %287 = arith.addf %285, %286 : vector<8x64xf32>
    %288 = math.tanh %287 : vector<8x64xf32>
    %289 = arith.mulf %284, %288 : vector<8x64xf32>
    %290 = vector.extract_strided_slice %207 {offsets = [32, 0], sizes = [8, 256], strides = [1, 1]} : vector<64x256xf32> to vector<8x256xf32>
    %c0_98 = arith.constant 0 : index
    %c0_99 = arith.constant 0 : index
    %291 = vector.load %arg5[%c0_98, %c0_99] : memref<64x256xf32, #tpu.memory_space<vmem>>, vector<64x256xf32>
    %cst_100 = arith.constant dense<0.000000e+00> : vector<8x256xf32>
    %292 = tpu.matmul %289, %291, %cst_100 {dimension_numbers = #tpu.dot_dimension_numbers<[1], [0], [0], [1], [0, 0, 1, 1], [], []>} : vector<8x64xf32>, vector<64x256xf32>, vector<8x256xf32> -> vector<8x256xf32>
    %293 = arith.addf %290, %292 : vector<8x256xf32>
    %294 = vector.extract_strided_slice %293 {offsets = [0, 0], sizes = [8, 192], strides = [1, 1]} : vector<8x256xf32> to vector<8x192xf32>
    %295 = arith.negf %294 : vector<8x192xf32>
    %296 = math.exp %295 : vector<8x192xf32>
    %cst_101 = arith.constant 1.000000e+00 : f32
    %297 = vector.broadcast %cst_101 : f32 to vector<8x192xf32>
    %298 = arith.addf %297, %296 : vector<8x192xf32>
    %299 = arith.divf %297, %298 : vector<8x192xf32>
    %300 = vector.extract_strided_slice %293 {offsets = [0, 192], sizes = [8, 64], strides = [1, 1]} : vector<8x256xf32> to vector<8x64xf32>
    %301 = math.tanh %300 : vector<8x64xf32>
    %302 = vector.extract_strided_slice %299 {offsets = [0, 0], sizes = [8, 64], strides = [1, 1]} : vector<8x192xf32> to vector<8x64xf32>
    %303 = vector.extract_strided_slice %299 {offsets = [0, 64], sizes = [8, 64], strides = [1, 1]} : vector<8x192xf32> to vector<8x64xf32>
    %304 = vector.extract_strided_slice %299 {offsets = [0, 128], sizes = [8, 64], strides = [1, 1]} : vector<8x192xf32> to vector<8x64xf32>
    %305 = arith.mulf %303, %287 : vector<8x64xf32>
    %306 = arith.mulf %302, %301 : vector<8x64xf32>
    %307 = arith.addf %305, %306 : vector<8x64xf32>
    %308 = math.tanh %307 : vector<8x64xf32>
    %309 = arith.mulf %304, %308 : vector<8x64xf32>
    %310 = vector.extract_strided_slice %207 {offsets = [40, 0], sizes = [8, 256], strides = [1, 1]} : vector<64x256xf32> to vector<8x256xf32>
    %c0_102 = arith.constant 0 : index
    %c0_103 = arith.constant 0 : index
    %311 = vector.load %arg5[%c0_102, %c0_103] : memref<64x256xf32, #tpu.memory_space<vmem>>, vector<64x256xf32>
    %cst_104 = arith.constant dense<0.000000e+00> : vector<8x256xf32>
    %312 = tpu.matmul %309, %311, %cst_104 {dimension_numbers = #tpu.dot_dimension_numbers<[1], [0], [0], [1], [0, 0, 1, 1], [], []>} : vector<8x64xf32>, vector<64x256xf32>, vector<8x256xf32> -> vector<8x256xf32>
    %313 = arith.addf %310, %312 : vector<8x256xf32>
    %314 = vector.extract_strided_slice %313 {offsets = [0, 0], sizes = [8, 192], strides = [1, 1]} : vector<8x256xf32> to vector<8x192xf32>
    %315 = arith.negf %314 : vector<8x192xf32>
    %316 = math.exp %315 : vector<8x192xf32>
    %cst_105 = arith.constant 1.000000e+00 : f32
    %317 = vector.broadcast %cst_105 : f32 to vector<8x192xf32>
    %318 = arith.addf %317, %316 : vector<8x192xf32>
    %319 = arith.divf %317, %318 : vector<8x192xf32>
    %320 = vector.extract_strided_slice %313 {offsets = [0, 192], sizes = [8, 64], strides = [1, 1]} : vector<8x256xf32> to vector<8x64xf32>
    %321 = math.tanh %320 : vector<8x64xf32>
    %322 = vector.extract_strided_slice %319 {offsets = [0, 0], sizes = [8, 64], strides = [1, 1]} : vector<8x192xf32> to vector<8x64xf32>
    %323 = vector.extract_strided_slice %319 {offsets = [0, 64], sizes = [8, 64], strides = [1, 1]} : vector<8x192xf32> to vector<8x64xf32>
    %324 = vector.extract_strided_slice %319 {offsets = [0, 128], sizes = [8, 64], strides = [1, 1]} : vector<8x192xf32> to vector<8x64xf32>
    %325 = arith.mulf %323, %307 : vector<8x64xf32>
    %326 = arith.mulf %322, %321 : vector<8x64xf32>
    %327 = arith.addf %325, %326 : vector<8x64xf32>
    %328 = math.tanh %327 : vector<8x64xf32>
    %329 = arith.mulf %324, %328 : vector<8x64xf32>
    %330 = vector.extract_strided_slice %207 {offsets = [48, 0], sizes = [8, 256], strides = [1, 1]} : vector<64x256xf32> to vector<8x256xf32>
    %c0_106 = arith.constant 0 : index
    %c0_107 = arith.constant 0 : index
    %331 = vector.load %arg5[%c0_106, %c0_107] : memref<64x256xf32, #tpu.memory_space<vmem>>, vector<64x256xf32>
    %cst_108 = arith.constant dense<0.000000e+00> : vector<8x256xf32>
    %332 = tpu.matmul %329, %331, %cst_108 {dimension_numbers = #tpu.dot_dimension_numbers<[1], [0], [0], [1], [0, 0, 1, 1], [], []>} : vector<8x64xf32>, vector<64x256xf32>, vector<8x256xf32> -> vector<8x256xf32>
    %333 = arith.addf %330, %332 : vector<8x256xf32>
    %334 = vector.extract_strided_slice %333 {offsets = [0, 0], sizes = [8, 192], strides = [1, 1]} : vector<8x256xf32> to vector<8x192xf32>
    %335 = arith.negf %334 : vector<8x192xf32>
    %336 = math.exp %335 : vector<8x192xf32>
    %cst_109 = arith.constant 1.000000e+00 : f32
    %337 = vector.broadcast %cst_109 : f32 to vector<8x192xf32>
    %338 = arith.addf %337, %336 : vector<8x192xf32>
    %339 = arith.divf %337, %338 : vector<8x192xf32>
    %340 = vector.extract_strided_slice %333 {offsets = [0, 192], sizes = [8, 64], strides = [1, 1]} : vector<8x256xf32> to vector<8x64xf32>
    %341 = math.tanh %340 : vector<8x64xf32>
    %342 = vector.extract_strided_slice %339 {offsets = [0, 0], sizes = [8, 64], strides = [1, 1]} : vector<8x192xf32> to vector<8x64xf32>
    %343 = vector.extract_strided_slice %339 {offsets = [0, 64], sizes = [8, 64], strides = [1, 1]} : vector<8x192xf32> to vector<8x64xf32>
    %344 = vector.extract_strided_slice %339 {offsets = [0, 128], sizes = [8, 64], strides = [1, 1]} : vector<8x192xf32> to vector<8x64xf32>
    %345 = arith.mulf %343, %327 : vector<8x64xf32>
    %346 = arith.mulf %342, %341 : vector<8x64xf32>
    %347 = arith.addf %345, %346 : vector<8x64xf32>
    %348 = math.tanh %347 : vector<8x64xf32>
    %349 = arith.mulf %344, %348 : vector<8x64xf32>
    %350 = vector.extract_strided_slice %207 {offsets = [56, 0], sizes = [8, 256], strides = [1, 1]} : vector<64x256xf32> to vector<8x256xf32>
    %c0_110 = arith.constant 0 : index
    %c0_111 = arith.constant 0 : index
    %351 = vector.load %arg5[%c0_110, %c0_111] : memref<64x256xf32, #tpu.memory_space<vmem>>, vector<64x256xf32>
    %cst_112 = arith.constant dense<0.000000e+00> : vector<8x256xf32>
    %352 = tpu.matmul %349, %351, %cst_112 {dimension_numbers = #tpu.dot_dimension_numbers<[1], [0], [0], [1], [0, 0, 1, 1], [], []>} : vector<8x64xf32>, vector<64x256xf32>, vector<8x256xf32> -> vector<8x256xf32>
    %353 = arith.addf %350, %352 : vector<8x256xf32>
    %354 = vector.extract_strided_slice %353 {offsets = [0, 0], sizes = [8, 192], strides = [1, 1]} : vector<8x256xf32> to vector<8x192xf32>
    %355 = arith.negf %354 : vector<8x192xf32>
    %356 = math.exp %355 : vector<8x192xf32>
    %cst_113 = arith.constant 1.000000e+00 : f32
    %357 = vector.broadcast %cst_113 : f32 to vector<8x192xf32>
    %358 = arith.addf %357, %356 : vector<8x192xf32>
    %359 = arith.divf %357, %358 : vector<8x192xf32>
    %360 = vector.extract_strided_slice %353 {offsets = [0, 192], sizes = [8, 64], strides = [1, 1]} : vector<8x256xf32> to vector<8x64xf32>
    %361 = math.tanh %360 : vector<8x64xf32>
    %362 = vector.extract_strided_slice %359 {offsets = [0, 0], sizes = [8, 64], strides = [1, 1]} : vector<8x192xf32> to vector<8x64xf32>
    %363 = vector.extract_strided_slice %359 {offsets = [0, 64], sizes = [8, 64], strides = [1, 1]} : vector<8x192xf32> to vector<8x64xf32>
    %364 = vector.extract_strided_slice %359 {offsets = [0, 128], sizes = [8, 64], strides = [1, 1]} : vector<8x192xf32> to vector<8x64xf32>
    %365 = arith.mulf %363, %347 : vector<8x64xf32>
    %366 = arith.mulf %362, %361 : vector<8x64xf32>
    %367 = arith.addf %365, %366 : vector<8x64xf32>
    %368 = math.tanh %367 : vector<8x64xf32>
    %369 = arith.mulf %364, %368 : vector<8x64xf32>
    %c56_114 = arith.constant 56 : index
    %c0_115 = arith.constant 0 : index
    %370 = vector.load %arg9[%c56_114, %c0_115] : memref<64x128xf32, #tpu.memory_space<vmem>>, vector<8x128xf32>
    %c0_116 = arith.constant 0 : index
    %c0_117 = arith.constant 0 : index
    %371 = vector.load %arg4[%c0_116, %c0_117] : memref<128x256xf32, #tpu.memory_space<vmem>>, vector<128x256xf32>
    %cst_118 = arith.constant dense<0.000000e+00> : vector<8x256xf32>
    %372 = tpu.matmul %370, %371, %cst_118 {dimension_numbers = #tpu.dot_dimension_numbers<[1], [0], [0], [1], [0, 0, 1, 1], [], []>} : vector<8x128xf32>, vector<128x256xf32>, vector<8x256xf32> -> vector<8x256xf32>
    %c0_119 = arith.constant 0 : index
    %c0_120 = arith.constant 0 : index
    %373 = vector.load %arg7[%c0_119, %c0_120] : memref<1x256xf32, #tpu.memory_space<vmem>>, vector<1x256xf32>
    %374 = vector.broadcast %373 : vector<1x256xf32> to vector<8x256xf32>
    %375 = arith.addf %372, %374 : vector<8x256xf32>
    %cst_121 = arith.constant 0.000000e+00 : f32
    %376 = vector.broadcast %cst_121 : f32 to vector<8x64xf32>
    %377 = vector.extract_strided_slice %375 {offsets = [0, 0], sizes = [8, 192], strides = [1, 1]} : vector<8x256xf32> to vector<8x192xf32>
    %378 = arith.negf %377 : vector<8x192xf32>
    %379 = math.exp %378 : vector<8x192xf32>
    %cst_122 = arith.constant 1.000000e+00 : f32
    %380 = vector.broadcast %cst_122 : f32 to vector<8x192xf32>
    %381 = arith.addf %380, %379 : vector<8x192xf32>
    %382 = arith.divf %380, %381 : vector<8x192xf32>
    %383 = vector.extract_strided_slice %375 {offsets = [0, 192], sizes = [8, 64], strides = [1, 1]} : vector<8x256xf32> to vector<8x64xf32>
    %384 = math.tanh %383 : vector<8x64xf32>
    %385 = vector.extract_strided_slice %382 {offsets = [0, 0], sizes = [8, 64], strides = [1, 1]} : vector<8x192xf32> to vector<8x64xf32>
    %386 = vector.extract_strided_slice %382 {offsets = [0, 64], sizes = [8, 64], strides = [1, 1]} : vector<8x192xf32> to vector<8x64xf32>
    %387 = vector.extract_strided_slice %382 {offsets = [0, 128], sizes = [8, 64], strides = [1, 1]} : vector<8x192xf32> to vector<8x64xf32>
    %388 = arith.mulf %386, %376 : vector<8x64xf32>
    %389 = arith.mulf %385, %384 : vector<8x64xf32>
    %390 = arith.addf %388, %389 : vector<8x64xf32>
    %391 = math.tanh %390 : vector<8x64xf32>
    %392 = arith.mulf %387, %391 : vector<8x64xf32>
    %c0_123 = arith.constant 0 : index
    %c0_124 = arith.constant 0 : index
    %393 = vector.load %arg8[%c0_123, %c0_124] : memref<8x128xf32, #tpu.memory_space<vmem>>, vector<8x64xf32>
    tpu.vector_store %arg8[%c0_123, %c0_124], %369 {strides = array<i32>} : memref<8x128xf32, #tpu.memory_space<vmem>>, vector<8x64xf32>,
    %c0_125 = arith.constant 0 : index
    %c64_126 = arith.constant 64 : index
    %394 = vector.load %arg8[%c0_125, %c64_126] : memref<8x128xf32, #tpu.memory_space<vmem>>, vector<8x64xf32>
    tpu.vector_store %arg8[%c0_125, %c64_126], %392 {strides = array<i32>} : memref<8x128xf32, #tpu.memory_space<vmem>>, vector<8x64xf32>,
    return
  }
  func.func @transform_0(%arg0: i32) -> (i32, i32, i32) {
    %c0_i32 = arith.constant 0 : i32
    %c0_i32_0 = arith.constant 0 : i32
    %c0_i32_1 = arith.constant 0 : i32
    %c0_i32_2 = arith.constant 0 : i32
    return %c0_i32, %c0_i32_0, %c0_i32_1 : i32, i32, i32
  }
  func.func @transform_1(%arg0: i32) -> (i32, i32) {
    %c0_i32 = arith.constant 0 : i32
    %c0_i32_0 = arith.constant 0 : i32
    %c0_i32_1 = arith.constant 0 : i32
    return %c0_i32, %c0_i32_0 : i32, i32
  }
  func.func @transform_2(%arg0: i32) -> (i32, i32) {
    %c0_i32 = arith.constant 0 : i32
    %c0_i32_0 = arith.constant 0 : i32
    %c0_i32_1 = arith.constant 0 : i32
    return %c0_i32, %c0_i32_0 : i32, i32
  }
  func.func @transform_3(%arg0: i32) -> (i32, i32) {
    %c0_i32 = arith.constant 0 : i32
    %c0_i32_0 = arith.constant 0 : i32
    %c0_i32_1 = arith.constant 0 : i32
    return %c0_i32, %c0_i32_0 : i32, i32
  }
  func.func @transform_4(%arg0: i32) -> (i32, i32) {
    %c0_i32 = arith.constant 0 : i32
    %c0_i32_0 = arith.constant 0 : i32
    %c0_i32_1 = arith.constant 0 : i32
    return %c0_i32, %c0_i32_0 : i32, i32
  }
  func.func @transform_5(%arg0: i32) -> (i32, i32) {
    %c0_i32 = arith.constant 0 : i32
    %c0_i32_0 = arith.constant 0 : i32
    %c0_i32_1 = arith.constant 0 : i32
    return %c0_i32, %c0_i32_0 : i32, i32
  }
  func.func @transform_6(%arg0: i32) -> (i32, i32) {
    %c0_i32 = arith.constant 0 : i32
    %c0_i32_0 = arith.constant 0 : i32
    %c0_i32_1 = arith.constant 0 : i32
    return %c0_i32, %c0_i32_0 : i32, i32
  }
  func.func @transform_7(%arg0: i32) -> (i32, i32) {
    %c0_i32 = arith.constant 0 : i32
    %c0_i32_0 = arith.constant 0 : i32
    %c0_i32_1 = arith.constant 0 : i32
    return %c0_i32, %c0_i32_0 : i32, i32
  }
}

</mosaic_0001>

<llo_original>
// kernel: text_lstm_forward.1
$region0: #{text_lstm_forward.1}
  #allocation0 [shape = 'u32[]', space=smem, size = 0x4, offset = 0x4, fixed_abs, tag = 'smem constant byte address 0x4 - core index']
  #allocation1 [shape = 'u32[144,128]{1,0:T(1,128)}', space=vmem, size = 0x12000, scoped, tag = 'internal scratch']
  #allocation2 [shape = 'f32[64,128]{1,0:T(8,128)}', space=vmem, size = 0x8000, scoped, tag = 'scratch operand']
  %s0 = inlined_call_operand.vmem [shape: f32[8,8,512], index: 0, kind: input, shape index: {}]
  %s1 = inlined_call_operand.vmem [shape: f32[128,512], index: 1, kind: input, shape index: {}]
  %s2 = inlined_call_operand.vmem [shape: f32[128,256], index: 2, kind: input, shape index: {}]
  %s3 = inlined_call_operand.vmem [shape: f32[128,256], index: 3, kind: input, shape index: {}]
  %s4 = inlined_call_operand.vmem [shape: f32[64,256], index: 4, kind: input, shape index: {}]
  %s5 = inlined_call_operand.vmem [shape: f32[1,256], index: 5, kind: input, shape index: {}]
  %s6 = inlined_call_operand.vmem [shape: f32[1,256], index: 6, kind: input, shape index: {}]
  %s7 = inlined_call_operand.vmem [shape: f32[8,128], index: 7, kind: output, shape index: {}]
  %s8 = sld [smem:[#allocation0]]
  $region38: #{text_lstm_forward.1} parent=0
    _
  %s10 = ssub.s32 1, %s8
  %s11 = scalar_select 0, %s10, %s8
  // Predicated region
  $region2: #{text_lstm_forward.1} parent=0 // pred_check
    _
  $region3: #{text_lstm_forward.1} parent=0 // pred_check_branch
    %13 = sbr.rel (0) target = $region5
  $region4: #{text_lstm_forward.1} parent=0 // pred_region
    _
  $region5: #{text_lstm_forward.1} parent=0 // pred_fallthru
    _
  // Predicated region
  $region6: #{text_lstm_forward.1} parent=0 // pred_check
    _
  $region7: #{text_lstm_forward.1} parent=0 // pred_check_branch
    %15 = sbr.rel (0) target = $region9
  $region8: #{text_lstm_forward.1} parent=0 // pred_region
    _
  $region9: #{text_lstm_forward.1} parent=0 // pred_fallthru
    _
  // Predicated region
  $region10: #{text_lstm_forward.1} parent=0 // pred_check
    _
  $region11: #{text_lstm_forward.1} parent=0 // pred_check_branch
    %17 = sbr.rel (0) target = $region13
  $region12: #{text_lstm_forward.1} parent=0 // pred_region
    _
  $region13: #{text_lstm_forward.1} parent=0 // pred_fallthru
    _
  // Predicated region
  $region14: #{text_lstm_forward.1} parent=0 // pred_check
    _
  $region15: #{text_lstm_forward.1} parent=0 // pred_check_branch
    %19 = sbr.rel (0) target = $region17
  $region16: #{text_lstm_forward.1} parent=0 // pred_region
    _
  $region17: #{text_lstm_forward.1} parent=0 // pred_fallthru
    _
  // Predicated region
  $region18: #{text_lstm_forward.1} parent=0 // pred_check
    _
  $region19: #{text_lstm_forward.1} parent=0 // pred_check_branch
    %21 = sbr.rel (0) target = $region21
  $region20: #{text_lstm_forward.1} parent=0 // pred_region
    _
  $region21: #{text_lstm_forward.1} parent=0 // pred_fallthru
    _
  // Predicated region
  $region22: #{text_lstm_forward.1} parent=0 // pred_check
    _
  $region23: #{text_lstm_forward.1} parent=0 // pred_check_branch
    %23 = sbr.rel (0) target = $region25
  $region24: #{text_lstm_forward.1} parent=0 // pred_region
    _
  $region25: #{text_lstm_forward.1} parent=0 // pred_fallthru
    _
  // Predicated region
  $region26: #{text_lstm_forward.1} parent=0 // pred_check
    _
  $region27: #{text_lstm_forward.1} parent=0 // pred_check_branch
    %25 = sbr.rel (0) target = $region29
  $region28: #{text_lstm_forward.1} parent=0 // pred_region
    _
  $region29: #{text_lstm_forward.1} parent=0 // pred_fallthru
    _
  %v26 = vld [vmem:[%s0] sm:$0xff]
  %v27 = vld [vmem:[%s0 + $0x8] sm:$0xff]
  %v28 = vld [vmem:[%s0 + $0x10] sm:$0xff]
  %v29 = vld [vmem:[%s0 + $0x18] sm:$0xff]
  %v30 = vld [vmem:[%s1] sm:$0xff]
  %v31 = vld [vmem:[%s1 + $0x8] sm:$0xff]
  %v32 = vld [vmem:[%s1 + $0x10] sm:$0xff]
  %v33 = vld [vmem:[%s1 + $0x18] sm:$0xff]
  %v34 = vld [vmem:[%s1 + $0x20] sm:$0xff]
  %v35 = vld [vmem:[%s1 + $0x28] sm:$0xff]
  %v36 = vld [vmem:[%s1 + $0x30] sm:$0xff]
  %v37 = vld [vmem:[%s1 + $0x38] sm:$0xff]
  %v38 = vld [vmem:[%s1 + $0x40] sm:$0xff]
  %v39 = vld [vmem:[%s1 + $0x48] sm:$0xff]
  %v40 = vld [vmem:[%s1 + $0x50] sm:$0xff]
  %v41 = vld [vmem:[%s1 + $0x58] sm:$0xff]
  %v42 = vld [vmem:[%s1 + $0x60] sm:$0xff]
  %v43 = vld [vmem:[%s1 + $0x68] sm:$0xff]
  %v44 = vld [vmem:[%s1 + $0x70] sm:$0xff]
  %v45 = vld [vmem:[%s1 + $0x78] sm:$0xff]
  %v46 = vld [vmem:[%s1 + $0x80] sm:$0xff]
  %v47 = vld [vmem:[%s1 + $0x88] sm:$0xff]
  %v48 = vld [vmem:[%s1 + $0x90] sm:$0xff]
  %v49 = vld [vmem:[%s1 + $0x98] sm:$0xff]
  %v50 = vld [vmem:[%s1 + $0xa0] sm:$0xff]
  %v51 = vld [vmem:[%s1 + $0xa8] sm:$0xff]
  %v52 = vld [vmem:[%s1 + $0xb0] sm:$0xff]
  %v53 = vld [vmem:[%s1 + $0xb8] sm:$0xff]
  %v54 = vld [vmem:[%s1 + $0xc0] sm:$0xff]
  %v55 = vld [vmem:[%s1 + $0xc8] sm:$0xff]
  %v56 = vld [vmem:[%s1 + $0xd0] sm:$0xff]
  %v57 = vld [vmem:[%s1 + $0xd8] sm:$0xff]
  %v58 = vld [vmem:[%s1 + $0xe0] sm:$0xff]
  %v59 = vld [vmem:[%s1 + $0xe8] sm:$0xff]
  %v60 = vld [vmem:[%s1 + $0xf0] sm:$0xff]
  %v61 = vld [vmem:[%s1 + $0xf8] sm:$0xff]
  %v62 = vld [vmem:[%s1 + $0x100] sm:$0xff]
  %v63 = vld [vmem:[%s1 + $0x108] sm:$0xff]
  %v64 = vld [vmem:[%s1 + $0x110] sm:$0xff]
  %v65 = vld [vmem:[%s1 + $0x118] sm:$0xff]
  %v66 = vld [vmem:[%s1 + $0x120] sm:$0xff]
  %v67 = vld [vmem:[%s1 + $0x128] sm:$0xff]
  %v68 = vld [vmem:[%s1 + $0x130] sm:$0xff]
  %v69 = vld [vmem:[%s1 + $0x138] sm:$0xff]
  %v70 = vld [vmem:[%s1 + $0x140] sm:$0xff]
  %v71 = vld [vmem:[%s1 + $0x148] sm:$0xff]
  %v72 = vld [vmem:[%s1 + $0x150] sm:$0xff]
  %v73 = vld [vmem:[%s1 + $0x158] sm:$0xff]
  %v74 = vld [vmem:[%s1 + $0x160] sm:$0xff]
  %v75 = vld [vmem:[%s1 + $0x168] sm:$0xff]
  %v76 = vld [vmem:[%s1 + $0x170] sm:$0xff]
  %v77 = vld [vmem:[%s1 + $0x178] sm:$0xff]
  %v78 = vld [vmem:[%s1 + $0x180] sm:$0xff]
  %v79 = vld [vmem:[%s1 + $0x188] sm:$0xff]
  %v80 = vld [vmem:[%s1 + $0x190] sm:$0xff]
  %v81 = vld [vmem:[%s1 + $0x198] sm:$0xff]
  %v82 = vld [vmem:[%s1 + $0x1a0] sm:$0xff]
  %v83 = vld [vmem:[%s1 + $0x1a8] sm:$0xff]
  %v84 = vld [vmem:[%s1 + $0x1b0] sm:$0xff]
  %v85 = vld [vmem:[%s1 + $0x1b8] sm:$0xff]
  %v86 = vld [vmem:[%s1 + $0x1c0] sm:$0xff]
  %v87 = vld [vmem:[%s1 + $0x1c8] sm:$0xff]
  %v88 = vld [vmem:[%s1 + $0x1d0] sm:$0xff]
  %v89 = vld [vmem:[%s1 + $0x1d8] sm:$0xff]
  %v90 = vld [vmem:[%s1 + $0x1e0] sm:$0xff]
  %v91 = vld [vmem:[%s1 + $0x1e8] sm:$0xff]
  %v92 = vld [vmem:[%s1 + $0x1f0] sm:$0xff]
  %v93 = vld [vmem:[%s1 + $0x1f8] sm:$0xff]
  %94 = vmatprep.subr.mxu0 %v91
  %95 = vmatpush1.msra.mxu0 %v90
  %96 = vmatprep.subr.mxu0 %v87
  %97 = vmatpush1.msra.mxu0 %v86
  %98 = vmatprep.subr.mxu0 %v83
  %99 = vmatpush1.msra.mxu0 %v82
  %100 = vmatprep.subr.mxu0 %v79
  %101 = vmatpush1.msra.mxu0 %v78
  %102 = vmatprep.subr.mxu0 %v75
  %103 = vmatpush1.msra.mxu0 %v74
  %104 = vmatprep.subr.mxu0 %v71
  %105 = vmatpush1.msra.mxu0 %v70
  %106 = vmatprep.subr.mxu0 %v67
  %107 = vmatpush1.msra.mxu0 %v66
  %108 = vmatprep.subr.mxu0 %v63
  %109 = vmatpush1.msra.mxu0 %v62
  %110 = vmatprep.subr.mxu0 %v59
  %111 = vmatpush1.msra.mxu0 %v58
  %112 = vmatprep.subr.mxu0 %v55
  %113 = vmatpush1.msra.mxu0 %v54
  %114 = vmatprep.subr.mxu0 %v51
  %115 = vmatpush1.msra.mxu0 %v50
  %116 = vmatprep.subr.mxu0 %v47
  %117 = vmatpush1.msra.mxu0 %v46
  %118 = vmatprep.subr.mxu0 %v43
  %119 = vmatpush1.msra.mxu0 %v42
  %120 = vmatprep.subr.mxu0 %v39
  %121 = vmatpush1.msra.mxu0 %v38
  %122 = vmatprep.subr.mxu0 %v35
  %123 = vmatpush1.msra.mxu0 %v34
  %124 = vmatprep.subr.mxu0 %v31
  %125 = vmatpush1.msra.mxu0 %v30
  %126 = vmatprep.subr.mxu0 0.0
  %127 = vmatpush2.msra.mxu0 0.0
  %128 = vmatprep.subr.mxu0 0.0
  %129 = vmatpush2.msra.mxu0 0.0
  %130 = vmatprep.subr.mxu0 0.0
  %131 = vmatpush2.msra.mxu0 0.0
  %132 = vmatprep.subr.mxu0 0.0
  %133 = vmatpush2.msra.mxu0 0.0
  %134 = vmatprep.subr.mxu0 0.0
  %135 = vmatpush2.msra.mxu0 0.0
  %136 = vmatprep.subr.mxu0 0.0
  %137 = vmatpush2.msra.mxu0 0.0
  %138 = vmatprep.subr.mxu0 0.0
  %139 = vmatpush2.msra.mxu0 0.0
  %140 = vmatprep.subr.mxu0 0.0
  %141 = vmatpush2.msra.mxu0 0.0
  %142 = vmatprep.subr.mxu0 0.0
  %143 = vmatpush2.msra.mxu0 0.0
  %144 = vmatprep.subr.mxu0 0.0
  %145 = vmatpush2.msra.mxu0 0.0
  %146 = vmatprep.subr.mxu0 0.0
  %147 = vmatpush2.msra.mxu0 0.0
  %148 = vmatprep.subr.mxu0 0.0
  %149 = vmatpush2.msra.mxu0 0.0
  %150 = vmatprep.subr.mxu0 0.0
  %151 = vmatpush2.msra.mxu0 0.0
  %152 = vmatprep.subr.mxu0 0.0
  %153 = vmatpush2.msra.mxu0 0.0
  %154 = vmatprep.subr.mxu0 0.0
  %155 = vmatpush2.msra.mxu0 0.0
  %156 = vmatprep.subr.mxu0 0.0
  %157 = vmatpush2.msra.mxu0 0.0
  %158 = vmatprep.mubr.f32.mxu0 0.0
  %159 = vmatmul.mubr.f32.gmra.mxu0 0.0
  %v160 = vpop.f32.mrf.mxu0
  %v161 = vadd.f32 0.0, %v160
  %v162 = vpop.f32.mrf.mxu0
  %v163 = vadd.f32 0.0, %v162
  %164 = vdwg.mxu0
  %165 = vmatprep.subr.mxu0 %v93
  %166 = vmatpush1.msra.mxu0 %v92
  %167 = vmatprep.subr.mxu0 %v89
  %168 = vmatpush1.msra.mxu0 %v88
  %169 = vmatprep.subr.mxu0 %v85
  %170 = vmatpush1.msra.mxu0 %v84
  %171 = vmatprep.subr.mxu0 %v81
  %172 = vmatpush1.msra.mxu0 %v80
  %173 = vmatprep.subr.mxu0 %v77
  %174 = vmatpush1.msra.mxu0 %v76
  %175 = vmatprep.subr.mxu0 %v73
  %176 = vmatpush1.msra.mxu0 %v72
  %177 = vmatprep.subr.mxu0 %v69
  %178 = vmatpush1.msra.mxu0 %v68
  %179 = vmatprep.subr.mxu0 %v65
  %180 = vmatpush1.msra.mxu0 %v64
  %181 = vmatprep.subr.mxu0 %v61
  %182 = vmatpush1.msra.mxu0 %v60
  %183 = vmatprep.subr.mxu0 %v57
  %184 = vmatpush1.msra.mxu0 %v56
  %185 = vmatprep.subr.mxu0 %v53
  %186 = vmatpush1.msra.mxu0 %v52
  %187 = vmatprep.subr.mxu0 %v49
  %188 = vmatpush1.msra.mxu0 %v48
  %189 = vmatprep.subr.mxu0 %v45
  %190 = vmatpush1.msra.mxu0 %v44
  %191 = vmatprep.subr.mxu0 %v41
  %192 = vmatpush1.msra.mxu0 %v40
  %193 = vmatprep.subr.mxu0 %v37
  %194 = vmatpush1.msra.mxu0 %v36
  %195 = vmatprep.subr.mxu0 %v33
  %196 = vmatpush1.msra.mxu0 %v32
  %197 = vmatprep.subr.mxu0 0.0
  %198 = vmatpush2.msra.mxu0 0.0
  %199 = vmatprep.subr.mxu0 0.0
  %200 = vmatpush2.msra.mxu0 0.0
  %201 = vmatprep.subr.mxu0 0.0
  %202 = vmatpush2.msra.mxu0 0.0
  %203 = vmatprep.subr.mxu0 0.0
  %204 = vmatpush2.msra.mxu0 0.0
  %205 = vmatprep.subr.mxu0 0.0
  %206 = vmatpush2.msra.mxu0 0.0
  %207 = vmatprep.subr.mxu0 0.0
  %208 = vmatpush2.msra.mxu0 0.0
  %209 = vmatprep.subr.mxu0 0.0
  %210 = vmatpush2.msra.mxu0 0.0
  %211 = vmatprep.subr.mxu0 0.0
  %212 = vmatpush2.msra.mxu0 0.0
  %213 = vmatprep.subr.mxu0 0.0
  %214 = vmatpush2.msra.mxu0 0.0
  %215 = vmatprep.subr.mxu0 0.0
  %216 = vmatpush2.msra.mxu0 0.0
  %217 = vmatprep.subr.mxu0 0.0
  %218 = vmatpush2.msra.mxu0 0.0
  %219 = vmatprep.subr.mxu0 0.0
  %220 = vmatpush2.msra.mxu0 0.0
  %221 = vmatprep.subr.mxu0 0.0
  %222 = vmatpush2.msra.mxu0 0.0
  %223 = vmatprep.subr.mxu0 0.0
  %224 = vmatpush2.msra.mxu0 0.0
  %225 = vmatprep.subr.mxu0 0.0
  %226 = vmatpush2.msra.mxu0 0.0
  %227 = vmatprep.subr.mxu0 0.0
  %228 = vmatpush2.msra.mxu0 0.0
  %229 = vmatprep.mubr.f32.mxu0 0.0
  %230 = vmatmul.mubr.f32.gmra.mxu0 0.0
  %v231 = vpop.f32.mrf.mxu0
  %v232 = vadd.f32 0.0, %v231
  %v233 = vpop.f32.mrf.mxu0
  %v234 = vadd.f32 0.0, %v233
  %235 = vdwg.mxu0
  %v236 = vadd.f32 %v26, %v161
  %v237 = vadd.f32 %v27, %v163
  %v238 = vadd.f32 %v28, %v232
  %v239 = vadd.f32 %v29, %v234
  %v240 = vxor.u32 %v236, 2147483648
  %v241 = vxor.u32 %v237, 2147483648
  %v242 = vxor.u32 %v238, 2147483648
  %v243 = vmul.f32 %v240, 1.442695
  %v244 = vpow.pop %v243
  %v245 = vmul.f32 %v241, 1.442695
  %v246 = vpow.pop %v245
  %v247 = vmul.f32 %v242, 1.442695
  %v248 = vpow.pop %v247
  %v249 = vadd.f32 %v244, 1.0
  %v250 = vadd.f32 %v246, 1.0
  %v251 = vadd.f32 %v248, 1.0
  %v252 = vrcp.pop %v249
  %v253 = vmul.f32 1.0, %v252
  %v254 = vrcp.pop %v250
  %v255 = vmul.f32 1.0, %v254
  %v256 = vrcp.pop %v251
  %v257 = vmul.f32 1.0, %v256
  %v258 = vtanh.pop %v239
  %v259 = vmul.f32 %v255, 0.0
  %v260 = vmul.f32 %v253, %v258
  %v261 = vadd.f32 %v259, %v260
  %v262 = vtanh.pop %v261
  %v263 = vmul.f32 %v257, %v262
  %vm264 = vcmask 523264
  %265 = vst.msk [vmem:[#allocation2] sm:$0xff] %vm264, %v263
  %vm266 = vcmask 1048064
  %267 = vst.msk [vmem:[#allocation2 + $0x38] sm:$0xff] %vm266, %v263
  %s268 = scalar_lea.vmem %s0, 32
  %v269 = vld [vmem:[%s268] sm:$0xff]
  %v270 = vld [vmem:[%s268 + $0x8] sm:$0xff]
  %v271 = vld [vmem:[%s268 + $0x10] sm:$0xff]
  %v272 = vld [vmem:[%s268 + $0x18] sm:$0xff]
  %v273 = vld [vmem:[%s1] sm:$0xff]
  %v274 = vld [vmem:[%s1 + $0x8] sm:$0xff]
  %v275 = vld [vmem:[%s1 + $0x10] sm:$0xff]
  %v276 = vld [vmem:[%s1 + $0x18] sm:$0xff]
  %v277 = vld [vmem:[%s1 + $0x20] sm:$0xff]
  %v278 = vld [vmem:[%s1 + $0x28] sm:$0xff]
  %v279 = vld [vmem:[%s1 + $0x30] sm:$0xff]
  %v280 = vld [vmem:[%s1 + $0x38] sm:$0xff]
  %v281 = vld [vmem:[%s1 + $0x40] sm:$0xff]
  %v282 = vld [vmem:[%s1 + $0x48] sm:$0xff]
  %v283 = vld [vmem:[%s1 + $0x50] sm:$0xff]
  %v284 = vld [vmem:[%s1 + $0x58] sm:$0xff]
  %v285 = vld [vmem:[%s1 + $0x60] sm:$0xff]
  %v286 = vld [vmem:[%s1 + $0x68] sm:$0xff]
  %v287 = vld [vmem:[%s1 + $0x70] sm:$0xff]
  %v288 = vld [vmem:[%s1 + $0x78] sm:$0xff]
  %v289 = vld [vmem:[%s1 + $0x80] sm:$0xff]
  %v290 = vld [vmem:[%s1 + $0x88] sm:$0xff]
  %v291 = vld [vmem:[%s1 + $0x90] sm:$0xff]
  %v292 = vld [vmem:[%s1 + $0x98] sm:$0xff]
  %v293 = vld [vmem:[%s1 + $0xa0] sm:$0xff]
  %v294 = vld [vmem:[%s1 + $0xa8] sm:$0xff]
  %v295 = vld [vmem:[%s1 + $0xb0] sm:$0xff]
  %v296 = vld [vmem:[%s1 + $0xb8] sm:$0xff]
  %v297 = vld [vmem:[%s1 + $0xc0] sm:$0xff]
  %v298 = vld [vmem:[%s1 + $0xc8] sm:$0xff]
  %v299 = vld [vmem:[%s1 + $0xd0] sm:$0xff]
  %v300 = vld [vmem:[%s1 + $0xd8] sm:$0xff]
  %v301 = vld [vmem:[%s1 + $0xe0] sm:$0xff]
  %v302 = vld [vmem:[%s1 + $0xe8] sm:$0xff]
  %v303 = vld [vmem:[%s1 + $0xf0] sm:$0xff]
  %v304 = vld [vmem:[%s1 + $0xf8] sm:$0xff]
  %v305 = vld [vmem:[%s1 + $0x100] sm:$0xff]
  %v306 = vld [vmem:[%s1 + $0x108] sm:$0xff]
  %v307 = vld [vmem:[%s1 + $0x110] sm:$0xff]
  %v308 = vld [vmem:[%s1 + $0x118] sm:$0xff]
  %v309 = vld [vmem:[%s1 + $0x120] sm:$0xff]
  %v310 = vld [vmem:[%s1 + $0x128] sm:$0xff]
  %v311 = vld [vmem:[%s1 + $0x130] sm:$0xff]
  %v312 = vld [vmem:[%s1 + $0x138] sm:$0xff]
  %v313 = vld [vmem:[%s1 + $0x140] sm:$0xff]
  %v314 = vld [vmem:[%s1 + $0x148] sm:$0xff]
  %v315 = vld [vmem:[%s1 + $0x150] sm:$0xff]
  %v316 = vld [vmem:[%s1 + $0x158] sm:$0xff]
  %v317 = vld [vmem:[%s1 + $0x160] sm:$0xff]
  %v318 = vld [vmem:[%s1 + $0x168] sm:$0xff]
  %v319 = vld [vmem:[%s1 + $0x170] sm:$0xff]
  %v320 = vld [vmem:[%s1 + $0x178] sm:$0xff]
  %v321 = vld [vmem:[%s1 + $0x180] sm:$0xff]
  %v322 = vld [vmem:[%s1 + $0x188] sm:$0xff]
  %v323 = vld [vmem:[%s1 + $0x190] sm:$0xff]
  %v324 = vld [vmem:[%s1 + $0x198] sm:$0xff]
  %v325 = vld [vmem:[%s1 + $0x1a0] sm:$0xff]
  %v326 = vld [vmem:[%s1 + $0x1a8] sm:$0xff]
  %v327 = vld [vmem:[%s1 + $0x1b0] sm:$0xff]
  %v328 = vld [vmem:[%s1 + $0x1b8] sm:$0xff]
  %v329 = vld [vmem:[%s1 + $0x1c0] sm:$0xff]
  %v330 = vld [vmem:[%s1 + $0x1c8] sm:$0xff]
  %v331 = vld [vmem:[%s1 + $0x1d0] sm:$0xff]
  %v332 = vld [vmem:[%s1 + $0x1d8] sm:$0xff]
  %v333 = vld [vmem:[%s1 + $0x1e0] sm:$0xff]
  %v334 = vld [vmem:[%s1 + $0x1e8] sm:$0xff]
  %v335 = vld [vmem:[%s1 + $0x1f0] sm:$0xff]
  %v336 = vld [vmem:[%s1 + $0x1f8] sm:$0xff]
  %337 = vmatprep.subr.mxu0 %v334
  %338 = vmatpush1.msra.mxu0 %v333
  %339 = vmatprep.subr.mxu0 %v330
  %340 = vmatpush1.msra.mxu0 %v329
  %341 = vmatprep.subr.mxu0 %v326
  %342 = vmatpush1.msra.mxu0 %v325
  %343 = vmatprep.subr.mxu0 %v322
  %344 = vmatpush1.msra.mxu0 %v321
  %345 = vmatprep.subr.mxu0 %v318
  %346 = vmatpush1.msra.mxu0 %v317
  %347 = vmatprep.subr.mxu0 %v314
  %348 = vmatpush1.msra.mxu0 %v313
  %349 = vmatprep.subr.mxu0 %v310
  %350 = vmatpush1.msra.mxu0 %v309
  %351 = vmatprep.subr.mxu0 %v306
  %352 = vmatpush1.msra.mxu0 %v305
  %353 = vmatprep.subr.mxu0 %v302
  %354 = vmatpush1.msra.mxu0 %v301
  %355 = vmatprep.subr.mxu0 %v298
  %356 = vmatpush1.msra.mxu0 %v297
  %357 = vmatprep.subr.mxu0 %v294
  %358 = vmatpush1.msra.mxu0 %v293
  %359 = vmatprep.subr.mxu0 %v290
  %360 = vmatpush1.msra.mxu0 %v289
  %361 = vmatprep.subr.mxu0 %v286
  %362 = vmatpush1.msra.mxu0 %v285
  %363 = vmatprep.subr.mxu0 %v282
  %364 = vmatpush1.msra.mxu0 %v281
  %365 = vmatprep.subr.mxu0 %v278
  %366 = vmatpush1.msra.mxu0 %v277
  %367 = vmatprep.subr.mxu0 %v274
  %368 = vmatpush1.msra.mxu0 %v273
  %369 = vmatprep.subr.mxu0 0.0
  %370 = vmatpush2.msra.mxu0 0.0
  %371 = vmatprep.subr.mxu0 0.0
  %372 = vmatpush2.msra.mxu0 0.0
  %373 = vmatprep.subr.mxu0 0.0
  %374 = vmatpush2.msra.mxu0 0.0
  %375 = vmatprep.subr.mxu0 0.0
  %376 = vmatpush2.msra.mxu0 0.0
  %377 = vmatprep.subr.mxu0 0.0
  %378 = vmatpush2.msra.mxu0 0.0
  %379 = vmatprep.subr.mxu0 0.0
  %380 = vmatpush2.msra.mxu0 0.0
  %381 = vmatprep.subr.mxu0 0.0
  %382 = vmatpush2.msra.mxu0 0.0
  %383 = vmatprep.subr.mxu0 0.0
  %384 = vmatpush2.msra.mxu0 0.0
  %385 = vmatprep.subr.mxu0 0.0
  %386 = vmatpush2.msra.mxu0 0.0
  %387 = vmatprep.subr.mxu0 0.0
  %388 = vmatpush2.msra.mxu0 0.0
  %389 = vmatprep.subr.mxu0 0.0
  %390 = vmatpush2.msra.mxu0 0.0
  %391 = vmatprep.subr.mxu0 0.0
  %392 = vmatpush2.msra.mxu0 0.0
  %393 = vmatprep.subr.mxu0 0.0
  %394 = vmatpush2.msra.mxu0 0.0
  %395 = vmatprep.subr.mxu0 0.0
  %396 = vmatpush2.msra.mxu0 0.0
  %397 = vmatprep.subr.mxu0 0.0
  %398 = vmatpush2.msra.mxu0 0.0
  %399 = vmatprep.subr.mxu0 0.0
  %400 = vmatpush2.msra.mxu0 0.0
  %401 = vmatprep.mubr.f32.mxu0 0.0
  %402 = vmatmul.mubr.f32.gmra.mxu0 %v263
  %v403 = vpop.f32.mrf.mxu0
  %v404 = vadd.f32 0.0, %v403
  %v405 = vpop.f32.mrf.mxu0
  %v406 = vadd.f32 0.0, %v405
  %407 = vdwg.mxu0
  %408 = vmatprep.subr.mxu0 %v336
  %409 = vmatpush1.msra.mxu0 %v335
  %410 = vmatprep.subr.mxu0 %v332
  %411 = vmatpush1.msra.mxu0 %v331
  %412 = vmatprep.subr.mxu0 %v328
  %413 = vmatpush1.msra.mxu0 %v327
  %414 = vmatprep.subr.mxu0 %v324
  %415 = vmatpush1.msra.mxu0 %v323
  %416 = vmatprep.subr.mxu0 %v320
  %417 = vmatpush1.msra.mxu0 %v319
  %418 = vmatprep.subr.mxu0 %v316
  %419 = vmatpush1.msra.mxu0 %v315
  %420 = vmatprep.subr.mxu0 %v312
  %421 = vmatpush1.msra.mxu0 %v311
  %422 = vmatprep.subr.mxu0 %v308
  %423 = vmatpush1.msra.mxu0 %v307
  %424 = vmatprep.subr.mxu0 %v304
  %425 = vmatpush1.msra.mxu0 %v303
  %426 = vmatprep.subr.mxu0 %v300
  %427 = vmatpush1.msra.mxu0 %v299
  %428 = vmatprep.subr.mxu0 %v296
  %429 = vmatpush1.msra.mxu0 %v295
  %430 = vmatprep.subr.mxu0 %v292
  %431 = vmatpush1.msra.mxu0 %v291
  %432 = vmatprep.subr.mxu0 %v288
  %433 = vmatpush1.msra.mxu0 %v287
  %434 = vmatprep.subr.mxu0 %v284
  %435 = vmatpush1.msra.mxu0 %v283
  %436 = vmatprep.subr.mxu0 %v280
  %437 = vmatpush1.msra.mxu0 %v279
  %438 = vmatprep.subr.mxu0 %v276
  %439 = vmatpush1.msra.mxu0 %v275
  %440 = vmatprep.subr.mxu0 0.0
  %441 = vmatpush2.msra.mxu0 0.0
  %442 = vmatprep.subr.mxu0 0.0
  %443 = vmatpush2.msra.mxu0 0.0
  %444 = vmatprep.subr.mxu0 0.0
  %445 = vmatpush2.msra.mxu0 0.0
  %446 = vmatprep.subr.mxu0 0.0
  %447 = vmatpush2.msra.mxu0 0.0
  %448 = vmatprep.subr.mxu0 0.0
  %449 = vmatpush2.msra.mxu0 0.0
  %450 = vmatprep.subr.mxu0 0.0
  %451 = vmatpush2.msra.mxu0 0.0
  %452 = vmatprep.subr.mxu0 0.0
  %453 = vmatpush2.msra.mxu0 0.0
  %454 = vmatprep.subr.mxu0 0.0
  %455 = vmatpush2.msra.mxu0 0.0
  %456 = vmatprep.subr.mxu0 0.0
  %457 = vmatpush2.msra.mxu0 0.0
  %458 = vmatprep.subr.mxu0 0.0
  %459 = vmatpush2.msra.mxu0 0.0
  %460 = vmatprep.subr.mxu0 0.0
  %461 = vmatpush2.msra.mxu0 0.0
  %462 = vmatprep.subr.mxu0 0.0
  %463 = vmatpush2.msra.mxu0 0.0
  %464 = vmatprep.subr.mxu0 0.0
  %465 = vmatpush2.msra.mxu0 0.0
  %466 = vmatprep.subr.mxu0 0.0
  %467 = vmatpush2.msra.mxu0 0.0
  %468 = vmatprep.subr.mxu0 0.0
  %469 = vmatpush2.msra.mxu0 0.0
  %470 = vmatprep.subr.mxu0 0.0
  %471 = vmatpush2.msra.mxu0 0.0
  %472 = vmatprep.mubr.f32.mxu0 0.0
  %473 = vmatmul.mubr.f32.gmra.mxu0 %v263
  %v474 = vpop.f32.mrf.mxu0
  %v475 = vadd.f32 0.0, %v474
  %v476 = vpop.f32.mrf.mxu0
  %v477 = vadd.f32 0.0, %v476
  %478 = vdwg.mxu0
  %v479 = vadd.f32 %v269, %v404
  %v480 = vadd.f32 %v270, %v406
  %v481 = vadd.f32 %v271, %v475
  %v482 = vadd.f32 %v272, %v477
  %v483 = vxor.u32 %v479, 2147483648
  %v484 = vxor.u32 %v480, 2147483648
  %v485 = vxor.u32 %v481, 2147483648
  %v486 = vmul.f32 %v483, 1.442695
  %v487 = vpow.pop %v486
  %v488 = vmul.f32 %v484, 1.442695
  %v489 = vpow.pop %v488
  %v490 = vmul.f32 %v485, 1.442695
  %v491 = vpow.pop %v490
  %v492 = vadd.f32 %v487, 1.0
  %v493 = vadd.f32 %v489, 1.0
  %v494 = vadd.f32 %v491, 1.0
  %v495 = vrcp.pop %v492
  %v496 = vmul.f32 1.0, %v495
  %v497 = vrcp.pop %v493
  %v498 = vmul.f32 1.0, %v497
  %v499 = vrcp.pop %v494
  %v500 = vmul.f32 1.0, %v499
  %v501 = vtanh.pop %v482
  %v502 = vmul.f32 %v498, %v261
  %v503 = vmul.f32 %v496, %v501
  %v504 = vadd.f32 %v502, %v503
  %v505 = vtanh.pop %v504
  %v506 = vmul.f32 %v500, %v505
  %507 = vst.msk [vmem:[#allocation2 + $0x8] sm:$0xff] %vm264, %v506
  %508 = vst.msk [vmem:[#allocation2 + $0x30] sm:$0xff] %vm266, %v506
  %s509 = scalar_lea.vmem %s0, 64
  %v510 = vld [vmem:[%s509] sm:$0xff]
  %v511 = vld [vmem:[%s509 + $0x8] sm:$0xff]
  %v512 = vld [vmem:[%s509 + $0x10] sm:$0xff]
  %v513 = vld [vmem:[%s509 + $0x18] sm:$0xff]
  %v514 = vld [vmem:[%s1] sm:$0xff]
  %v515 = vld [vmem:[%s1 + $0x8] sm:$0xff]
  %v516 = vld [vmem:[%s1 + $0x10] sm:$0xff]
  %v517 = vld [vmem:[%s1 + $0x18] sm:$0xff]
  %v518 = vld [vmem:[%s1 + $0x20] sm:$0xff]
  %v519 = vld [vmem:[%s1 + $0x28] sm:$0xff]
  %v520 = vld [vmem:[%s1 + $0x30] sm:$0xff]
  %v521 = vld [vmem:[%s1 + $0x38] sm:$0xff]
  %v522 = vld [vmem:[%s1 + $0x40] sm:$0xff]
  %v523 = vld [vmem:[%s1 + $0x48] sm:$0xff]
  %v524 = vld [vmem:[%s1 + $0x50] sm:$0xff]
  %v525 = vld [vmem:[%s1 + $0x58] sm:$0xff]
  %v526 = vld [vmem:[%s1 + $0x60] sm:$0xff]
  %v527 = vld [vmem:[%s1 + $0x68] sm:$0xff]
  %v528 = vld [vmem:[%s1 + $0x70] sm:$0xff]
  %v529 = vld [vmem:[%s1 + $0x78] sm:$0xff]
  %v530 = vld [vmem:[%s1 + $0x80] sm:$0xff]
  %v531 = vld [vmem:[%s1 + $0x88] sm:$0xff]
  %v532 = vld [vmem:[%s1 + $0x90] sm:$0xff]
  %v533 = vld [vmem:[%s1 + $0x98] sm:$0xff]
  %v534 = vld [vmem:[%s1 + $0xa0] sm:$0xff]
  %v535 = vld [vmem:[%s1 + $0xa8] sm:$0xff]
  %v536 = vld [vmem:[%s1 + $0xb0] sm:$0xff]
  %v537 = vld [vmem:[%s1 + $0xb8] sm:$0xff]
  %v538 = vld [vmem:[%s1 + $0xc0] sm:$0xff]
  %v539 = vld [vmem:[%s1 + $0xc8] sm:$0xff]
  %v540 = vld [vmem:[%s1 + $0xd0] sm:$0xff]
  %v541 = vld [vmem:[%s1 + $0xd8] sm:$0xff]
  %v542 = vld [vmem:[%s1 + $0xe0] sm:$0xff]
  %v543 = vld [vmem:[%s1 + $0xe8] sm:$0xff]
  %v544 = vld [vmem:[%s1 + $0xf0] sm:$0xff]
  %v545 = vld [vmem:[%s1 + $0xf8] sm:$0xff]
  %v546 = vld [vmem:[%s1 + $0x100] sm:$0xff]
  %v547 = vld [vmem:[%s1 + $0x108] sm:$0xff]
  %v548 = vld [vmem:[%s1 + $0x110] sm:$0xff]
  %v549 = vld [vmem:[%s1 + $0x118] sm:$0xff]
  %v550 = vld [vmem:[%s1 + $0x120] sm:$0xff]
  %v551 = vld [vmem:[%s1 + $0x128] sm:$0xff]
  %v552 = vld [vmem:[%s1 + $0x130] sm:$0xff]
  %v553 = vld [vmem:[%s1 + $0x138] sm:$0xff]
  %v554 = vld [vmem:[%s1 + $0x140] sm:$0xff]
  %v555 = vld [vmem:[%s1 + $0x148] sm:$0xff]
  %v556 = vld [vmem:[%s1 + $0x150] sm:$0xff]
  %v557 = vld [vmem:[%s1 + $0x158] sm:$0xff]
  %v558 = vld [vmem:[%s1 + $0x160] sm:$0xff]
  %v559 = vld [vmem:[%s1 + $0x168] sm:$0xff]
  %v560 = vld [vmem:[%s1 + $0x170] sm:$0xff]
  %v561 = vld [vmem:[%s1 + $0x178] sm:$0xff]
  %v562 = vld [vmem:[%s1 + $0x180] sm:$0xff]
  %v563 = vld [vmem:[%s1 + $0x188] sm:$0xff]
  %v564 = vld [vmem:[%s1 + $0x190] sm:$0xff]
  %v565 = vld [vmem:[%s1 + $0x198] sm:$0xff]
  %v566 = vld [vmem:[%s1 + $0x1a0] sm:$0xff]
  %v567 = vld [vmem:[%s1 + $0x1a8] sm:$0xff]
  %v568 = vld [vmem:[%s1 + $0x1b0] sm:$0xff]
  %v569 = vld [vmem:[%s1 + $0x1b8] sm:$0xff]
  %v570 = vld [vmem:[%s1 + $0x1c0] sm:$0xff]
  %v571 = vld [vmem:[%s1 + $0x1c8] sm:$0xff]
  %v572 = vld [vmem:[%s1 + $0x1d0] sm:$0xff]
  %v573 = vld [vmem:[%s1 + $0x1d8] sm:$0xff]
  %v574 = vld [vmem:[%s1 + $0x1e0] sm:$0xff]
  %v575 = vld [vmem:[%s1 + $0x1e8] sm:$0xff]
  %v576 = vld [vmem:[%s1 + $0x1f0] sm:$0xff]
  %v577 = vld [vmem:[%s1 + $0x1f8] sm:$0xff]
  %578 = vmatprep.subr.mxu0 %v575
  %579 = vmatpush1.msra.mxu0 %v574
  %580 = vmatprep.subr.mxu0 %v571
  %581 = vmatpush1.msra.mxu0 %v570
  %582 = vmatprep.subr.mxu0 %v567
  %583 = vmatpush1.msra.mxu0 %v566
  %584 = vmatprep.subr.mxu0 %v563
  %585 = vmatpush1.msra.mxu0 %v562
  %586 = vmatprep.subr.mxu0 %v559
  %587 = vmatpush1.msra.mxu0 %v558
  %588 = vmatprep.subr.mxu0 %v555
  %589 = vmatpush1.msra.mxu0 %v554
  %590 = vmatprep.subr.mxu0 %v551
  %591 = vmatpush1.msra.mxu0 %v550
  %592 = vmatprep.subr.mxu0 %v547
  %593 = vmatpush1.msra.mxu0 %v546
  %594 = vmatprep.subr.mxu0 %v543
  %595 = vmatpush1.msra.mxu0 %v542
  %596 = vmatprep.subr.mxu0 %v539
  %597 = vmatpush1.msra.mxu0 %v538
  %598 = vmatprep.subr.mxu0 %v535
  %599 = vmatpush1.msra.mxu0 %v534
  %600 = vmatprep.subr.mxu0 %v531
  %601 = vmatpush1.msra.mxu0 %v530
  %602 = vmatprep.subr.mxu0 %v527
  %603 = vmatpush1.msra.mxu0 %v526
  %604 = vmatprep.subr.mxu0 %v523
  %605 = vmatpush1.msra.mxu0 %v522
  %606 = vmatprep.subr.mxu0 %v519
  %607 = vmatpush1.msra.mxu0 %v518
  %608 = vmatprep.subr.mxu0 %v515
  %609 = vmatpush1.msra.mxu0 %v514
  %610 = vmatprep.subr.mxu0 0.0
  %611 = vmatpush2.msra.mxu0 0.0
  %612 = vmatprep.subr.mxu0 0.0
  %613 = vmatpush2.msra.mxu0 0.0
  %614 = vmatprep.subr.mxu0 0.0
  %615 = vmatpush2.msra.mxu0 0.0
  %616 = vmatprep.subr.mxu0 0.0
  %617 = vmatpush2.msra.mxu0 0.0
  %618 = vmatprep.subr.mxu0 0.0
  %619 = vmatpush2.msra.mxu0 0.0
  %620 = vmatprep.subr.mxu0 0.0
  %621 = vmatpush2.msra.mxu0 0.0
  %622 = vmatprep.subr.mxu0 0.0
  %623 = vmatpush2.msra.mxu0 0.0
  %624 = vmatprep.subr.mxu0 0.0
  %625 = vmatpush2.msra.mxu0 0.0
  %626 = vmatprep.subr.mxu0 0.0
  %627 = vmatpush2.msra.mxu0 0.0
  %628 = vmatprep.subr.mxu0 0.0
  %629 = vmatpush2.msra.mxu0 0.0
  %630 = vmatprep.subr.mxu0 0.0
  %631 = vmatpush2.msra.mxu0 0.0
  %632 = vmatprep.subr.mxu0 0.0
  %633 = vmatpush2.msra.mxu0 0.0
  %634 = vmatprep.subr.mxu0 0.0
  %635 = vmatpush2.msra.mxu0 0.0
  %636 = vmatprep.subr.mxu0 0.0
  %637 = vmatpush2.msra.mxu0 0.0
  %638 = vmatprep.subr.mxu0 0.0
  %639 = vmatpush2.msra.mxu0 0.0
  %640 = vmatprep.subr.mxu0 0.0
  %641 = vmatpush2.msra.mxu0 0.0
  %642 = vmatprep.mubr.f32.mxu0 0.0
  %643 = vmatmul.mubr.f32.gmra.mxu0 %v506
  %v644 = vpop.f32.mrf.mxu0
  %v645 = vadd.f32 0.0, %v644
  %v646 = vpop.f32.mrf.mxu0
  %v647 = vadd.f32 0.0, %v646
  %648 = vdwg.mxu0
  %649 = vmatprep.subr.mxu0 %v577
  %650 = vmatpush1.msra.mxu0 %v576
  %651 = vmatprep.subr.mxu0 %v573
  %652 = vmatpush1.msra.mxu0 %v572
  %653 = vmatprep.subr.mxu0 %v569
  %654 = vmatpush1.msra.mxu0 %v568
  %655 = vmatprep.subr.mxu0 %v565
  %656 = vmatpush1.msra.mxu0 %v564
  %657 = vmatprep.subr.mxu0 %v561
  %658 = vmatpush1.msra.mxu0 %v560
  %659 = vmatprep.subr.mxu0 %v557
  %660 = vmatpush1.msra.mxu0 %v556
  %661 = vmatprep.subr.mxu0 %v553
  %662 = vmatpush1.msra.mxu0 %v552
  %663 = vmatprep.subr.mxu0 %v549
  %664 = vmatpush1.msra.mxu0 %v548
  %665 = vmatprep.subr.mxu0 %v545
  %666 = vmatpush1.msra.mxu0 %v544
  %667 = vmatprep.subr.mxu0 %v541
  %668 = vmatpush1.msra.mxu0 %v540
  %669 = vmatprep.subr.mxu0 %v537
  %670 = vmatpush1.msra.mxu0 %v536
  %671 = vmatprep.subr.mxu0 %v533
  %672 = vmatpush1.msra.mxu0 %v532
  %673 = vmatprep.subr.mxu0 %v529
  %674 = vmatpush1.msra.mxu0 %v528
  %675 = vmatprep.subr.mxu0 %v525
  %676 = vmatpush1.msra.mxu0 %v524
  %677 = vmatprep.subr.mxu0 %v521
  %678 = vmatpush1.msra.mxu0 %v520
  %679 = vmatprep.subr.mxu0 %v517
  %680 = vmatpush1.msra.mxu0 %v516
  %681 = vmatprep.subr.mxu0 0.0
  %682 = vmatpush2.msra.mxu0 0.0
  %683 = vmatprep.subr.mxu0 0.0
  %684 = vmatpush2.msra.mxu0 0.0
  %685 = vmatprep.subr.mxu0 0.0
  %686 = vmatpush2.msra.mxu0 0.0
  %687 = vmatprep.subr.mxu0 0.0
  %688 = vmatpush2.msra.mxu0 0.0
  %689 = vmatprep.subr.mxu0 0.0
  %690 = vmatpush2.msra.mxu0 0.0
  %691 = vmatprep.subr.mxu0 0.0
  %692 = vmatpush2.msra.mxu0 0.0
  %693 = vmatprep.subr.mxu0 0.0
  %694 = vmatpush2.msra.mxu0 0.0
  %695 = vmatprep.subr.mxu0 0.0
  %696 = vmatpush2.msra.mxu0 0.0
  %697 = vmatprep.subr.mxu0 0.0
  %698 = vmatpush2.msra.mxu0 0.0
  %699 = vmatprep.subr.mxu0 0.0
  %700 = vmatpush2.msra.mxu0 0.0
  %701 = vmatprep.subr.mxu0 0.0
  %702 = vmatpush2.msra.mxu0 0.0
  %703 = vmatprep.subr.mxu0 0.0
  %704 = vmatpush2.msra.mxu0 0.0
  %705 = vmatprep.subr.mxu0 0.0
  %706 = vmatpush2.msra.mxu0 0.0
  %707 = vmatprep.subr.mxu0 0.0
  %708 = vmatpush2.msra.mxu0 0.0
  %709 = vmatprep.subr.mxu0 0.0
  %710 = vmatpush2.msra.mxu0 0.0
  %711 = vmatprep.subr.mxu0 0.0
  %712 = vmatpush2.msra.mxu0 0.0
  %713 = vmatprep.mubr.f32.mxu0 0.0
  %714 = vmatmul.mubr.f32.gmra.mxu0 %v506
  %v715 = vpop.f32.mrf.mxu0
  %v716 = vadd.f32 0.0, %v715
  %v717 = vpop.f32.mrf.mxu0
  %v718 = vadd.f32 0.0, %v717
  %719 = vdwg.mxu0
  %v720 = vadd.f32 %v510, %v645
  %v721 = vadd.f32 %v511, %v647
  %v722 = vadd.f32 %v512, %v716
  %v723 = vadd.f32 %v513, %v718
  %v724 = vxor.u32 %v720, 2147483648
  %v725 = vxor.u32 %v721, 2147483648
  %v726 = vxor.u32 %v722, 2147483648
  %v727 = vmul.f32 %v724, 1.442695
  %v728 = vpow.pop %v727
  %v729 = vmul.f32 %v725, 1.442695
  %v730 = vpow.pop %v729
  %v731 = vmul.f32 %v726, 1.442695
  %v732 = vpow.pop %v731
  %v733 = vadd.f32 %v728, 1.0
  %v734 = vadd.f32 %v730, 1.0
  %v735 = vadd.f32 %v732, 1.0
  %v736 = vrcp.pop %v733
  %v737 = vmul.f32 1.0, %v736
  %v738 = vrcp.pop %v734
  %v739 = vmul.f32 1.0, %v738
  %v740 = vrcp.pop %v735
  %v741 = vmul.f32 1.0, %v740
  %v742 = vtanh.pop %v723
  %v743 = vmul.f32 %v739, %v504
  %v744 = vmul.f32 %v737, %v742
  %v745 = vadd.f32 %v743, %v744
  %v746 = vtanh.pop %v745
  %v747 = vmul.f32 %v741, %v746
  %748 = vst.msk [vmem:[#allocation2 + $0x10] sm:$0xff] %vm264, %v747
  %749 = vst.msk [vmem:[#allocation2 + $0x28] sm:$0xff] %vm266, %v747
  %s750 = scalar_lea.vmem %s0, 96
  %v751 = vld [vmem:[%s750] sm:$0xff]
  %v752 = vld [vmem:[%s750 + $0x8] sm:$0xff]
  %v753 = vld [vmem:[%s750 + $0x10] sm:$0xff]
  %v754 = vld [vmem:[%s750 + $0x18] sm:$0xff]
  %v755 = vld [vmem:[%s1] sm:$0xff]
  %v756 = vld [vmem:[%s1 + $0x8] sm:$0xff]
  %v757 = vld [vmem:[%s1 + $0x10] sm:$0xff]
  %v758 = vld [vmem:[%s1 + $0x18] sm:$0xff]
  %v759 = vld [vmem:[%s1 + $0x20] sm:$0xff]
  %v760 = vld [vmem:[%s1 + $0x28] sm:$0xff]
  %v761 = vld [vmem:[%s1 + $0x30] sm:$0xff]
  %v762 = vld [vmem:[%s1 + $0x38] sm:$0xff]
  %v763 = vld [vmem:[%s1 + $0x40] sm:$0xff]
  %v764 = vld [vmem:[%s1 + $0x48] sm:$0xff]
  %v765 = vld [vmem:[%s1 + $0x50] sm:$0xff]
  %v766 = vld [vmem:[%s1 + $0x58] sm:$0xff]
  %v767 = vld [vmem:[%s1 + $0x60] sm:$0xff]
  %v768 = vld [vmem:[%s1 + $0x68] sm:$0xff]
  %v769 = vld [vmem:[%s1 + $0x70] sm:$0xff]
  %v770 = vld [vmem:[%s1 + $0x78] sm:$0xff]
  %v771 = vld [vmem:[%s1 + $0x80] sm:$0xff]
  %v772 = vld [vmem:[%s1 + $0x88] sm:$0xff]
  %v773 = vld [vmem:[%s1 + $0x90] sm:$0xff]
  %v774 = vld [vmem:[%s1 + $0x98] sm:$0xff]
  %v775 = vld [vmem:[%s1 + $0xa0] sm:$0xff]
  %v776 = vld [vmem:[%s1 + $0xa8] sm:$0xff]
  %v777 = vld [vmem:[%s1 + $0xb0] sm:$0xff]
  %v778 = vld [vmem:[%s1 + $0xb8] sm:$0xff]
  %v779 = vld [vmem:[%s1 + $0xc0] sm:$0xff]
  %v780 = vld [vmem:[%s1 + $0xc8] sm:$0xff]
  %v781 = vld [vmem:[%s1 + $0xd0] sm:$0xff]
  %v782 = vld [vmem:[%s1 + $0xd8] sm:$0xff]
  %v783 = vld [vmem:[%s1 + $0xe0] sm:$0xff]
  %v784 = vld [vmem:[%s1 + $0xe8] sm:$0xff]
  %v785 = vld [vmem:[%s1 + $0xf0] sm:$0xff]
  %v786 = vld [vmem:[%s1 + $0xf8] sm:$0xff]
  %v787 = vld [vmem:[%s1 + $0x100] sm:$0xff]
  %v788 = vld [vmem:[%s1 + $0x108] sm:$0xff]
  %v789 = vld [vmem:[%s1 + $0x110] sm:$0xff]
  %v790 = vld [vmem:[%s1 + $0x118] sm:$0xff]
  %v791 = vld [vmem:[%s1 + $0x120] sm:$0xff]
  %v792 = vld [vmem:[%s1 + $0x128] sm:$0xff]
  %v793 = vld [vmem:[%s1 + $0x130] sm:$0xff]
  %v794 = vld [vmem:[%s1 + $0x138] sm:$0xff]
  %v795 = vld [vmem:[%s1 + $0x140] sm:$0xff]
  %v796 = vld [vmem:[%s1 + $0x148] sm:$0xff]
  %v797 = vld [vmem:[%s1 + $0x150] sm:$0xff]
  %v798 = vld [vmem:[%s1 + $0x158] sm:$0xff]
  %v799 = vld [vmem:[%s1 + $0x160] sm:$0xff]
  %v800 = vld [vmem:[%s1 + $0x168] sm:$0xff]
  %v801 = vld [vmem:[%s1 + $0x170] sm:$0xff]
  %v802 = vld [vmem:[%s1 + $0x178] sm:$0xff]
  %v803 = vld [vmem:[%s1 + $0x180] sm:$0xff]
  %v804 = vld [vmem:[%s1 + $0x188] sm:$0xff]
  %v805 = vld [vmem:[%s1 + $0x190] sm:$0xff]
  %v806 = vld [vmem:[%s1 + $0x198] sm:$0xff]
  %v807 = vld [vmem:[%s1 + $0x1a0] sm:$0xff]
  %v808 = vld [vmem:[%s1 + $0x1a8] sm:$0xff]
  %v809 = vld [vmem:[%s1 + $0x1b0] sm:$0xff]
  %v810 = vld [vmem:[%s1 + $0x1b8] sm:$0xff]
  %v811 = vld [vmem:[%s1 + $0x1c0] sm:$0xff]
  %v812 = vld [vmem:[%s1 + $0x1c8] sm:$0xff]
  %v813 = vld [vmem:[%s1 + $0x1d0] sm:$0xff]
  %v814 = vld [vmem:[%s1 + $0x1d8] sm:$0xff]
  %v815 = vld [vmem:[%s1 + $0x1e0] sm:$0xff]
  %v816 = vld [vmem:[%s1 + $0x1e8] sm:$0xff]
  %v817 = vld [vmem:[%s1 + $0x1f0] sm:$0xff]
  %v818 = vld [vmem:[%s1 + $0x1f8] sm:$0xff]
  %819 = vmatprep.subr.mxu0 %v816
  %820 = vmatpush1.msra.mxu0 %v815
  %821 = vmatprep.subr.mxu0 %v812
  %822 = vmatpush1.msra.mxu0 %v811
  %823 = vmatprep.subr.mxu0 %v808
  %824 = vmatpush1.msra.mxu0 %v807
  %825 = vmatprep.subr.mxu0 %v804
  %826 = vmatpush1.msra.mxu0 %v803
  %827 = vmatprep.subr.mxu0 %v800
  %828 = vmatpush1.msra.mxu0 %v799
  %829 = vmatprep.subr.mxu0 %v796
  %830 = vmatpush1.msra.mxu0 %v795
  %831 = vmatprep.subr.mxu0 %v792
  %832 = vmatpush1.msra.mxu0 %v791
  %833 = vmatprep.subr.mxu0 %v788
  %834 = vmatpush1.msra.mxu0 %v787
  %835 = vmatprep.subr.mxu0 %v784
  %836 = vmatpush1.msra.mxu0 %v783
  %837 = vmatprep.subr.mxu0 %v780
  %838 = vmatpush1.msra.mxu0 %v779
  %839 = vmatprep.subr.mxu0 %v776
  %840 = vmatpush1.msra.mxu0 %v775
  %841 = vmatprep.subr.mxu0 %v772
  %842 = vmatpush1.msra.mxu0 %v771
  %843 = vmatprep.subr.mxu0 %v768
  %844 = vmatpush1.msra.mxu0 %v767
  %845 = vmatprep.subr.mxu0 %v764
  %846 = vmatpush1.msra.mxu0 %v763
  %847 = vmatprep.subr.mxu0 %v760
  %848 = vmatpush1.msra.mxu0 %v759
  %849 = vmatprep.subr.mxu0 %v756
  %850 = vmatpush1.msra.mxu0 %v755
  %851 = vmatprep.subr.mxu0 0.0
  %852 = vmatpush2.msra.mxu0 0.0
  %853 = vmatprep.subr.mxu0 0.0
  %854 = vmatpush2.msra.mxu0 0.0
  %855 = vmatprep.subr.mxu0 0.0
  %856 = vmatpush2.msra.mxu0 0.0
  %857 = vmatprep.subr.mxu0 0.0
  %858 = vmatpush2.msra.mxu0 0.0
  %859 = vmatprep.subr.mxu0 0.0
  %860 = vmatpush2.msra.mxu0 0.0
  %861 = vmatprep.subr.mxu0 0.0
  %862 = vmatpush2.msra.mxu0 0.0
  %863 = vmatprep.subr.mxu0 0.0
  %864 = vmatpush2.msra.mxu0 0.0
  %865 = vmatprep.subr.mxu0 0.0
  %866 = vmatpush2.msra.mxu0 0.0
  %867 = vmatprep.subr.mxu0 0.0
  %868 = vmatpush2.msra.mxu0 0.0
  %869 = vmatprep.subr.mxu0 0.0
  %870 = vmatpush2.msra.mxu0 0.0
  %871 = vmatprep.subr.mxu0 0.0
  %872 = vmatpush2.msra.mxu0 0.0
  %873 = vmatprep.subr.mxu0 0.0
  %874 = vmatpush2.msra.mxu0 0.0
  %875 = vmatprep.subr.mxu0 0.0
  %876 = vmatpush2.msra.mxu0 0.0
  %877 = vmatprep.subr.mxu0 0.0
  %878 = vmatpush2.msra.mxu0 0.0
  %879 = vmatprep.subr.mxu0 0.0
  %880 = vmatpush2.msra.mxu0 0.0
  %881 = vmatprep.subr.mxu0 0.0
  %882 = vmatpush2.msra.mxu0 0.0
  %883 = vmatprep.mubr.f32.mxu0 0.0
  %884 = vmatmul.mubr.f32.gmra.mxu0 %v747
  %v885 = vpop.f32.mrf.mxu0
  %v886 = vadd.f32 0.0, %v885
  %v887 = vpop.f32.mrf.mxu0
  %v888 = vadd.f32 0.0, %v887
  %889 = vdwg.mxu0
  %890 = vmatprep.subr.mxu0 %v818
  %891 = vmatpush1.msra.mxu0 %v817
  %892 = vmatprep.subr.mxu0 %v814
  %893 = vmatpush1.msra.mxu0 %v813
  %894 = vmatprep.subr.mxu0 %v810
  %895 = vmatpush1.msra.mxu0 %v809
  %896 = vmatprep.subr.mxu0 %v806
  %897 = vmatpush1.msra.mxu0 %v805
  %898 = vmatprep.subr.mxu0 %v802
  %899 = vmatpush1.msra.mxu0 %v801
  %900 = vmatprep.subr.mxu0 %v798
  %901 = vmatpush1.msra.mxu0 %v797
  %902 = vmatprep.subr.mxu0 %v794
  %903 = vmatpush1.msra.mxu0 %v793
  %904 = vmatprep.subr.mxu0 %v790
  %905 = vmatpush1.msra.mxu0 %v789
  %906 = vmatprep.subr.mxu0 %v786
  %907 = vmatpush1.msra.mxu0 %v785
  %908 = vmatprep.subr.mxu0 %v782
  %909 = vmatpush1.msra.mxu0 %v781
  %910 = vmatprep.subr.mxu0 %v778
  %911 = vmatpush1.msra.mxu0 %v777
  %912 = vmatprep.subr.mxu0 %v774
  %913 = vmatpush1.msra.mxu0 %v773
  %914 = vmatprep.subr.mxu0 %v770
  %915 = vmatpush1.msra.mxu0 %v769
  %916 = vmatprep.subr.mxu0 %v766
  %917 = vmatpush1.msra.mxu0 %v765
  %918 = vmatprep.subr.mxu0 %v762
  %919 = vmatpush1.msra.mxu0 %v761
  %920 = vmatprep.subr.mxu0 %v758
  %921 = vmatpush1.msra.mxu0 %v757
  %922 = vmatprep.subr.mxu0 0.0
  %923 = vmatpush2.msra.mxu0 0.0
  %924 = vmatprep.subr.mxu0 0.0
  %925 = vmatpush2.msra.mxu0 0.0
  %926 = vmatprep.subr.mxu0 0.0
  %927 = vmatpush2.msra.mxu0 0.0
  %928 = vmatprep.subr.mxu0 0.0
  %929 = vmatpush2.msra.mxu0 0.0
  %930 = vmatprep.subr.mxu0 0.0
  %931 = vmatpush2.msra.mxu0 0.0
  %932 = vmatprep.subr.mxu0 0.0
  %933 = vmatpush2.msra.mxu0 0.0
  %934 = vmatprep.subr.mxu0 0.0
  %935 = vmatpush2.msra.mxu0 0.0
  %936 = vmatprep.subr.mxu0 0.0
  %937 = vmatpush2.msra.mxu0 0.0
  %938 = vmatprep.subr.mxu0 0.0
  %939 = vmatpush2.msra.mxu0 0.0
  %940 = vmatprep.subr.mxu0 0.0
  %941 = vmatpush2.msra.mxu0 0.0
  %942 = vmatprep.subr.mxu0 0.0
  %943 = vmatpush2.msra.mxu0 0.0
  %944 = vmatprep.subr.mxu0 0.0
  %945 = vmatpush2.msra.mxu0 0.0
  %946 = vmatprep.subr.mxu0 0.0
  %947 = vmatpush2.msra.mxu0 0.0
  %948 = vmatprep.subr.mxu0 0.0
  %949 = vmatpush2.msra.mxu0 0.0
  %950 = vmatprep.subr.mxu0 0.0
  %951 = vmatpush2.msra.mxu0 0.0
  %952 = vmatprep.subr.mxu0 0.0
  %953 = vmatpush2.msra.mxu0 0.0
  %954 = vmatprep.mubr.f32.mxu0 0.0
  %955 = vmatmul.mubr.f32.gmra.mxu0 %v747
  %v956 = vpop.f32.mrf.mxu0
  %v957 = vadd.f32 0.0, %v956
  %v958 = vpop.f32.mrf.mxu0
  %v959 = vadd.f32 0.0, %v958
  %960 = vdwg.mxu0
  %v961 = vadd.f32 %v751, %v886
  %v962 = vadd.f32 %v752, %v888
  %v963 = vadd.f32 %v753, %v957
  %v964 = vadd.f32 %v754, %v959
  %v965 = vxor.u32 %v961, 2147483648
  %v966 = vxor.u32 %v962, 2147483648
  %v967 = vxor.u32 %v963, 2147483648
  %v968 = vmul.f32 %v965, 1.442695
  %v969 = vpow.pop %v968
  %v970 = vmul.f32 %v966, 1.442695
  %v971 = vpow.pop %v970
  %v972 = vmul.f32 %v967, 1.442695
  %v973 = vpow.pop %v972
  %v974 = vadd.f32 %v969, 1.0
  %v975 = vadd.f32 %v971, 1.0
  %v976 = vadd.f32 %v973, 1.0
  %v977 = vrcp.pop %v974
  %v978 = vmul.f32 1.0, %v977
  %v979 = vrcp.pop %v975
  %v980 = vmul.f32 1.0, %v979
  %v981 = vrcp.pop %v976
  %v982 = vmul.f32 1.0, %v981
  %v983 = vtanh.pop %v964
  %v984 = vmul.f32 %v980, %v745
  %v985 = vmul.f32 %v978, %v983
  %v986 = vadd.f32 %v984, %v985
  %v987 = vtanh.pop %v986
  %v988 = vmul.f32 %v982, %v987
  %989 = vst.msk [vmem:[#allocation2 + $0x18] sm:$0xff] %vm264, %v988
  %990 = vst.msk [vmem:[#allocation2 + $0x20] sm:$0xff] %vm266, %v988
  %s991 = scalar_lea.vmem %s0, 128
  %v992 = vld [vmem:[%s991] sm:$0xff]
  %v993 = vld [vmem:[%s991 + $0x8] sm:$0xff]
  %v994 = vld [vmem:[%s991 + $0x10] sm:$0xff]
  %v995 = vld [vmem:[%s991 + $0x18] sm:$0xff]
  %v996 = vld [vmem:[%s1] sm:$0xff]
  %v997 = vld [vmem:[%s1 + $0x8] sm:$0xff]
  %v998 = vld [vmem:[%s1 + $0x10] sm:$0xff]
  %v999 = vld [vmem:[%s1 + $0x18] sm:$0xff]
  %v1000 = vld [vmem:[%s1 + $0x20] sm:$0xff]
  %v1001 = vld [vmem:[%s1 + $0x28] sm:$0xff]
  %v1002 = vld [vmem:[%s1 + $0x30] sm:$0xff]
  %v1003 = vld [vmem:[%s1 + $0x38] sm:$0xff]
  %v1004 = vld [vmem:[%s1 + $0x40] sm:$0xff]
  %v1005 = vld [vmem:[%s1 + $0x48] sm:$0xff]
  %v1006 = vld [vmem:[%s1 + $0x50] sm:$0xff]
  %v1007 = vld [vmem:[%s1 + $0x58] sm:$0xff]
  %v1008 = vld [vmem:[%s1 + $0x60] sm:$0xff]
  %v1009 = vld [vmem:[%s1 + $0x68] sm:$0xff]
  %v1010 = vld [vmem:[%s1 + $0x70] sm:$0xff]
  %v1011 = vld [vmem:[%s1 + $0x78] sm:$0xff]
  %v1012 = vld [vmem:[%s1 + $0x80] sm:$0xff]
  %v1013 = vld [vmem:[%s1 + $0x88] sm:$0xff]
  %v1014 = vld [vmem:[%s1 + $0x90] sm:$0xff]
  %v1015 = vld [vmem:[%s1 + $0x98] sm:$0xff]
  %v1016 = vld [vmem:[%s1 + $0xa0] sm:$0xff]
  %v1017 = vld [vmem:[%s1 + $0xa8] sm:$0xff]
  %v1018 = vld [vmem:[%s1 + $0xb0] sm:$0xff]
  %v1019 = vld [vmem:[%s1 + $0xb8] sm:$0xff]
  %v1020 = vld [vmem:[%s1 + $0xc0] sm:$0xff]
  %v1021 = vld [vmem:[%s1 + $0xc8] sm:$0xff]
  %v1022 = vld [vmem:[%s1 + $0xd0] sm:$0xff]
  %v1023 = vld [vmem:[%s1 + $0xd8] sm:$0xff]
  %v1024 = vld [vmem:[%s1 + $0xe0] sm:$0xff]
  %v1025 = vld [vmem:[%s1 + $0xe8] sm:$0xff]
  %v1026 = vld [vmem:[%s1 + $0xf0] sm:$0xff]
  %v1027 = vld [vmem:[%s1 + $0xf8] sm:$0xff]
  %v1028 = vld [vmem:[%s1 + $0x100] sm:$0xff]
  %v1029 = vld [vmem:[%s1 + $0x108] sm:$0xff]
  %v1030 = vld [vmem:[%s1 + $0x110] sm:$0xff]
  %v1031 = vld [vmem:[%s1 + $0x118] sm:$0xff]
  %v1032 = vld [vmem:[%s1 + $0x120] sm:$0xff]
  %v1033 = vld [vmem:[%s1 + $0x128] sm:$0xff]
  %v1034 = vld [vmem:[%s1 + $0x130] sm:$0xff]
  %v1035 = vld [vmem:[%s1 + $0x138] sm:$0xff]
  %v1036 = vld [vmem:[%s1 + $0x140] sm:$0xff]
  %v1037 = vld [vmem:[%s1 + $0x148] sm:$0xff]
  %v1038 = vld [vmem:[%s1 + $0x150] sm:$0xff]
  %v1039 = vld [vmem:[%s1 + $0x158] sm:$0xff]
  %v1040 = vld [vmem:[%s1 + $0x160] sm:$0xff]
  %v1041 = vld [vmem:[%s1 + $0x168] sm:$0xff]
  %v1042 = vld [vmem:[%s1 + $0x170] sm:$0xff]
  %v1043 = vld [vmem:[%s1 + $0x178] sm:$0xff]
  %v1044 = vld [vmem:[%s1 + $0x180] sm:$0xff]
  %v1045 = vld [vmem:[%s1 + $0x188] sm:$0xff]
  %v1046 = vld [vmem:[%s1 + $0x190] sm:$0xff]
  %v1047 = vld [vmem:[%s1 + $0x198] sm:$0xff]
  %v1048 = vld [vmem:[%s1 + $0x1a0] sm:$0xff]
  %v1049 = vld [vmem:[%s1 + $0x1a8] sm:$0xff]
  %v1050 = vld [vmem:[%s1 + $0x1b0] sm:$0xff]
  %v1051 = vld [vmem:[%s1 + $0x1b8] sm:$0xff]
  %v1052 = vld [vmem:[%s1 + $0x1c0] sm:$0xff]
  %v1053 = vld [vmem:[%s1 + $0x1c8] sm:$0xff]
  %v1054 = vld [vmem:[%s1 + $0x1d0] sm:$0xff]
  %v1055 = vld [vmem:[%s1 + $0x1d8] sm:$0xff]
  %v1056 = vld [vmem:[%s1 + $0x1e0] sm:$0xff]
  %v1057 = vld [vmem:[%s1 + $0x1e8] sm:$0xff]
  %v1058 = vld [vmem:[%s1 + $0x1f0] sm:$0xff]
  %v1059 = vld [vmem:[%s1 + $0x1f8] sm:$0xff]
  %1060 = vmatprep.subr.mxu0 %v1057
  %1061 = vmatpush1.msra.mxu0 %v1056
  %1062 = vmatprep.subr.mxu0 %v1053
  %1063 = vmatpush1.msra.mxu0 %v1052
  %1064 = vmatprep.subr.mxu0 %v1049
  %1065 = vmatpush1.msra.mxu0 %v1048
  %1066 = vmatprep.subr.mxu0 %v1045
  %1067 = vmatpush1.msra.mxu0 %v1044
  %1068 = vmatprep.subr.mxu0 %v1041
  %1069 = vmatpush1.msra.mxu0 %v1040
  %1070 = vmatprep.subr.mxu0 %v1037
  %1071 = vmatpush1.msra.mxu0 %v1036
  %1072 = vmatprep.subr.mxu0 %v1033
  %1073 = vmatpush1.msra.mxu0 %v1032
  %1074 = vmatprep.subr.mxu0 %v1029
  %1075 = vmatpush1.msra.mxu0 %v1028
  %1076 = vmatprep.subr.mxu0 %v1025
  %1077 = vmatpush1.msra.mxu0 %v1024
  %1078 = vmatprep.subr.mxu0 %v1021
  %1079 = vmatpush1.msra.mxu0 %v1020
  %1080 = vmatprep.subr.mxu0 %v1017
  %1081 = vmatpush1.msra.mxu0 %v1016
  %1082 = vmatprep.subr.mxu0 %v1013
  %1083 = vmatpush1.msra.mxu0 %v1012
  %1084 = vmatprep.subr.mxu0 %v1009
  %1085 = vmatpush1.msra.mxu0 %v1008
  %1086 = vmatprep.subr.mxu0 %v1005
  %1087 = vmatpush1.msra.mxu0 %v1004
  %1088 = vmatprep.subr.mxu0 %v1001
  %1089 = vmatpush1.msra.mxu0 %v1000
  %1090 = vmatprep.subr.mxu0 %v997
  %1091 = vmatpush1.msra.mxu0 %v996
  %1092 = vmatprep.subr.mxu0 0.0
  %1093 = vmatpush2.msra.mxu0 0.0
  %1094 = vmatprep.subr.mxu0 0.0
  %1095 = vmatpush2.msra.mxu0 0.0
  %1096 = vmatprep.subr.mxu0 0.0
  %1097 = vmatpush2.msra.mxu0 0.0
  %1098 = vmatprep.subr.mxu0 0.0
  %1099 = vmatpush2.msra.mxu0 0.0
  %1100 = vmatprep.subr.mxu0 0.0
  %1101 = vmatpush2.msra.mxu0 0.0
  %1102 = vmatprep.subr.mxu0 0.0
  %1103 = vmatpush2.msra.mxu0 0.0
  %1104 = vmatprep.subr.mxu0 0.0
  %1105 = vmatpush2.msra.mxu0 0.0
  %1106 = vmatprep.subr.mxu0 0.0
  %1107 = vmatpush2.msra.mxu0 0.0
  %1108 = vmatprep.subr.mxu0 0.0
  %1109 = vmatpush2.msra.mxu0 0.0
  %1110 = vmatprep.subr.mxu0 0.0
  %1111 = vmatpush2.msra.mxu0 0.0
  %1112 = vmatprep.subr.mxu0 0.0
  %1113 = vmatpush2.msra.mxu0 0.0
  %1114 = vmatprep.subr.mxu0 0.0
  %1115 = vmatpush2.msra.mxu0 0.0
  %1116 = vmatprep.subr.mxu0 0.0
  %1117 = vmatpush2.msra.mxu0 0.0
  %1118 = vmatprep.subr.mxu0 0.0
  %1119 = vmatpush2.msra.mxu0 0.0
  %1120 = vmatprep.subr.mxu0 0.0
  %1121 = vmatpush2.msra.mxu0 0.0
  %1122 = vmatprep.subr.mxu0 0.0
  %1123 = vmatpush2.msra.mxu0 0.0
  %1124 = vmatprep.mubr.f32.mxu0 0.0
  %1125 = vmatmul.mubr.f32.gmra.mxu0 %v988
  %v1126 = vpop.f32.mrf.mxu0
  %v1127 = vadd.f32 0.0, %v1126
  %v1128 = vpop.f32.mrf.mxu0
  %v1129 = vadd.f32 0.0, %v1128
  %1130 = vdwg.mxu0
  %1131 = vmatprep.subr.mxu0 %v1059
  %1132 = vmatpush1.msra.mxu0 %v1058
  %1133 = vmatprep.subr.mxu0 %v1055
  %1134 = vmatpush1.msra.mxu0 %v1054
  %1135 = vmatprep.subr.mxu0 %v1051
  %1136 = vmatpush1.msra.mxu0 %v1050
  %1137 = vmatprep.subr.mxu0 %v1047
  %1138 = vmatpush1.msra.mxu0 %v1046
  %1139 = vmatprep.subr.mxu0 %v1043
  %1140 = vmatpush1.msra.mxu0 %v1042
  %1141 = vmatprep.subr.mxu0 %v1039
  %1142 = vmatpush1.msra.mxu0 %v1038
  %1143 = vmatprep.subr.mxu0 %v1035
  %1144 = vmatpush1.msra.mxu0 %v1034
  %1145 = vmatprep.subr.mxu0 %v1031
  %1146 = vmatpush1.msra.mxu0 %v1030
  %1147 = vmatprep.subr.mxu0 %v1027
  %1148 = vmatpush1.msra.mxu0 %v1026
  %1149 = vmatprep.subr.mxu0 %v1023
  %1150 = vmatpush1.msra.mxu0 %v1022
  %1151 = vmatprep.subr.mxu0 %v1019
  %1152 = vmatpush1.msra.mxu0 %v1018
  %1153 = vmatprep.subr.mxu0 %v1015
  %1154 = vmatpush1.msra.mxu0 %v1014
  %1155 = vmatprep.subr.mxu0 %v1011
  %1156 = vmatpush1.msra.mxu0 %v1010
  %1157 = vmatprep.subr.mxu0 %v1007
  %1158 = vmatpush1.msra.mxu0 %v1006
  %1159 = vmatprep.subr.mxu0 %v1003
  %1160 = vmatpush1.msra.mxu0 %v1002
  %1161 = vmatprep.subr.mxu0 %v999
  %1162 = vmatpush1.msra.mxu0 %v998
  %1163 = vmatprep.subr.mxu0 0.0
  %1164 = vmatpush2.msra.mxu0 0.0
  %1165 = vmatprep.subr.mxu0 0.0
  %1166 = vmatpush2.msra.mxu0 0.0
  %1167 = vmatprep.subr.mxu0 0.0
  %1168 = vmatpush2.msra.mxu0 0.0
  %1169 = vmatprep.subr.mxu0 0.0
  %1170 = vmatpush2.msra.mxu0 0.0
  %1171 = vmatprep.subr.mxu0 0.0
  %1172 = vmatpush2.msra.mxu0 0.0
  %1173 = vmatprep.subr.mxu0 0.0
  %1174 = vmatpush2.msra.mxu0 0.0
  %1175 = vmatprep.subr.mxu0 0.0
  %1176 = vmatpush2.msra.mxu0 0.0
  %1177 = vmatprep.subr.mxu0 0.0
  %1178 = vmatpush2.msra.mxu0 0.0
  %1179 = vmatprep.subr.mxu0 0.0
  %1180 = vmatpush2.msra.mxu0 0.0
  %1181 = vmatprep.subr.mxu0 0.0
  %1182 = vmatpush2.msra.mxu0 0.0
  %1183 = vmatprep.subr.mxu0 0.0
  %1184 = vmatpush2.msra.mxu0 0.0
  %1185 = vmatprep.subr.mxu0 0.0
  %1186 = vmatpush2.msra.mxu0 0.0
  %1187 = vmatprep.subr.mxu0 0.0
  %1188 = vmatpush2.msra.mxu0 0.0
  %1189 = vmatprep.subr.mxu0 0.0
  %1190 = vmatpush2.msra.mxu0 0.0
  %1191 = vmatprep.subr.mxu0 0.0
  %1192 = vmatpush2.msra.mxu0 0.0
  %1193 = vmatprep.subr.mxu0 0.0
  %1194 = vmatpush2.msra.mxu0 0.0
  %1195 = vmatprep.mubr.f32.mxu0 0.0
  %1196 = vmatmul.mubr.f32.gmra.mxu0 %v988
  %v1197 = vpop.f32.mrf.mxu0
  %v1198 = vadd.f32 0.0, %v1197
  %v1199 = vpop.f32.mrf.mxu0
  %v1200 = vadd.f32 0.0, %v1199
  %1201 = vdwg.mxu0
  %v1202 = vadd.f32 %v992, %v1127
  %v1203 = vadd.f32 %v993, %v1129
  %v1204 = vadd.f32 %v994, %v1198
  %v1205 = vadd.f32 %v995, %v1200
  %v1206 = vxor.u32 %v1202, 2147483648
  %v1207 = vxor.u32 %v1203, 2147483648
  %v1208 = vxor.u32 %v1204, 2147483648
  %v1209 = vmul.f32 %v1206, 1.442695
  %v1210 = vpow.pop %v1209
  %v1211 = vmul.f32 %v1207, 1.442695
  %v1212 = vpow.pop %v1211
  %v1213 = vmul.f32 %v1208, 1.442695
  %v1214 = vpow.pop %v1213
  %v1215 = vadd.f32 %v1210, 1.0
  %v1216 = vadd.f32 %v1212, 1.0
  %v1217 = vadd.f32 %v1214, 1.0
  %v1218 = vrcp.pop %v1215
  %v1219 = vmul.f32 1.0, %v1218
  %v1220 = vrcp.pop %v1216
  %v1221 = vmul.f32 1.0, %v1220
  %v1222 = vrcp.pop %v1217
  %v1223 = vmul.f32 1.0, %v1222
  %v1224 = vtanh.pop %v1205
  %v1225 = vmul.f32 %v1221, %v986
  %v1226 = vmul.f32 %v1219, %v1224
  %v1227 = vadd.f32 %v1225, %v1226
  %v1228 = vtanh.pop %v1227
  %v1229 = vmul.f32 %v1223, %v1228
  %1230 = vst.msk [vmem:[#allocation2 + $0x20] sm:$0xff] %vm264, %v1229
  %1231 = vst.msk [vmem:[#allocation2 + $0x18] sm:$0xff] %vm266, %v1229
  %s1232 = scalar_lea.vmem %s0, 160
  %v1233 = vld [vmem:[%s1232] sm:$0xff]
  %v1234 = vld [vmem:[%s1232 + $0x8] sm:$0xff]
  %v1235 = vld [vmem:[%s1232 + $0x10] sm:$0xff]
  %v1236 = vld [vmem:[%s1232 + $0x18] sm:$0xff]
  %v1237 = vld [vmem:[%s1] sm:$0xff]
  %v1238 = vld [vmem:[%s1 + $0x8] sm:$0xff]
  %v1239 = vld [vmem:[%s1 + $0x10] sm:$0xff]
  %v1240 = vld [vmem:[%s1 + $0x18] sm:$0xff]
  %v1241 = vld [vmem:[%s1 + $0x20] sm:$0xff]
  %v1242 = vld [vmem:[%s1 + $0x28] sm:$0xff]
  %v1243 = vld [vmem:[%s1 + $0x30] sm:$0xff]
  %v1244 = vld [vmem:[%s1 + $0x38] sm:$0xff]
  %v1245 = vld [vmem:[%s1 + $0x40] sm:$0xff]
  %v1246 = vld [vmem:[%s1 + $0x48] sm:$0xff]
  %v1247 = vld [vmem:[%s1 + $0x50] sm:$0xff]
  %v1248 = vld [vmem:[%s1 + $0x58] sm:$0xff]
  %v1249 = vld [vmem:[%s1 + $0x60] sm:$0xff]
  %v1250 = vld [vmem:[%s1 + $0x68] sm:$0xff]
  %v1251 = vld [vmem:[%s1 + $0x70] sm:$0xff]
  %v1252 = vld [vmem:[%s1 + $0x78] sm:$0xff]
  %v1253 = vld [vmem:[%s1 + $0x80] sm:$0xff]
  %v1254 = vld [vmem:[%s1 + $0x88] sm:$0xff]
  %v1255 = vld [vmem:[%s1 + $0x90] sm:$0xff]
  %v1256 = vld [vmem:[%s1 + $0x98] sm:$0xff]
  %v1257 = vld [vmem:[%s1 + $0xa0] sm:$0xff]
  %v1258 = vld [vmem:[%s1 + $0xa8] sm:$0xff]
  %v1259 = vld [vmem:[%s1 + $0xb0] sm:$0xff]
  %v1260 = vld [vmem:[%s1 + $0xb8] sm:$0xff]
  %v1261 = vld [vmem:[%s1 + $0xc0] sm:$0xff]
  %v1262 = vld [vmem:[%s1 + $0xc8] sm:$0xff]
  %v1263 = vld [vmem:[%s1 + $0xd0] sm:$0xff]
  %v1264 = vld [vmem:[%s1 + $0xd8] sm:$0xff]
  %v1265 = vld [vmem:[%s1 + $0xe0] sm:$0xff]
  %v1266 = vld [vmem:[%s1 + $0xe8] sm:$0xff]
  %v1267 = vld [vmem:[%s1 + $0xf0] sm:$0xff]
  %v1268 = vld [vmem:[%s1 + $0xf8] sm:$0xff]
  %v1269 = vld [vmem:[%s1 + $0x100] sm:$0xff]
  %v1270 = vld [vmem:[%s1 + $0x108] sm:$0xff]
  %v1271 = vld [vmem:[%s1 + $0x110] sm:$0xff]
  %v1272 = vld [vmem:[%s1 + $0x118] sm:$0xff]
  %v1273 = vld [vmem:[%s1 + $0x120] sm:$0xff]
  %v1274 = vld [vmem:[%s1 + $0x128] sm:$0xff]
  %v1275 = vld [vmem:[%s1 + $0x130] sm:$0xff]
  %v1276 = vld [vmem:[%s1 + $0x138] sm:$0xff]
  %v1277 = vld [vmem:[%s1 + $0x140] sm:$0xff]
  %v1278 = vld [vmem:[%s1 + $0x148] sm:$0xff]
  %v1279 = vld [vmem:[%s1 + $0x150] sm:$0xff]
  %v1280 = vld [vmem:[%s1 + $0x158] sm:$0xff]
  %v1281 = vld [vmem:[%s1 + $0x160] sm:$0xff]
  %v1282 = vld [vmem:[%s1 + $0x168] sm:$0xff]
  %v1283 = vld [vmem:[%s1 + $0x170] sm:$0xff]
  %v1284 = vld [vmem:[%s1 + $0x178] sm:$0xff]
  %v1285 = vld [vmem:[%s1 + $0x180] sm:$0xff]
  %v1286 = vld [vmem:[%s1 + $0x188] sm:$0xff]
  %v1287 = vld [vmem:[%s1 + $0x190] sm:$0xff]
  %v1288 = vld [vmem:[%s1 + $0x198] sm:$0xff]
  %v1289 = vld [vmem:[%s1 + $0x1a0] sm:$0xff]
  %v1290 = vld [vmem:[%s1 + $0x1a8] sm:$0xff]
  %v1291 = vld [vmem:[%s1 + $0x1b0] sm:$0xff]
  %v1292 = vld [vmem:[%s1 + $0x1b8] sm:$0xff]
  %v1293 = vld [vmem:[%s1 + $0x1c0] sm:$0xff]
  %v1294 = vld [vmem:[%s1 + $0x1c8] sm:$0xff]
  %v1295 = vld [vmem:[%s1 + $0x1d0] sm:$0xff]
  %v1296 = vld [vmem:[%s1 + $0x1d8] sm:$0xff]
  %v1297 = vld [vmem:[%s1 + $0x1e0] sm:$0xff]
  %v1298 = vld [vmem:[%s1 + $0x1e8] sm:$0xff]
  %v1299 = vld [vmem:[%s1 + $0x1f0] sm:$0xff]
  %v1300 = vld [vmem:[%s1 + $0x1f8] sm:$0xff]
  %1301 = vmatprep.subr.mxu0 %v1298
  %1302 = vmatpush1.msra.mxu0 %v1297
  %1303 = vmatprep.subr.mxu0 %v1294
  %1304 = vmatpush1.msra.mxu0 %v1293
  %1305 = vmatprep.subr.mxu0 %v1290
  %1306 = vmatpush1.msra.mxu0 %v1289
  %1307 = vmatprep.subr.mxu0 %v1286
  %1308 = vmatpush1.msra.mxu0 %v1285
  %1309 = vmatprep.subr.mxu0 %v1282
  %1310 = vmatpush1.msra.mxu0 %v1281
  %1311 = vmatprep.subr.mxu0 %v1278
  %1312 = vmatpush1.msra.mxu0 %v1277
  %1313 = vmatprep.subr.mxu0 %v1274
  %1314 = vmatpush1.msra.mxu0 %v1273
  %1315 = vmatprep.subr.mxu0 %v1270
  %1316 = vmatpush1.msra.mxu0 %v1269
  %1317 = vmatprep.subr.mxu0 %v1266
  %1318 = vmatpush1.msra.mxu0 %v1265
  %1319 = vmatprep.subr.mxu0 %v1262
  %1320 = vmatpush1.msra.mxu0 %v1261
  %1321 = vmatprep.subr.mxu0 %v1258
  %1322 = vmatpush1.msra.mxu0 %v1257
  %1323 = vmatprep.subr.mxu0 %v1254
  %1324 = vmatpush1.msra.mxu0 %v1253
  %1325 = vmatprep.subr.mxu0 %v1250
  %1326 = vmatpush1.msra.mxu0 %v1249
  %1327 = vmatprep.subr.mxu0 %v1246
  %1328 = vmatpush1.msra.mxu0 %v1245
  %1329 = vmatprep.subr.mxu0 %v1242
  %1330 = vmatpush1.msra.mxu0 %v1241
  %1331 = vmatprep.subr.mxu0 %v1238
  %1332 = vmatpush1.msra.mxu0 %v1237
  %1333 = vmatprep.subr.mxu0 0.0
  %1334 = vmatpush2.msra.mxu0 0.0
  %1335 = vmatprep.subr.mxu0 0.0
  %1336 = vmatpush2.msra.mxu0 0.0
  %1337 = vmatprep.subr.mxu0 0.0
  %1338 = vmatpush2.msra.mxu0 0.0
  %1339 = vmatprep.subr.mxu0 0.0
  %1340 = vmatpush2.msra.mxu0 0.0
  %1341 = vmatprep.subr.mxu0 0.0
  %1342 = vmatpush2.msra.mxu0 0.0
  %1343 = vmatprep.subr.mxu0 0.0
  %1344 = vmatpush2.msra.mxu0 0.0
  %1345 = vmatprep.subr.mxu0 0.0
  %1346 = vmatpush2.msra.mxu0 0.0
  %1347 = vmatprep.subr.mxu0 0.0
  %1348 = vmatpush2.msra.mxu0 0.0
  %1349 = vmatprep.subr.mxu0 0.0
  %1350 = vmatpush2.msra.mxu0 0.0
  %1351 = vmatprep.subr.mxu0 0.0
  %1352 = vmatpush2.msra.mxu0 0.0
  %1353 = vmatprep.subr.mxu0 0.0
  %1354 = vmatpush2.msra.mxu0 0.0
  %1355 = vmatprep.subr.mxu0 0.0
  %1356 = vmatpush2.msra.mxu0 0.0
  %1357 = vmatprep.subr.mxu0 0.0
  %1358 = vmatpush2.msra.mxu0 0.0
  %1359 = vmatprep.subr.mxu0 0.0
  %1360 = vmatpush2.msra.mxu0 0.0
  %1361 = vmatprep.subr.mxu0 0.0
  %1362 = vmatpush2.msra.mxu0 0.0
  %1363 = vmatprep.subr.mxu0 0.0
  %1364 = vmatpush2.msra.mxu0 0.0
  %1365 = vmatprep.mubr.f32.mxu0 0.0
  %1366 = vmatmul.mubr.f32.gmra.mxu0 %v1229
  %v1367 = vpop.f32.mrf.mxu0
  %v1368 = vadd.f32 0.0, %v1367
  %v1369 = vpop.f32.mrf.mxu0
  %v1370 = vadd.f32 0.0, %v1369
  %1371 = vdwg.mxu0
  %1372 = vmatprep.subr.mxu0 %v1300
  %1373 = vmatpush1.msra.mxu0 %v1299
  %1374 = vmatprep.subr.mxu0 %v1296
  %1375 = vmatpush1.msra.mxu0 %v1295
  %1376 = vmatprep.subr.mxu0 %v1292
  %1377 = vmatpush1.msra.mxu0 %v1291
  %1378 = vmatprep.subr.mxu0 %v1288
  %1379 = vmatpush1.msra.mxu0 %v1287
  %1380 = vmatprep.subr.mxu0 %v1284
  %1381 = vmatpush1.msra.mxu0 %v1283
  %1382 = vmatprep.subr.mxu0 %v1280
  %1383 = vmatpush1.msra.mxu0 %v1279
  %1384 = vmatprep.subr.mxu0 %v1276
  %1385 = vmatpush1.msra.mxu0 %v1275
  %1386 = vmatprep.subr.mxu0 %v1272
  %1387 = vmatpush1.msra.mxu0 %v1271
  %1388 = vmatprep.subr.mxu0 %v1268
  %1389 = vmatpush1.msra.mxu0 %v1267
  %1390 = vmatprep.subr.mxu0 %v1264
  %1391 = vmatpush1.msra.mxu0 %v1263
  %1392 = vmatprep.subr.mxu0 %v1260
  %1393 = vmatpush1.msra.mxu0 %v1259
  %1394 = vmatprep.subr.mxu0 %v1256
  %1395 = vmatpush1.msra.mxu0 %v1255
  %1396 = vmatprep.subr.mxu0 %v1252
  %1397 = vmatpush1.msra.mxu0 %v1251
  %1398 = vmatprep.subr.mxu0 %v1248
  %1399 = vmatpush1.msra.mxu0 %v1247
  %1400 = vmatprep.subr.mxu0 %v1244
  %1401 = vmatpush1.msra.mxu0 %v1243
  %1402 = vmatprep.subr.mxu0 %v1240
  %1403 = vmatpush1.msra.mxu0 %v1239
  %1404 = vmatprep.subr.mxu0 0.0
  %1405 = vmatpush2.msra.mxu0 0.0
  %1406 = vmatprep.subr.mxu0 0.0
  %1407 = vmatpush2.msra.mxu0 0.0
  %1408 = vmatprep.subr.mxu0 0.0
  %1409 = vmatpush2.msra.mxu0 0.0
  %1410 = vmatprep.subr.mxu0 0.0
  %1411 = vmatpush2.msra.mxu0 0.0
  %1412 = vmatprep.subr.mxu0 0.0
  %1413 = vmatpush2.msra.mxu0 0.0
  %1414 = vmatprep.subr.mxu0 0.0
  %1415 = vmatpush2.msra.mxu0 0.0
  %1416 = vmatprep.subr.mxu0 0.0
  %1417 = vmatpush2.msra.mxu0 0.0
  %1418 = vmatprep.subr.mxu0 0.0
  %1419 = vmatpush2.msra.mxu0 0.0
  %1420 = vmatprep.subr.mxu0 0.0
  %1421 = vmatpush2.msra.mxu0 0.0
  %1422 = vmatprep.subr.mxu0 0.0
  %1423 = vmatpush2.msra.mxu0 0.0
  %1424 = vmatprep.subr.mxu0 0.0
  %1425 = vmatpush2.msra.mxu0 0.0
  %1426 = vmatprep.subr.mxu0 0.0
  %1427 = vmatpush2.msra.mxu0 0.0
  %1428 = vmatprep.subr.mxu0 0.0
  %1429 = vmatpush2.msra.mxu0 0.0
  %1430 = vmatprep.subr.mxu0 0.0
  %1431 = vmatpush2.msra.mxu0 0.0
  %1432 = vmatprep.subr.mxu0 0.0
  %1433 = vmatpush2.msra.mxu0 0.0
  %1434 = vmatprep.subr.mxu0 0.0
  %1435 = vmatpush2.msra.mxu0 0.0
  %1436 = vmatprep.mubr.f32.mxu0 0.0
  %1437 = vmatmul.mubr.f32.gmra.mxu0 %v1229
  %v1438 = vpop.f32.mrf.mxu0
  %v1439 = vadd.f32 0.0, %v1438
  %v1440 = vpop.f32.mrf.mxu0
  %v1441 = vadd.f32 0.0, %v1440
  %1442 = vdwg.mxu0
  %v1443 = vadd.f32 %v1233, %v1368
  %v1444 = vadd.f32 %v1234, %v1370
  %v1445 = vadd.f32 %v1235, %v1439
  %v1446 = vadd.f32 %v1236, %v1441
  %v1447 = vxor.u32 %v1443, 2147483648
  %v1448 = vxor.u32 %v1444, 2147483648
  %v1449 = vxor.u32 %v1445, 2147483648
  %v1450 = vmul.f32 %v1447, 1.442695
  %v1451 = vpow.pop %v1450
  %v1452 = vmul.f32 %v1448, 1.442695
  %v1453 = vpow.pop %v1452
  %v1454 = vmul.f32 %v1449, 1.442695
  %v1455 = vpow.pop %v1454
  %v1456 = vadd.f32 %v1451, 1.0
  %v1457 = vadd.f32 %v1453, 1.0
  %v1458 = vadd.f32 %v1455, 1.0
  %v1459 = vrcp.pop %v1456
  %v1460 = vmul.f32 1.0, %v1459
  %v1461 = vrcp.pop %v1457
  %v1462 = vmul.f32 1.0, %v1461
  %v1463 = vrcp.pop %v1458
  %v1464 = vmul.f32 1.0, %v1463
  %v1465 = vtanh.pop %v1446
  %v1466 = vmul.f32 %v1462, %v1227
  %v1467 = vmul.f32 %v1460, %v1465
  %v1468 = vadd.f32 %v1466, %v1467
  %v1469 = vtanh.pop %v1468
  %v1470 = vmul.f32 %v1464, %v1469
  %1471 = vst.msk [vmem:[#allocation2 + $0x28] sm:$0xff] %vm264, %v1470
  %1472 = vst.msk [vmem:[#allocation2 + $0x10] sm:$0xff] %vm266, %v1470
  %s1473 = scalar_lea.vmem %s0, 192
  %v1474 = vld [vmem:[%s1473] sm:$0xff]
  %v1475 = vld [vmem:[%s1473 + $0x8] sm:$0xff]
  %v1476 = vld [vmem:[%s1473 + $0x10] sm:$0xff]
  %v1477 = vld [vmem:[%s1473 + $0x18] sm:$0xff]
  %v1478 = vld [vmem:[%s1] sm:$0xff]
  %v1479 = vld [vmem:[%s1 + $0x8] sm:$0xff]
  %v1480 = vld [vmem:[%s1 + $0x10] sm:$0xff]
  %v1481 = vld [vmem:[%s1 + $0x18] sm:$0xff]
  %v1482 = vld [vmem:[%s1 + $0x20] sm:$0xff]
  %v1483 = vld [vmem:[%s1 + $0x28] sm:$0xff]
  %v1484 = vld [vmem:[%s1 + $0x30] sm:$0xff]
  %v1485 = vld [vmem:[%s1 + $0x38] sm:$0xff]
  %v1486 = vld [vmem:[%s1 + $0x40] sm:$0xff]
  %v1487 = vld [vmem:[%s1 + $0x48] sm:$0xff]
  %v1488 = vld [vmem:[%s1 + $0x50] sm:$0xff]
  %v1489 = vld [vmem:[%s1 + $0x58] sm:$0xff]
  %v1490 = vld [vmem:[%s1 + $0x60] sm:$0xff]
  %v1491 = vld [vmem:[%s1 + $0x68] sm:$0xff]
  %v1492 = vld [vmem:[%s1 + $0x70] sm:$0xff]
  %v1493 = vld [vmem:[%s1 + $0x78] sm:$0xff]
  %v1494 = vld [vmem:[%s1 + $0x80] sm:$0xff]
  %v1495 = vld [vmem:[%s1 + $0x88] sm:$0xff]
  %v1496 = vld [vmem:[%s1 + $0x90] sm:$0xff]
  %v1497 = vld [vmem:[%s1 + $0x98] sm:$0xff]
  %v1498 = vld [vmem:[%s1 + $0xa0] sm:$0xff]
  %v1499 = vld [vmem:[%s1 + $0xa8] sm:$0xff]
  %v1500 = vld [vmem:[%s1 + $0xb0] sm:$0xff]
  %v1501 = vld [vmem:[%s1 + $0xb8] sm:$0xff]
  %v1502 = vld [vmem:[%s1 + $0xc0] sm:$0xff]
  %v1503 = vld [vmem:[%s1 + $0xc8] sm:$0xff]
  %v1504 = vld [vmem:[%s1 + $0xd0] sm:$0xff]
  %v1505 = vld [vmem:[%s1 + $0xd8] sm:$0xff]
  %v1506 = vld [vmem:[%s1 + $0xe0] sm:$0xff]
  %v1507 = vld [vmem:[%s1 + $0xe8] sm:$0xff]
  %v1508 = vld [vmem:[%s1 + $0xf0] sm:$0xff]
  %v1509 = vld [vmem:[%s1 + $0xf8] sm:$0xff]
  %v1510 = vld [vmem:[%s1 + $0x100] sm:$0xff]
  %v1511 = vld [vmem:[%s1 + $0x108] sm:$0xff]
  %v1512 = vld [vmem:[%s1 + $0x110] sm:$0xff]
  %v1513 = vld [vmem:[%s1 + $0x118] sm:$0xff]
  %v1514 = vld [vmem:[%s1 + $0x120] sm:$0xff]
  %v1515 = vld [vmem:[%s1 + $0x128] sm:$0xff]
  %v1516 = vld [vmem:[%s1 + $0x130] sm:$0xff]
  %v1517 = vld [vmem:[%s1 + $0x138] sm:$0xff]
  %v1518 = vld [vmem:[%s1 + $0x140] sm:$0xff]
  %v1519 = vld [vmem:[%s1 + $0x148] sm:$0xff]
  %v1520 = vld [vmem:[%s1 + $0x150] sm:$0xff]
  %v1521 = vld [vmem:[%s1 + $0x158] sm:$0xff]
  %v1522 = vld [vmem:[%s1 + $0x160] sm:$0xff]
  %v1523 = vld [vmem:[%s1 + $0x168] sm:$0xff]
  %v1524 = vld [vmem:[%s1 + $0x170] sm:$0xff]
  %v1525 = vld [vmem:[%s1 + $0x178] sm:$0xff]
  %v1526 = vld [vmem:[%s1 + $0x180] sm:$0xff]
  %v1527 = vld [vmem:[%s1 + $0x188] sm:$0xff]
  %v1528 = vld [vmem:[%s1 + $0x190] sm:$0xff]
  %v1529 = vld [vmem:[%s1 + $0x198] sm:$0xff]
  %v1530 = vld [vmem:[%s1 + $0x1a0] sm:$0xff]
  %v1531 = vld [vmem:[%s1 + $0x1a8] sm:$0xff]
  %v1532 = vld [vmem:[%s1 + $0x1b0] sm:$0xff]
  %v1533 = vld [vmem:[%s1 + $0x1b8] sm:$0xff]
  %v1534 = vld [vmem:[%s1 + $0x1c0] sm:$0xff]
  %v1535 = vld [vmem:[%s1 + $0x1c8] sm:$0xff]
  %v1536 = vld [vmem:[%s1 + $0x1d0] sm:$0xff]
  %v1537 = vld [vmem:[%s1 + $0x1d8] sm:$0xff]
  %v1538 = vld [vmem:[%s1 + $0x1e0] sm:$0xff]
  %v1539 = vld [vmem:[%s1 + $0x1e8] sm:$0xff]
  %v1540 = vld [vmem:[%s1 + $0x1f0] sm:$0xff]
  %v1541 = vld [vmem:[%s1 + $0x1f8] sm:$0xff]
  %1542 = vmatprep.subr.mxu0 %v1539
  %1543 = vmatpush1.msra.mxu0 %v1538
  %1544 = vmatprep.subr.mxu0 %v1535
  %1545 = vmatpush1.msra.mxu0 %v1534
  %1546 = vmatprep.subr.mxu0 %v1531
  %1547 = vmatpush1.msra.mxu0 %v1530
  %1548 = vmatprep.subr.mxu0 %v1527
  %1549 = vmatpush1.msra.mxu0 %v1526
  %1550 = vmatprep.subr.mxu0 %v1523
  %1551 = vmatpush1.msra.mxu0 %v1522
  %1552 = vmatprep.subr.mxu0 %v1519
  %1553 = vmatpush1.msra.mxu0 %v1518
  %1554 = vmatprep.subr.mxu0 %v1515
  %1555 = vmatpush1.msra.mxu0 %v1514
  %1556 = vmatprep.subr.mxu0 %v1511
  %1557 = vmatpush1.msra.mxu0 %v1510
  %1558 = vmatprep.subr.mxu0 %v1507
  %1559 = vmatpush1.msra.mxu0 %v1506
  %1560 = vmatprep.subr.mxu0 %v1503
  %1561 = vmatpush1.msra.mxu0 %v1502
  %1562 = vmatprep.subr.mxu0 %v1499
  %1563 = vmatpush1.msra.mxu0 %v1498
  %1564 = vmatprep.subr.mxu0 %v1495
  %1565 = vmatpush1.msra.mxu0 %v1494
  %1566 = vmatprep.subr.mxu0 %v1491
  %1567 = vmatpush1.msra.mxu0 %v1490
  %1568 = vmatprep.subr.mxu0 %v1487
  %1569 = vmatpush1.msra.mxu0 %v1486
  %1570 = vmatprep.subr.mxu0 %v1483
  %1571 = vmatpush1.msra.mxu0 %v1482
  %1572 = vmatprep.subr.mxu0 %v1479
  %1573 = vmatpush1.msra.mxu0 %v1478
  %1574 = vmatprep.subr.mxu0 0.0
  %1575 = vmatpush2.msra.mxu0 0.0
  %1576 = vmatprep.subr.mxu0 0.0
  %1577 = vmatpush2.msra.mxu0 0.0
  %1578 = vmatprep.subr.mxu0 0.0
  %1579 = vmatpush2.msra.mxu0 0.0
  %1580 = vmatprep.subr.mxu0 0.0
  %1581 = vmatpush2.msra.mxu0 0.0
  %1582 = vmatprep.subr.mxu0 0.0
  %1583 = vmatpush2.msra.mxu0 0.0
  %1584 = vmatprep.subr.mxu0 0.0
  %1585 = vmatpush2.msra.mxu0 0.0
  %1586 = vmatprep.subr.mxu0 0.0
  %1587 = vmatpush2.msra.mxu0 0.0
  %1588 = vmatprep.subr.mxu0 0.0
  %1589 = vmatpush2.msra.mxu0 0.0
  %1590 = vmatprep.subr.mxu0 0.0
  %1591 = vmatpush2.msra.mxu0 0.0
  %1592 = vmatprep.subr.mxu0 0.0
  %1593 = vmatpush2.msra.mxu0 0.0
  %1594 = vmatprep.subr.mxu0 0.0
  %1595 = vmatpush2.msra.mxu0 0.0
  %1596 = vmatprep.subr.mxu0 0.0
  %1597 = vmatpush2.msra.mxu0 0.0
  %1598 = vmatprep.subr.mxu0 0.0
  %1599 = vmatpush2.msra.mxu0 0.0
  %1600 = vmatprep.subr.mxu0 0.0
  %1601 = vmatpush2.msra.mxu0 0.0
  %1602 = vmatprep.subr.mxu0 0.0
  %1603 = vmatpush2.msra.mxu0 0.0
  %1604 = vmatprep.subr.mxu0 0.0
  %1605 = vmatpush2.msra.mxu0 0.0
  %1606 = vmatprep.mubr.f32.mxu0 0.0
  %1607 = vmatmul.mubr.f32.gmra.mxu0 %v1470
  %v1608 = vpop.f32.mrf.mxu0
  %v1609 = vadd.f32 0.0, %v1608
  %v1610 = vpop.f32.mrf.mxu0
  %v1611 = vadd.f32 0.0, %v1610
  %1612 = vdwg.mxu0
  %1613 = vmatprep.subr.mxu0 %v1541
  %1614 = vmatpush1.msra.mxu0 %v1540
  %1615 = vmatprep.subr.mxu0 %v1537
  %1616 = vmatpush1.msra.mxu0 %v1536
  %1617 = vmatprep.subr.mxu0 %v1533
  %1618 = vmatpush1.msra.mxu0 %v1532
  %1619 = vmatprep.subr.mxu0 %v1529
  %1620 = vmatpush1.msra.mxu0 %v1528
  %1621 = vmatprep.subr.mxu0 %v1525
  %1622 = vmatpush1.msra.mxu0 %v1524
  %1623 = vmatprep.subr.mxu0 %v1521
  %1624 = vmatpush1.msra.mxu0 %v1520
  %1625 = vmatprep.subr.mxu0 %v1517
  %1626 = vmatpush1.msra.mxu0 %v1516
  %1627 = vmatprep.subr.mxu0 %v1513
  %1628 = vmatpush1.msra.mxu0 %v1512
  %1629 = vmatprep.subr.mxu0 %v1509
  %1630 = vmatpush1.msra.mxu0 %v1508
  %1631 = vmatprep.subr.mxu0 %v1505
  %1632 = vmatpush1.msra.mxu0 %v1504
  %1633 = vmatprep.subr.mxu0 %v1501
  %1634 = vmatpush1.msra.mxu0 %v1500
  %1635 = vmatprep.subr.mxu0 %v1497
  %1636 = vmatpush1.msra.mxu0 %v1496
  %1637 = vmatprep.subr.mxu0 %v1493
  %1638 = vmatpush1.msra.mxu0 %v1492
  %1639 = vmatprep.subr.mxu0 %v1489
  %1640 = vmatpush1.msra.mxu0 %v1488
  %1641 = vmatprep.subr.mxu0 %v1485
  %1642 = vmatpush1.msra.mxu0 %v1484
  %1643 = vmatprep.subr.mxu0 %v1481
  %1644 = vmatpush1.msra.mxu0 %v1480
  %1645 = vmatprep.subr.mxu0 0.0
  %1646 = vmatpush2.msra.mxu0 0.0
  %1647 = vmatprep.subr.mxu0 0.0
  %1648 = vmatpush2.msra.mxu0 0.0
  %1649 = vmatprep.subr.mxu0 0.0
  %1650 = vmatpush2.msra.mxu0 0.0
  %1651 = vmatprep.subr.mxu0 0.0
  %1652 = vmatpush2.msra.mxu0 0.0
  %1653 = vmatprep.subr.mxu0 0.0
  %1654 = vmatpush2.msra.mxu0 0.0
  %1655 = vmatprep.subr.mxu0 0.0
  %1656 = vmatpush2.msra.mxu0 0.0
  %1657 = vmatprep.subr.mxu0 0.0
  %1658 = vmatpush2.msra.mxu0 0.0
  %1659 = vmatprep.subr.mxu0 0.0
  %1660 = vmatpush2.msra.mxu0 0.0
  %1661 = vmatprep.subr.mxu0 0.0
  %1662 = vmatpush2.msra.mxu0 0.0
  %1663 = vmatprep.subr.mxu0 0.0
  %1664 = vmatpush2.msra.mxu0 0.0
  %1665 = vmatprep.subr.mxu0 0.0
  %1666 = vmatpush2.msra.mxu0 0.0
  %1667 = vmatprep.subr.mxu0 0.0
  %1668 = vmatpush2.msra.mxu0 0.0
  %1669 = vmatprep.subr.mxu0 0.0
  %1670 = vmatpush2.msra.mxu0 0.0
  %1671 = vmatprep.subr.mxu0 0.0
  %1672 = vmatpush2.msra.mxu0 0.0
  %1673 = vmatprep.subr.mxu0 0.0
  %1674 = vmatpush2.msra.mxu0 0.0
  %1675 = vmatprep.subr.mxu0 0.0
  %1676 = vmatpush2.msra.mxu0 0.0
  %1677 = vmatprep.mubr.f32.mxu0 0.0
  %1678 = vmatmul.mubr.f32.gmra.mxu0 %v1470
  %v1679 = vpop.f32.mrf.mxu0
  %v1680 = vadd.f32 0.0, %v1679
  %v1681 = vpop.f32.mrf.mxu0
  %v1682 = vadd.f32 0.0, %v1681
  %1683 = vdwg.mxu0
  %v1684 = vadd.f32 %v1474, %v1609
  %v1685 = vadd.f32 %v1475, %v1611
  %v1686 = vadd.f32 %v1476, %v1680
  %v1687 = vadd.f32 %v1477, %v1682
  %v1688 = vxor.u32 %v1684, 2147483648
  %v1689 = vxor.u32 %v1685, 2147483648
  %v1690 = vxor.u32 %v1686, 2147483648
  %v1691 = vmul.f32 %v1688, 1.442695
  %v1692 = vpow.pop %v1691
  %v1693 = vmul.f32 %v1689, 1.442695
  %v1694 = vpow.pop %v1693
  %v1695 = vmul.f32 %v1690, 1.442695
  %v1696 = vpow.pop %v1695
  %v1697 = vadd.f32 %v1692, 1.0
  %v1698 = vadd.f32 %v1694, 1.0
  %v1699 = vadd.f32 %v1696, 1.0
  %v1700 = vrcp.pop %v1697
  %v1701 = vmul.f32 1.0, %v1700
  %v1702 = vrcp.pop %v1698
  %v1703 = vmul.f32 1.0, %v1702
  %v1704 = vrcp.pop %v1699
  %v1705 = vmul.f32 1.0, %v1704
  %v1706 = vtanh.pop %v1687
  %v1707 = vmul.f32 %v1703, %v1468
  %v1708 = vmul.f32 %v1701, %v1706
  %v1709 = vadd.f32 %v1707, %v1708
  %v1710 = vtanh.pop %v1709
  %v1711 = vmul.f32 %v1705, %v1710
  %1712 = vst.msk [vmem:[#allocation2 + $0x30] sm:$0xff] %vm264, %v1711
  %1713 = vst.msk [vmem:[#allocation2 + $0x8] sm:$0xff] %vm266, %v1711
  %s1714 = scalar_lea.vmem %s0, 224
  %v1715 = vld [vmem:[%s1714] sm:$0xff]
  %v1716 = vld [vmem:[%s1714 + $0x8] sm:$0xff]
  %v1717 = vld [vmem:[%s1714 + $0x10] sm:$0xff]
  %v1718 = vld [vmem:[%s1714 + $0x18] sm:$0xff]
  %v1719 = vld [vmem:[%s1] sm:$0xff]
  %v1720 = vld [vmem:[%s1 + $0x8] sm:$0xff]
  %v1721 = vld [vmem:[%s1 + $0x10] sm:$0xff]
  %v1722 = vld [vmem:[%s1 + $0x18] sm:$0xff]
  %v1723 = vld [vmem:[%s1 + $0x20] sm:$0xff]
  %v1724 = vld [vmem:[%s1 + $0x28] sm:$0xff]
  %v1725 = vld [vmem:[%s1 + $0x30] sm:$0xff]
  %v1726 = vld [vmem:[%s1 + $0x38] sm:$0xff]
  %v1727 = vld [vmem:[%s1 + $0x40] sm:$0xff]
  %v1728 = vld [vmem:[%s1 + $0x48] sm:$0xff]
  %v1729 = vld [vmem:[%s1 + $0x50] sm:$0xff]
  %v1730 = vld [vmem:[%s1 + $0x58] sm:$0xff]
  %v1731 = vld [vmem:[%s1 + $0x60] sm:$0xff]
  %v1732 = vld [vmem:[%s1 + $0x68] sm:$0xff]
  %v1733 = vld [vmem:[%s1 + $0x70] sm:$0xff]
  %v1734 = vld [vmem:[%s1 + $0x78] sm:$0xff]
  %v1735 = vld [vmem:[%s1 + $0x80] sm:$0xff]
  %v1736 = vld [vmem:[%s1 + $0x88] sm:$0xff]
  %v1737 = vld [vmem:[%s1 + $0x90] sm:$0xff]
  %v1738 = vld [vmem:[%s1 + $0x98] sm:$0xff]
  %v1739 = vld [vmem:[%s1 + $0xa0] sm:$0xff]
  %v1740 = vld [vmem:[%s1 + $0xa8] sm:$0xff]
  %v1741 = vld [vmem:[%s1 + $0xb0] sm:$0xff]
  %v1742 = vld [vmem:[%s1 + $0xb8] sm:$0xff]
  %v1743 = vld [vmem:[%s1 + $0xc0] sm:$0xff]
  %v1744 = vld [vmem:[%s1 + $0xc8] sm:$0xff]
  %v1745 = vld [vmem:[%s1 + $0xd0] sm:$0xff]
  %v1746 = vld [vmem:[%s1 + $0xd8] sm:$0xff]
  %v1747 = vld [vmem:[%s1 + $0xe0] sm:$0xff]
  %v1748 = vld [vmem:[%s1 + $0xe8] sm:$0xff]
  %v1749 = vld [vmem:[%s1 + $0xf0] sm:$0xff]
  %v1750 = vld [vmem:[%s1 + $0xf8] sm:$0xff]
  %v1751 = vld [vmem:[%s1 + $0x100] sm:$0xff]
  %v1752 = vld [vmem:[%s1 + $0x108] sm:$0xff]
  %v1753 = vld [vmem:[%s1 + $0x110] sm:$0xff]
  %v1754 = vld [vmem:[%s1 + $0x118] sm:$0xff]
  %v1755 = vld [vmem:[%s1 + $0x120] sm:$0xff]
  %v1756 = vld [vmem:[%s1 + $0x128] sm:$0xff]
  %v1757 = vld [vmem:[%s1 + $0x130] sm:$0xff]
  %v1758 = vld [vmem:[%s1 + $0x138] sm:$0xff]
  %v1759 = vld [vmem:[%s1 + $0x140] sm:$0xff]
  %v1760 = vld [vmem:[%s1 + $0x148] sm:$0xff]
  %v1761 = vld [vmem:[%s1 + $0x150] sm:$0xff]
  %v1762 = vld [vmem:[%s1 + $0x158] sm:$0xff]
  %v1763 = vld [vmem:[%s1 + $0x160] sm:$0xff]
  %v1764 = vld [vmem:[%s1 + $0x168] sm:$0xff]
  %v1765 = vld [vmem:[%s1 + $0x170] sm:$0xff]
  %v1766 = vld [vmem:[%s1 + $0x178] sm:$0xff]
  %v1767 = vld [vmem:[%s1 + $0x180] sm:$0xff]
  %v1768 = vld [vmem:[%s1 + $0x188] sm:$0xff]
  %v1769 = vld [vmem:[%s1 + $0x190] sm:$0xff]
  %v1770 = vld [vmem:[%s1 + $0x198] sm:$0xff]
  %v1771 = vld [vmem:[%s1 + $0x1a0] sm:$0xff]
  %v1772 = vld [vmem:[%s1 + $0x1a8] sm:$0xff]
  %v1773 = vld [vmem:[%s1 + $0x1b0] sm:$0xff]
  %v1774 = vld [vmem:[%s1 + $0x1b8] sm:$0xff]
  %v1775 = vld [vmem:[%s1 + $0x1c0] sm:$0xff]
  %v1776 = vld [vmem:[%s1 + $0x1c8] sm:$0xff]
  %v1777 = vld [vmem:[%s1 + $0x1d0] sm:$0xff]
  %v1778 = vld [vmem:[%s1 + $0x1d8] sm:$0xff]
  %v1779 = vld [vmem:[%s1 + $0x1e0] sm:$0xff]
  %v1780 = vld [vmem:[%s1 + $0x1e8] sm:$0xff]
  %v1781 = vld [vmem:[%s1 + $0x1f0] sm:$0xff]
  %v1782 = vld [vmem:[%s1 + $0x1f8] sm:$0xff]
  %1783 = vmatprep.subr.mxu0 %v1780
  %1784 = vmatpush1.msra.mxu0 %v1779
  %1785 = vmatprep.subr.mxu0 %v1776
  %1786 = vmatpush1.msra.mxu0 %v1775
  %1787 = vmatprep.subr.mxu0 %v1772
  %1788 = vmatpush1.msra.mxu0 %v1771
  %1789 = vmatprep.subr.mxu0 %v1768
  %1790 = vmatpush1.msra.mxu0 %v1767
  %1791 = vmatprep.subr.mxu0 %v1764
  %1792 = vmatpush1.msra.mxu0 %v1763
  %1793 = vmatprep.subr.mxu0 %v1760
  %1794 = vmatpush1.msra.mxu0 %v1759
  %1795 = vmatprep.subr.mxu0 %v1756
  %1796 = vmatpush1.msra.mxu0 %v1755
  %1797 = vmatprep.subr.mxu0 %v1752
  %1798 = vmatpush1.msra.mxu0 %v1751
  %1799 = vmatprep.subr.mxu0 %v1748
  %1800 = vmatpush1.msra.mxu0 %v1747
  %1801 = vmatprep.subr.mxu0 %v1744
  %1802 = vmatpush1.msra.mxu0 %v1743
  %1803 = vmatprep.subr.mxu0 %v1740
  %1804 = vmatpush1.msra.mxu0 %v1739
  %1805 = vmatprep.subr.mxu0 %v1736
  %1806 = vmatpush1.msra.mxu0 %v1735
  %1807 = vmatprep.subr.mxu0 %v1732
  %1808 = vmatpush1.msra.mxu0 %v1731
  %1809 = vmatprep.subr.mxu0 %v1728
  %1810 = vmatpush1.msra.mxu0 %v1727
  %1811 = vmatprep.subr.mxu0 %v1724
  %1812 = vmatpush1.msra.mxu0 %v1723
  %1813 = vmatprep.subr.mxu0 %v1720
  %1814 = vmatpush1.msra.mxu0 %v1719
  %1815 = vmatprep.subr.mxu0 0.0
  %1816 = vmatpush2.msra.mxu0 0.0
  %1817 = vmatprep.subr.mxu0 0.0
  %1818 = vmatpush2.msra.mxu0 0.0
  %1819 = vmatprep.subr.mxu0 0.0
  %1820 = vmatpush2.msra.mxu0 0.0
  %1821 = vmatprep.subr.mxu0 0.0
  %1822 = vmatpush2.msra.mxu0 0.0
  %1823 = vmatprep.subr.mxu0 0.0
  %1824 = vmatpush2.msra.mxu0 0.0
  %1825 = vmatprep.subr.mxu0 0.0
  %1826 = vmatpush2.msra.mxu0 0.0
  %1827 = vmatprep.subr.mxu0 0.0
  %1828 = vmatpush2.msra.mxu0 0.0
  %1829 = vmatprep.subr.mxu0 0.0
  %1830 = vmatpush2.msra.mxu0 0.0
  %1831 = vmatprep.subr.mxu0 0.0
  %1832 = vmatpush2.msra.mxu0 0.0
  %1833 = vmatprep.subr.mxu0 0.0
  %1834 = vmatpush2.msra.mxu0 0.0
  %1835 = vmatprep.subr.mxu0 0.0
  %1836 = vmatpush2.msra.mxu0 0.0
  %1837 = vmatprep.subr.mxu0 0.0
  %1838 = vmatpush2.msra.mxu0 0.0
  %1839 = vmatprep.subr.mxu0 0.0
  %1840 = vmatpush2.msra.mxu0 0.0
  %1841 = vmatprep.subr.mxu0 0.0
  %1842 = vmatpush2.msra.mxu0 0.0
  %1843 = vmatprep.subr.mxu0 0.0
  %1844 = vmatpush2.msra.mxu0 0.0
  %1845 = vmatprep.subr.mxu0 0.0
  %1846 = vmatpush2.msra.mxu0 0.0
  %1847 = vmatprep.mubr.f32.mxu0 0.0
  %1848 = vmatmul.mubr.f32.gmra.mxu0 %v1711
  %v1849 = vpop.f32.mrf.mxu0
  %v1850 = vadd.f32 0.0, %v1849
  %v1851 = vpop.f32.mrf.mxu0
  %v1852 = vadd.f32 0.0, %v1851
  %1853 = vdwg.mxu0
  %1854 = vmatprep.subr.mxu0 %v1782
  %1855 = vmatpush1.msra.mxu0 %v1781
  %1856 = vmatprep.subr.mxu0 %v1778
  %1857 = vmatpush1.msra.mxu0 %v1777
  %1858 = vmatprep.subr.mxu0 %v1774
  %1859 = vmatpush1.msra.mxu0 %v1773
  %1860 = vmatprep.subr.mxu0 %v1770
  %1861 = vmatpush1.msra.mxu0 %v1769
  %1862 = vmatprep.subr.mxu0 %v1766
  %1863 = vmatpush1.msra.mxu0 %v1765
  %1864 = vmatprep.subr.mxu0 %v1762
  %1865 = vmatpush1.msra.mxu0 %v1761
  %1866 = vmatprep.subr.mxu0 %v1758
  %1867 = vmatpush1.msra.mxu0 %v1757
  %1868 = vmatprep.subr.mxu0 %v1754
  %1869 = vmatpush1.msra.mxu0 %v1753
  %1870 = vmatprep.subr.mxu0 %v1750
  %1871 = vmatpush1.msra.mxu0 %v1749
  %1872 = vmatprep.subr.mxu0 %v1746
  %1873 = vmatpush1.msra.mxu0 %v1745
  %1874 = vmatprep.subr.mxu0 %v1742
  %1875 = vmatpush1.msra.mxu0 %v1741
  %1876 = vmatprep.subr.mxu0 %v1738
  %1877 = vmatpush1.msra.mxu0 %v1737
  %1878 = vmatprep.subr.mxu0 %v1734
  %1879 = vmatpush1.msra.mxu0 %v1733
  %1880 = vmatprep.subr.mxu0 %v1730
  %1881 = vmatpush1.msra.mxu0 %v1729
  %1882 = vmatprep.subr.mxu0 %v1726
  %1883 = vmatpush1.msra.mxu0 %v1725
  %1884 = vmatprep.subr.mxu0 %v1722
  %1885 = vmatpush1.msra.mxu0 %v1721
  %1886 = vmatprep.subr.mxu0 0.0
  %1887 = vmatpush2.msra.mxu0 0.0
  %1888 = vmatprep.subr.mxu0 0.0
  %1889 = vmatpush2.msra.mxu0 0.0
  %1890 = vmatprep.subr.mxu0 0.0
  %1891 = vmatpush2.msra.mxu0 0.0
  %1892 = vmatprep.subr.mxu0 0.0
  %1893 = vmatpush2.msra.mxu0 0.0
  %1894 = vmatprep.subr.mxu0 0.0
  %1895 = vmatpush2.msra.mxu0 0.0
  %1896 = vmatprep.subr.mxu0 0.0
  %1897 = vmatpush2.msra.mxu0 0.0
  %1898 = vmatprep.subr.mxu0 0.0
  %1899 = vmatpush2.msra.mxu0 0.0
  %1900 = vmatprep.subr.mxu0 0.0
  %1901 = vmatpush2.msra.mxu0 0.0
  %1902 = vmatprep.subr.mxu0 0.0
  %1903 = vmatpush2.msra.mxu0 0.0
  %1904 = vmatprep.subr.mxu0 0.0
  %1905 = vmatpush2.msra.mxu0 0.0
  %1906 = vmatprep.subr.mxu0 0.0
  %1907 = vmatpush2.msra.mxu0 0.0
  %1908 = vmatprep.subr.mxu0 0.0
  %1909 = vmatpush2.msra.mxu0 0.0
  %1910 = vmatprep.subr.mxu0 0.0
  %1911 = vmatpush2.msra.mxu0 0.0
  %1912 = vmatprep.subr.mxu0 0.0
  %1913 = vmatpush2.msra.mxu0 0.0
  %1914 = vmatprep.subr.mxu0 0.0
  %1915 = vmatpush2.msra.mxu0 0.0
  %1916 = vmatprep.subr.mxu0 0.0
  %1917 = vmatpush2.msra.mxu0 0.0
  %1918 = vmatprep.mubr.f32.mxu0 0.0
  %1919 = vmatmul.mubr.f32.gmra.mxu0 %v1711
  %v1920 = vpop.f32.mrf.mxu0
  %v1921 = vadd.f32 0.0, %v1920
  %v1922 = vpop.f32.mrf.mxu0
  %v1923 = vadd.f32 0.0, %v1922
  %1924 = vdwg.mxu0
  %v1925 = vadd.f32 %v1715, %v1850
  %v1926 = vadd.f32 %v1716, %v1852
  %v1927 = vadd.f32 %v1717, %v1921
  %v1928 = vadd.f32 %v1718, %v1923
  %v1929 = vxor.u32 %v1925, 2147483648
  %v1930 = vxor.u32 %v1926, 2147483648
  %v1931 = vxor.u32 %v1927, 2147483648
  %v1932 = vmul.f32 %v1929, 1.442695
  %v1933 = vpow.pop %v1932
  %v1934 = vmul.f32 %v1930, 1.442695
  %v1935 = vpow.pop %v1934
  %v1936 = vmul.f32 %v1931, 1.442695
  %v1937 = vpow.pop %v1936
  %v1938 = vadd.f32 %v1933, 1.0
  %v1939 = vadd.f32 %v1935, 1.0
  %v1940 = vadd.f32 %v1937, 1.0
  %v1941 = vrcp.pop %v1938
  %v1942 = vmul.f32 1.0, %v1941
  %v1943 = vrcp.pop %v1939
  %v1944 = vmul.f32 1.0, %v1943
  %v1945 = vrcp.pop %v1940
  %v1946 = vmul.f32 1.0, %v1945
  %v1947 = vtanh.pop %v1928
  %v1948 = vmul.f32 %v1944, %v1709
  %v1949 = vmul.f32 %v1942, %v1947
  %v1950 = vadd.f32 %v1948, %v1949
  %v1951 = vtanh.pop %v1950
  %v1952 = vmul.f32 %v1946, %v1951
  %1953 = vst.msk [vmem:[#allocation2 + $0x38] sm:$0xff] %vm264, %v1952
  %1954 = vst.msk [vmem:[#allocation2] sm:$0xff] %vm266, %v1952
  %v1955 = vld [vmem:[#allocation2] sm:$0xff]
  %v1956 = vld [vmem:[#allocation2 + $0x8] sm:$0xff]
  %v1957 = vld [vmem:[#allocation2 + $0x10] sm:$0xff]
  %v1958 = vld [vmem:[#allocation2 + $0x18] sm:$0xff]
  %v1959 = vld [vmem:[#allocation2 + $0x20] sm:$0xff]
  %v1960 = vld [vmem:[#allocation2 + $0x28] sm:$0xff]
  %v1961 = vld [vmem:[#allocation2 + $0x30] sm:$0xff]
  %v1962 = vld [vmem:[#allocation2 + $0x38] sm:$0xff]
  %v1963 = vld [vmem:[%s2] sm:$0xff]
  %v1964 = vld [vmem:[%s2 + $0x8] sm:$0xff]
  %v1965 = vld [vmem:[%s2 + $0x10] sm:$0xff]
  %v1966 = vld [vmem:[%s2 + $0x18] sm:$0xff]
  %v1967 = vld [vmem:[%s2 + $0x20] sm:$0xff]
  %v1968 = vld [vmem:[%s2 + $0x28] sm:$0xff]
  %v1969 = vld [vmem:[%s2 + $0x30] sm:$0xff]
  %v1970 = vld [vmem:[%s2 + $0x38] sm:$0xff]
  %v1971 = vld [vmem:[%s2 + $0x40] sm:$0xff]
  %v1972 = vld [vmem:[%s2 + $0x48] sm:$0xff]
  %v1973 = vld [vmem:[%s2 + $0x50] sm:$0xff]
  %v1974 = vld [vmem:[%s2 + $0x58] sm:$0xff]
  %v1975 = vld [vmem:[%s2 + $0x60] sm:$0xff]
  %v1976 = vld [vmem:[%s2 + $0x68] sm:$0xff]
  %v1977 = vld [vmem:[%s2 + $0x70] sm:$0xff]
  %v1978 = vld [vmem:[%s2 + $0x78] sm:$0xff]
  %v1979 = vld [vmem:[%s2 + $0x80] sm:$0xff]
  %v1980 = vld [vmem:[%s2 + $0x88] sm:$0xff]
  %v1981 = vld [vmem:[%s2 + $0x90] sm:$0xff]
  %v1982 = vld [vmem:[%s2 + $0x98] sm:$0xff]
  %v1983 = vld [vmem:[%s2 + $0xa0] sm:$0xff]
  %v1984 = vld [vmem:[%s2 + $0xa8] sm:$0xff]
  %v1985 = vld [vmem:[%s2 + $0xb0] sm:$0xff]
  %v1986 = vld [vmem:[%s2 + $0xb8] sm:$0xff]
  %v1987 = vld [vmem:[%s2 + $0xc0] sm:$0xff]
  %v1988 = vld [vmem:[%s2 + $0xc8] sm:$0xff]
  %v1989 = vld [vmem:[%s2 + $0xd0] sm:$0xff]
  %v1990 = vld [vmem:[%s2 + $0xd8] sm:$0xff]
  %v1991 = vld [vmem:[%s2 + $0xe0] sm:$0xff]
  %v1992 = vld [vmem:[%s2 + $0xe8] sm:$0xff]
  %v1993 = vld [vmem:[%s2 + $0xf0] sm:$0xff]
  %v1994 = vld [vmem:[%s2 + $0xf8] sm:$0xff]
  %v1995 = vld [vmem:[%s5] sm:$0x3]
  %v1997 = vlaneseq
  %v1998 = vshrl.u32 %v1997, 7
  %v1999 = vsub.s32 0, %v1998
  %v2000 = vrot.slane %v1995, %v1999
  %v2001 = vlaneseq
  %v2002 = vshrl.u32 %v2001, 7
  %v2003 = vsub.s32 1, %v2002
  %v2004 = vrot.slane %v1995, %v2003
  %2007 = vmatprep.subr.mxu0 %v1994
  %2008 = vmatpush1.msra.mxu0 %v1993
  %2009 = vmatprep.subr.mxu0 %v1992
  %2010 = vmatpush1.msra.mxu0 %v1991
  %2011 = vmatprep.subr.mxu0 %v1990
  %2012 = vmatpush1.msra.mxu0 %v1989
  %2013 = vmatprep.subr.mxu0 %v1988
  %2014 = vmatpush1.msra.mxu0 %v1987
  %2015 = vmatprep.subr.mxu0 %v1986
  %2016 = vmatpush1.msra.mxu0 %v1985
  %2017 = vmatprep.subr.mxu0 %v1984
  %2018 = vmatpush1.msra.mxu0 %v1983
  %2019 = vmatprep.subr.mxu0 %v1982
  %2020 = vmatpush1.msra.mxu0 %v1981
  %2021 = vmatprep.subr.mxu0 %v1980
  %2022 = vmatpush1.msra.mxu0 %v1979
  %2023 = vmatprep.subr.mxu0 %v1978
  %2024 = vmatpush1.msra.mxu0 %v1977
  %2025 = vmatprep.subr.mxu0 %v1976
  %2026 = vmatpush1.msra.mxu0 %v1975
  %2027 = vmatprep.subr.mxu0 %v1974
  %2028 = vmatpush1.msra.mxu0 %v1973
  %2029 = vmatprep.subr.mxu0 %v1972
  %2030 = vmatpush1.msra.mxu0 %v1971
  %2031 = vmatprep.subr.mxu0 %v1970
  %2032 = vmatpush1.msra.mxu0 %v1969
  %2033 = vmatprep.subr.mxu0 %v1968
  %2034 = vmatpush1.msra.mxu0 %v1967
  %2035 = vmatprep.subr.mxu0 %v1966
  %2036 = vmatpush1.msra.mxu0 %v1965
  %2037 = vmatprep.subr.mxu0 %v1964
  %2038 = vmatpush1.msra.mxu0 %v1963
  %2039 = vmatprep.subr.mxu0 0.0
  %2040 = vmatpush2.msra.mxu0 0.0
  %2041 = vmatprep.subr.mxu0 0.0
  %2042 = vmatpush2.msra.mxu0 0.0
  %2043 = vmatprep.subr.mxu0 0.0
  %2044 = vmatpush2.msra.mxu0 0.0
  %2045 = vmatprep.subr.mxu0 0.0
  %2046 = vmatpush2.msra.mxu0 0.0
  %2047 = vmatprep.subr.mxu0 0.0
  %2048 = vmatpush2.msra.mxu0 0.0
  %2049 = vmatprep.subr.mxu0 0.0
  %2050 = vmatpush2.msra.mxu0 0.0
  %2051 = vmatprep.subr.mxu0 0.0
  %2052 = vmatpush2.msra.mxu0 0.0
  %2053 = vmatprep.subr.mxu0 0.0
  %2054 = vmatpush2.msra.mxu0 0.0
  %2055 = vmatprep.subr.mxu0 0.0
  %2056 = vmatpush2.msra.mxu0 0.0
  %2057 = vmatprep.subr.mxu0 0.0
  %2058 = vmatpush2.msra.mxu0 0.0
  %2059 = vmatprep.subr.mxu0 0.0
  %2060 = vmatpush2.msra.mxu0 0.0
  %2061 = vmatprep.subr.mxu0 0.0
  %2062 = vmatpush2.msra.mxu0 0.0
  %2063 = vmatprep.subr.mxu0 0.0
  %2064 = vmatpush2.msra.mxu0 0.0
  %2065 = vmatprep.subr.mxu0 0.0
  %2066 = vmatpush2.msra.mxu0 0.0
  %2067 = vmatprep.subr.mxu0 0.0
  %2068 = vmatpush2.msra.mxu0 0.0
  %2069 = vmatprep.subr.mxu0 0.0
  %2070 = vmatpush2.msra.mxu0 0.0
  %2071 = vmatprep.mubr.f32.mxu0 0.0
  %2072 = vmatmul.mubr.f32.gmra.mxu0 %v1955
  %v2073 = vpop.f32.mrf.mxu0
  %v2074 = vadd.f32 %v2000, %v2073
  %v2075 = vpop.f32.mrf.mxu0
  %v2076 = vadd.f32 %v2004, %v2075
  %2077 = vmatprep.mubr.f32.mxu0 0.0
  %2078 = vmatmul.mubr.f32.gmra.mxu0 %v1956
  %v2079 = vpop.f32.mrf.mxu0
  %v2080 = vadd.f32 %v2000, %v2079
  %v2081 = vpop.f32.mrf.mxu0
  %v2082 = vadd.f32 %v2004, %v2081
  %2083 = vmatprep.mubr.f32.mxu0 0.0
  %2084 = vmatmul.mubr.f32.gmra.mxu0 %v1957
  %v2085 = vpop.f32.mrf.mxu0
  %v2086 = vadd.f32 %v2000, %v2085
  %v2087 = vpop.f32.mrf.mxu0
  %v2088 = vadd.f32 %v2004, %v2087
  %2089 = vmatprep.mubr.f32.mxu0 0.0
  %2090 = vmatmul.mubr.f32.gmra.mxu0 %v1958
  %v2091 = vpop.f32.mrf.mxu0
  %v2092 = vadd.f32 %v2000, %v2091
  %v2093 = vpop.f32.mrf.mxu0
  %v2094 = vadd.f32 %v2004, %v2093
  %2095 = vmatprep.mubr.f32.mxu0 0.0
  %2096 = vmatmul.mubr.f32.gmra.mxu0 %v1959
  %v2097 = vpop.f32.mrf.mxu0
  %v2098 = vadd.f32 %v2000, %v2097
  %v2099 = vpop.f32.mrf.mxu0
  %v2100 = vadd.f32 %v2004, %v2099
  %2101 = vmatprep.mubr.f32.mxu0 0.0
  %2102 = vmatmul.mubr.f32.gmra.mxu0 %v1960
  %v2103 = vpop.f32.mrf.mxu0
  %v2104 = vadd.f32 %v2000, %v2103
  %v2105 = vpop.f32.mrf.mxu0
  %v2106 = vadd.f32 %v2004, %v2105
  %2107 = vmatprep.mubr.f32.mxu0 0.0
  %2108 = vmatmul.mubr.f32.gmra.mxu0 %v1961
  %v2109 = vpop.f32.mrf.mxu0
  %v2110 = vadd.f32 %v2000, %v2109
  %v2111 = vpop.f32.mrf.mxu0
  %v2112 = vadd.f32 %v2004, %v2111
  %2113 = vmatprep.mubr.f32.mxu0 0.0
  %2114 = vmatmul.mubr.f32.gmra.mxu0 %v1962
  %v2115 = vpop.f32.mrf.mxu0
  %v2116 = vadd.f32 %v2000, %v2115
  %v2117 = vpop.f32.mrf.mxu0
  %v2118 = vadd.f32 %v2004, %v2117
  %2119 = vdwg.mxu0
  %v2120 = vld [vmem:[%s4] sm:$0xff]
  %v2121 = vld [vmem:[%s4 + $0x8] sm:$0xff]
  %v2122 = vld [vmem:[%s4 + $0x10] sm:$0xff]
  %v2123 = vld [vmem:[%s4 + $0x18] sm:$0xff]
  %v2124 = vld [vmem:[%s4 + $0x20] sm:$0xff]
  %v2125 = vld [vmem:[%s4 + $0x28] sm:$0xff]
  %v2126 = vld [vmem:[%s4 + $0x30] sm:$0xff]
  %v2127 = vld [vmem:[%s4 + $0x38] sm:$0xff]
  %v2128 = vld [vmem:[%s4 + $0x40] sm:$0xff]
  %v2129 = vld [vmem:[%s4 + $0x48] sm:$0xff]
  %v2130 = vld [vmem:[%s4 + $0x50] sm:$0xff]
  %v2131 = vld [vmem:[%s4 + $0x58] sm:$0xff]
  %v2132 = vld [vmem:[%s4 + $0x60] sm:$0xff]
  %v2133 = vld [vmem:[%s4 + $0x68] sm:$0xff]
  %v2134 = vld [vmem:[%s4 + $0x70] sm:$0xff]
  %v2135 = vld [vmem:[%s4 + $0x78] sm:$0xff]
  %v2137 = vsel %vm264, 0.0, 0
  %2139 = vmatprep.subr.mxu0 0.0
  %2140 = vmatpush1.msra.mxu0 0.0
  %2141 = vmatprep.subr.mxu0 0.0
  %2142 = vmatpush1.msra.mxu0 0.0
  %2143 = vmatprep.subr.mxu0 0.0
  %2144 = vmatpush1.msra.mxu0 0.0
  %2145 = vmatprep.subr.mxu0 0.0
  %2146 = vmatpush1.msra.mxu0 0.0
  %2147 = vmatprep.subr.mxu0 0.0
  %2148 = vmatpush1.msra.mxu0 0.0
  %2149 = vmatprep.subr.mxu0 0.0
  %2150 = vmatpush1.msra.mxu0 0.0
  %2151 = vmatprep.subr.mxu0 0.0
  %2152 = vmatpush1.msra.mxu0 0.0
  %2153 = vmatprep.subr.mxu0 0.0
  %2154 = vmatpush1.msra.mxu0 0.0
  %2155 = vmatprep.subr.mxu0 %v2135
  %2156 = vmatpush1.msra.mxu0 %v2134
  %2157 = vmatprep.subr.mxu0 %v2133
  %2158 = vmatpush1.msra.mxu0 %v2132
  %2159 = vmatprep.subr.mxu0 %v2131
  %2160 = vmatpush1.msra.mxu0 %v2130
  %2161 = vmatprep.subr.mxu0 %v2129
  %2162 = vmatpush1.msra.mxu0 %v2128
  %2163 = vmatprep.subr.mxu0 %v2127
  %2164 = vmatpush1.msra.mxu0 %v2126
  %2165 = vmatprep.subr.mxu0 %v2125
  %2166 = vmatpush1.msra.mxu0 %v2124
  %2167 = vmatprep.subr.mxu0 %v2123
  %2168 = vmatpush1.msra.mxu0 %v2122
  %2169 = vmatprep.subr.mxu0 %v2121
  %2170 = vmatpush1.msra.mxu0 %v2120
  %2171 = vmatprep.subr.mxu0 0.0
  %2172 = vmatpush2.msra.mxu0 0.0
  %2173 = vmatprep.subr.mxu0 0.0
  %2174 = vmatpush2.msra.mxu0 0.0
  %2175 = vmatprep.subr.mxu0 0.0
  %2176 = vmatpush2.msra.mxu0 0.0
  %2177 = vmatprep.subr.mxu0 0.0
  %2178 = vmatpush2.msra.mxu0 0.0
  %2179 = vmatprep.subr.mxu0 0.0
  %2180 = vmatpush2.msra.mxu0 0.0
  %2181 = vmatprep.subr.mxu0 0.0
  %2182 = vmatpush2.msra.mxu0 0.0
  %2183 = vmatprep.subr.mxu0 0.0
  %2184 = vmatpush2.msra.mxu0 0.0
  %2185 = vmatprep.subr.mxu0 0.0
  %2186 = vmatpush2.msra.mxu0 0.0
  %2187 = vmatprep.subr.mxu0 0.0
  %2188 = vmatpush2.msra.mxu0 0.0
  %2189 = vmatprep.subr.mxu0 0.0
  %2190 = vmatpush2.msra.mxu0 0.0
  %2191 = vmatprep.subr.mxu0 0.0
  %2192 = vmatpush2.msra.mxu0 0.0
  %2193 = vmatprep.subr.mxu0 0.0
  %2194 = vmatpush2.msra.mxu0 0.0
  %2195 = vmatprep.subr.mxu0 0.0
  %2196 = vmatpush2.msra.mxu0 0.0
  %2197 = vmatprep.subr.mxu0 0.0
  %2198 = vmatpush2.msra.mxu0 0.0
  %2199 = vmatprep.subr.mxu0 0.0
  %2200 = vmatpush2.msra.mxu0 0.0
  %2201 = vmatprep.subr.mxu0 0.0
  %2202 = vmatpush2.msra.mxu0 0.0
  %2203 = vmatprep.mubr.f32.mxu0 0.0
  %2204 = vmatmul.mubr.f32.gmra.mxu0 %v2137
  %v2205 = vpop.f32.mrf.mxu0
  %v2206 = vadd.f32 0.0, %v2205
  %v2207 = vpop.f32.mrf.mxu0
  %v2208 = vadd.f32 0.0, %v2207
  %2209 = vdwg.mxu0
  %v2210 = vadd.f32 %v2074, %v2206
  %v2211 = vadd.f32 %v2076, %v2208
  %v2212 = vxor.u32 %v2210, 2147483648
  %v2213 = vxor.u32 %v2211, 2147483648
  %v2214 = vmul.f32 %v2212, 1.442695
  %v2215 = vpow.pop %v2214
  %v2216 = vmul.f32 %v2213, 1.442695
  %v2217 = vpow.pop %v2216
  %v2218 = vadd.f32 %v2215, 1.0
  %v2219 = vadd.f32 %v2217, 1.0
  %v2220 = vrcp.pop %v2218
  %v2221 = vmul.f32 1.0, %v2220
  %v2222 = vrcp.pop %v2219
  %v2223 = vmul.f32 1.0, %v2222
  %v2224 = vtanh.pop %v2211
  %v2225 = vmul.f32 %v2221, 0.0
  %2227 = vrot.lane.b32.xlu0 %v2224, 64
  %v2228 = vpop.permute.xlu0 %2227
  %v2230 = vmul.f32 %v2221, %v2228
  %2232 = vrot.lane.b32.xlu0 %v2230, 64
  %v2233 = vpop.permute.xlu0 %2232
  %v2235 = vadd.f32 %v2225, %v2233
  %v2236 = vtanh.pop %v2235
  %2238 = vrot.lane.b32.xlu0 %v2236, 64
  %v2239 = vpop.permute.xlu0 %2238
  %v2241 = vmul.f32 %v2223, %v2239
  %v2243 = vsel %vm264, %v2241, 0
  %2245 = vmatprep.subr.mxu0 0.0
  %2246 = vmatpush1.msra.mxu0 0.0
  %2247 = vmatprep.subr.mxu0 0.0
  %2248 = vmatpush1.msra.mxu0 0.0
  %2249 = vmatprep.subr.mxu0 0.0
  %2250 = vmatpush1.msra.mxu0 0.0
  %2251 = vmatprep.subr.mxu0 0.0
  %2252 = vmatpush1.msra.mxu0 0.0
  %2253 = vmatprep.subr.mxu0 0.0
  %2254 = vmatpush1.msra.mxu0 0.0
  %2255 = vmatprep.subr.mxu0 0.0
  %2256 = vmatpush1.msra.mxu0 0.0
  %2257 = vmatprep.subr.mxu0 0.0
  %2258 = vmatpush1.msra.mxu0 0.0
  %2259 = vmatprep.subr.mxu0 0.0
  %2260 = vmatpush1.msra.mxu0 0.0
  %2261 = vmatprep.subr.mxu0 %v2135
  %2262 = vmatpush1.msra.mxu0 %v2134
  %2263 = vmatprep.subr.mxu0 %v2133
  %2264 = vmatpush1.msra.mxu0 %v2132
  %2265 = vmatprep.subr.mxu0 %v2131
  %2266 = vmatpush1.msra.mxu0 %v2130
  %2267 = vmatprep.subr.mxu0 %v2129
  %2268 = vmatpush1.msra.mxu0 %v2128
  %2269 = vmatprep.subr.mxu0 %v2127
  %2270 = vmatpush1.msra.mxu0 %v2126
  %2271 = vmatprep.subr.mxu0 %v2125
  %2272 = vmatpush1.msra.mxu0 %v2124
  %2273 = vmatprep.subr.mxu0 %v2123
  %2274 = vmatpush1.msra.mxu0 %v2122
  %2275 = vmatprep.subr.mxu0 %v2121
  %2276 = vmatpush1.msra.mxu0 %v2120
  %2277 = vmatprep.subr.mxu0 0.0
  %2278 = vmatpush2.msra.mxu0 0.0
  %2279 = vmatprep.subr.mxu0 0.0
  %2280 = vmatpush2.msra.mxu0 0.0
  %2281 = vmatprep.subr.mxu0 0.0
  %2282 = vmatpush2.msra.mxu0 0.0
  %2283 = vmatprep.subr.mxu0 0.0
  %2284 = vmatpush2.msra.mxu0 0.0
  %2285 = vmatprep.subr.mxu0 0.0
  %2286 = vmatpush2.msra.mxu0 0.0
  %2287 = vmatprep.subr.mxu0 0.0
  %2288 = vmatpush2.msra.mxu0 0.0
  %2289 = vmatprep.subr.mxu0 0.0
  %2290 = vmatpush2.msra.mxu0 0.0
  %2291 = vmatprep.subr.mxu0 0.0
  %2292 = vmatpush2.msra.mxu0 0.0
  %2293 = vmatprep.subr.mxu0 0.0
  %2294 = vmatpush2.msra.mxu0 0.0
  %2295 = vmatprep.subr.mxu0 0.0
  %2296 = vmatpush2.msra.mxu0 0.0
  %2297 = vmatprep.subr.mxu0 0.0
  %2298 = vmatpush2.msra.mxu0 0.0
  %2299 = vmatprep.subr.mxu0 0.0
  %2300 = vmatpush2.msra.mxu0 0.0
  %2301 = vmatprep.subr.mxu0 0.0
  %2302 = vmatpush2.msra.mxu0 0.0
  %2303 = vmatprep.subr.mxu0 0.0
  %2304 = vmatpush2.msra.mxu0 0.0
  %2305 = vmatprep.subr.mxu0 0.0
  %2306 = vmatpush2.msra.mxu0 0.0
  %2307 = vmatprep.subr.mxu0 0.0
  %2308 = vmatpush2.msra.mxu0 0.0
  %2309 = vmatprep.mubr.f32.mxu0 0.0
  %2310 = vmatmul.mubr.f32.gmra.mxu0 %v2243
  %v2311 = vpop.f32.mrf.mxu0
  %v2312 = vadd.f32 0.0, %v2311
  %v2313 = vpop.f32.mrf.mxu0
  %v2314 = vadd.f32 0.0, %v2313
  %2315 = vdwg.mxu0
  %v2316 = vadd.f32 %v2080, %v2312
  %v2317 = vadd.f32 %v2082, %v2314
  %v2318 = vxor.u32 %v2316, 2147483648
  %v2319 = vxor.u32 %v2317, 2147483648
  %v2320 = vmul.f32 %v2318, 1.442695
  %v2321 = vpow.pop %v2320
  %v2322 = vmul.f32 %v2319, 1.442695
  %v2323 = vpow.pop %v2322
  %v2324 = vadd.f32 %v2321, 1.0
  %v2325 = vadd.f32 %v2323, 1.0
  %v2326 = vrcp.pop %v2324
  %v2327 = vmul.f32 1.0, %v2326
  %v2328 = vrcp.pop %v2325
  %v2329 = vmul.f32 1.0, %v2328
  %v2330 = vtanh.pop %v2317
  %v2331 = vmul.f32 %v2327, %v2235
  %2333 = vrot.lane.b32.xlu0 %v2330, 64
  %v2334 = vpop.permute.xlu0 %2333
  %v2336 = vmul.f32 %v2327, %v2334
  %2338 = vrot.lane.b32.xlu0 %v2336, 64
  %v2339 = vpop.permute.xlu0 %2338
  %v2341 = vadd.f32 %v2331, %v2339
  %v2342 = vtanh.pop %v2341
  %2344 = vrot.lane.b32.xlu0 %v2342, 64
  %v2345 = vpop.permute.xlu0 %2344
  %v2347 = vmul.f32 %v2329, %v2345
  %v2349 = vsel %vm264, %v2347, 0
  %2351 = vmatprep.subr.mxu0 0.0
  %2352 = vmatpush1.msra.mxu0 0.0
  %2353 = vmatprep.subr.mxu0 0.0
  %2354 = vmatpush1.msra.mxu0 0.0
  %2355 = vmatprep.subr.mxu0 0.0
  %2356 = vmatpush1.msra.mxu0 0.0
  %2357 = vmatprep.subr.mxu0 0.0
  %2358 = vmatpush1.msra.mxu0 0.0
  %2359 = vmatprep.subr.mxu0 0.0
  %2360 = vmatpush1.msra.mxu0 0.0
  %2361 = vmatprep.subr.mxu0 0.0
  %2362 = vmatpush1.msra.mxu0 0.0
  %2363 = vmatprep.subr.mxu0 0.0
  %2364 = vmatpush1.msra.mxu0 0.0
  %2365 = vmatprep.subr.mxu0 0.0
  %2366 = vmatpush1.msra.mxu0 0.0
  %2367 = vmatprep.subr.mxu0 %v2135
  %2368 = vmatpush1.msra.mxu0 %v2134
  %2369 = vmatprep.subr.mxu0 %v2133
  %2370 = vmatpush1.msra.mxu0 %v2132
  %2371 = vmatprep.subr.mxu0 %v2131
  %2372 = vmatpush1.msra.mxu0 %v2130
  %2373 = vmatprep.subr.mxu0 %v2129
  %2374 = vmatpush1.msra.mxu0 %v2128
  %2375 = vmatprep.subr.mxu0 %v2127
  %2376 = vmatpush1.msra.mxu0 %v2126
  %2377 = vmatprep.subr.mxu0 %v2125
  %2378 = vmatpush1.msra.mxu0 %v2124
  %2379 = vmatprep.subr.mxu0 %v2123
  %2380 = vmatpush1.msra.mxu0 %v2122
  %2381 = vmatprep.subr.mxu0 %v2121
  %2382 = vmatpush1.msra.mxu0 %v2120
  %2383 = vmatprep.subr.mxu0 0.0
  %2384 = vmatpush2.msra.mxu0 0.0
  %2385 = vmatprep.subr.mxu0 0.0
  %2386 = vmatpush2.msra.mxu0 0.0
  %2387 = vmatprep.subr.mxu0 0.0
  %2388 = vmatpush2.msra.mxu0 0.0
  %2389 = vmatprep.subr.mxu0 0.0
  %2390 = vmatpush2.msra.mxu0 0.0
  %2391 = vmatprep.subr.mxu0 0.0
  %2392 = vmatpush2.msra.mxu0 0.0
  %2393 = vmatprep.subr.mxu0 0.0
  %2394 = vmatpush2.msra.mxu0 0.0
  %2395 = vmatprep.subr.mxu0 0.0
  %2396 = vmatpush2.msra.mxu0 0.0
  %2397 = vmatprep.subr.mxu0 0.0
  %2398 = vmatpush2.msra.mxu0 0.0
  %2399 = vmatprep.subr.mxu0 0.0
  %2400 = vmatpush2.msra.mxu0 0.0
  %2401 = vmatprep.subr.mxu0 0.0
  %2402 = vmatpush2.msra.mxu0 0.0
  %2403 = vmatprep.subr.mxu0 0.0
  %2404 = vmatpush2.msra.mxu0 0.0
  %2405 = vmatprep.subr.mxu0 0.0
  %2406 = vmatpush2.msra.mxu0 0.0
  %2407 = vmatprep.subr.mxu0 0.0
  %2408 = vmatpush2.msra.mxu0 0.0
  %2409 = vmatprep.subr.mxu0 0.0
  %2410 = vmatpush2.msra.mxu0 0.0
  %2411 = vmatprep.subr.mxu0 0.0
  %2412 = vmatpush2.msra.mxu0 0.0
  %2413 = vmatprep.subr.mxu0 0.0
  %2414 = vmatpush2.msra.mxu0 0.0
  %2415 = vmatprep.mubr.f32.mxu0 0.0
  %2416 = vmatmul.mubr.f32.gmra.mxu0 %v2349
  %v2417 = vpop.f32.mrf.mxu0
  %v2418 = vadd.f32 0.0, %v2417
  %v2419 = vpop.f32.mrf.mxu0
  %v2420 = vadd.f32 0.0, %v2419
  %2421 = vdwg.mxu0
  %v2422 = vadd.f32 %v2086, %v2418
  %v2423 = vadd.f32 %v2088, %v2420
  %v2424 = vxor.u32 %v2422, 2147483648
  %v2425 = vxor.u32 %v2423, 2147483648
  %v2426 = vmul.f32 %v2424, 1.442695
  %v2427 = vpow.pop %v2426
  %v2428 = vmul.f32 %v2425, 1.442695
  %v2429 = vpow.pop %v2428
  %v2430 = vadd.f32 %v2427, 1.0
  %v2431 = vadd.f32 %v2429, 1.0
  %v2432 = vrcp.pop %v2430
  %v2433 = vmul.f32 1.0, %v2432
  %v2434 = vrcp.pop %v2431
  %v2435 = vmul.f32 1.0, %v2434
  %v2436 = vtanh.pop %v2423
  %v2437 = vmul.f32 %v2433, %v2341
  %2439 = vrot.lane.b32.xlu0 %v2436, 64
  %v2440 = vpop.permute.xlu0 %2439
  %v2442 = vmul.f32 %v2433, %v2440
  %2444 = vrot.lane.b32.xlu0 %v2442, 64
  %v2445 = vpop.permute.xlu0 %2444
  %v2447 = vadd.f32 %v2437, %v2445
  %v2448 = vtanh.pop %v2447
  %2450 = vrot.lane.b32.xlu0 %v2448, 64
  %v2451 = vpop.permute.xlu0 %2450
  %v2453 = vmul.f32 %v2435, %v2451
  %v2455 = vsel %vm264, %v2453, 0
  %2457 = vmatprep.subr.mxu0 0.0
  %2458 = vmatpush1.msra.mxu0 0.0
  %2459 = vmatprep.subr.mxu0 0.0
  %2460 = vmatpush1.msra.mxu0 0.0
  %2461 = vmatprep.subr.mxu0 0.0
  %2462 = vmatpush1.msra.mxu0 0.0
  %2463 = vmatprep.subr.mxu0 0.0
  %2464 = vmatpush1.msra.mxu0 0.0
  %2465 = vmatprep.subr.mxu0 0.0
  %2466 = vmatpush1.msra.mxu0 0.0
  %2467 = vmatprep.subr.mxu0 0.0
  %2468 = vmatpush1.msra.mxu0 0.0
  %2469 = vmatprep.subr.mxu0 0.0
  %2470 = vmatpush1.msra.mxu0 0.0
  %2471 = vmatprep.subr.mxu0 0.0
  %2472 = vmatpush1.msra.mxu0 0.0
  %2473 = vmatprep.subr.mxu0 %v2135
  %2474 = vmatpush1.msra.mxu0 %v2134
  %2475 = vmatprep.subr.mxu0 %v2133
  %2476 = vmatpush1.msra.mxu0 %v2132
  %2477 = vmatprep.subr.mxu0 %v2131
  %2478 = vmatpush1.msra.mxu0 %v2130
  %2479 = vmatprep.subr.mxu0 %v2129
  %2480 = vmatpush1.msra.mxu0 %v2128
  %2481 = vmatprep.subr.mxu0 %v2127
  %2482 = vmatpush1.msra.mxu0 %v2126
  %2483 = vmatprep.subr.mxu0 %v2125
  %2484 = vmatpush1.msra.mxu0 %v2124
  %2485 = vmatprep.subr.mxu0 %v2123
  %2486 = vmatpush1.msra.mxu0 %v2122
  %2487 = vmatprep.subr.mxu0 %v2121
  %2488 = vmatpush1.msra.mxu0 %v2120
  %2489 = vmatprep.subr.mxu0 0.0
  %2490 = vmatpush2.msra.mxu0 0.0
  %2491 = vmatprep.subr.mxu0 0.0
  %2492 = vmatpush2.msra.mxu0 0.0
  %2493 = vmatprep.subr.mxu0 0.0
  %2494 = vmatpush2.msra.mxu0 0.0
  %2495 = vmatprep.subr.mxu0 0.0
  %2496 = vmatpush2.msra.mxu0 0.0
  %2497 = vmatprep.subr.mxu0 0.0
  %2498 = vmatpush2.msra.mxu0 0.0
  %2499 = vmatprep.subr.mxu0 0.0
  %2500 = vmatpush2.msra.mxu0 0.0
  %2501 = vmatprep.subr.mxu0 0.0
  %2502 = vmatpush2.msra.mxu0 0.0
  %2503 = vmatprep.subr.mxu0 0.0
  %2504 = vmatpush2.msra.mxu0 0.0
  %2505 = vmatprep.subr.mxu0 0.0
  %2506 = vmatpush2.msra.mxu0 0.0
  %2507 = vmatprep.subr.mxu0 0.0
  %2508 = vmatpush2.msra.mxu0 0.0
  %2509 = vmatprep.subr.mxu0 0.0
  %2510 = vmatpush2.msra.mxu0 0.0
  %2511 = vmatprep.subr.mxu0 0.0
  %2512 = vmatpush2.msra.mxu0 0.0
  %2513 = vmatprep.subr.mxu0 0.0
  %2514 = vmatpush2.msra.mxu0 0.0
  %2515 = vmatprep.subr.mxu0 0.0
  %2516 = vmatpush2.msra.mxu0 0.0
  %2517 = vmatprep.subr.mxu0 0.0
  %2518 = vmatpush2.msra.mxu0 0.0
  %2519 = vmatprep.subr.mxu0 0.0
  %2520 = vmatpush2.msra.mxu0 0.0
  %2521 = vmatprep.mubr.f32.mxu0 0.0
  %2522 = vmatmul.mubr.f32.gmra.mxu0 %v2455
  %v2523 = vpop.f32.mrf.mxu0
  %v2524 = vadd.f32 0.0, %v2523
  %v2525 = vpop.f32.mrf.mxu0
  %v2526 = vadd.f32 0.0, %v2525
  %2527 = vdwg.mxu0
  %v2528 = vadd.f32 %v2092, %v2524
  %v2529 = vadd.f32 %v2094, %v2526
  %v2530 = vxor.u32 %v2528, 2147483648
  %v2531 = vxor.u32 %v2529, 2147483648
  %v2532 = vmul.f32 %v2530, 1.442695
  %v2533 = vpow.pop %v2532
  %v2534 = vmul.f32 %v2531, 1.442695
  %v2535 = vpow.pop %v2534
  %v2536 = vadd.f32 %v2533, 1.0
  %v2537 = vadd.f32 %v2535, 1.0
  %v2538 = vrcp.pop %v2536
  %v2539 = vmul.f32 1.0, %v2538
  %v2540 = vrcp.pop %v2537
  %v2541 = vmul.f32 1.0, %v2540
  %v2542 = vtanh.pop %v2529
  %v2543 = vmul.f32 %v2539, %v2447
  %2545 = vrot.lane.b32.xlu0 %v2542, 64
  %v2546 = vpop.permute.xlu0 %2545
  %v2548 = vmul.f32 %v2539, %v2546
  %2550 = vrot.lane.b32.xlu0 %v2548, 64
  %v2551 = vpop.permute.xlu0 %2550
  %v2553 = vadd.f32 %v2543, %v2551
  %v2554 = vtanh.pop %v2553
  %2556 = vrot.lane.b32.xlu0 %v2554, 64
  %v2557 = vpop.permute.xlu0 %2556
  %v2559 = vmul.f32 %v2541, %v2557
  %v2561 = vsel %vm264, %v2559, 0
  %2563 = vmatprep.subr.mxu0 0.0
  %2564 = vmatpush1.msra.mxu0 0.0
  %2565 = vmatprep.subr.mxu0 0.0
  %2566 = vmatpush1.msra.mxu0 0.0
  %2567 = vmatprep.subr.mxu0 0.0
  %2568 = vmatpush1.msra.mxu0 0.0
  %2569 = vmatprep.subr.mxu0 0.0
  %2570 = vmatpush1.msra.mxu0 0.0
  %2571 = vmatprep.subr.mxu0 0.0
  %2572 = vmatpush1.msra.mxu0 0.0
  %2573 = vmatprep.subr.mxu0 0.0
  %2574 = vmatpush1.msra.mxu0 0.0
  %2575 = vmatprep.subr.mxu0 0.0
  %2576 = vmatpush1.msra.mxu0 0.0
  %2577 = vmatprep.subr.mxu0 0.0
  %2578 = vmatpush1.msra.mxu0 0.0
  %2579 = vmatprep.subr.mxu0 %v2135
  %2580 = vmatpush1.msra.mxu0 %v2134
  %2581 = vmatprep.subr.mxu0 %v2133
  %2582 = vmatpush1.msra.mxu0 %v2132
  %2583 = vmatprep.subr.mxu0 %v2131
  %2584 = vmatpush1.msra.mxu0 %v2130
  %2585 = vmatprep.subr.mxu0 %v2129
  %2586 = vmatpush1.msra.mxu0 %v2128
  %2587 = vmatprep.subr.mxu0 %v2127
  %2588 = vmatpush1.msra.mxu0 %v2126
  %2589 = vmatprep.subr.mxu0 %v2125
  %2590 = vmatpush1.msra.mxu0 %v2124
  %2591 = vmatprep.subr.mxu0 %v2123
  %2592 = vmatpush1.msra.mxu0 %v2122
  %2593 = vmatprep.subr.mxu0 %v2121
  %2594 = vmatpush1.msra.mxu0 %v2120
  %2595 = vmatprep.subr.mxu0 0.0
  %2596 = vmatpush2.msra.mxu0 0.0
  %2597 = vmatprep.subr.mxu0 0.0
  %2598 = vmatpush2.msra.mxu0 0.0
  %2599 = vmatprep.subr.mxu0 0.0
  %2600 = vmatpush2.msra.mxu0 0.0
  %2601 = vmatprep.subr.mxu0 0.0
  %2602 = vmatpush2.msra.mxu0 0.0
  %2603 = vmatprep.subr.mxu0 0.0
  %2604 = vmatpush2.msra.mxu0 0.0
  %2605 = vmatprep.subr.mxu0 0.0
  %2606 = vmatpush2.msra.mxu0 0.0
  %2607 = vmatprep.subr.mxu0 0.0
  %2608 = vmatpush2.msra.mxu0 0.0
  %2609 = vmatprep.subr.mxu0 0.0
  %2610 = vmatpush2.msra.mxu0 0.0
  %2611 = vmatprep.subr.mxu0 0.0
  %2612 = vmatpush2.msra.mxu0 0.0
  %2613 = vmatprep.subr.mxu0 0.0
  %2614 = vmatpush2.msra.mxu0 0.0
  %2615 = vmatprep.subr.mxu0 0.0
  %2616 = vmatpush2.msra.mxu0 0.0
  %2617 = vmatprep.subr.mxu0 0.0
  %2618 = vmatpush2.msra.mxu0 0.0
  %2619 = vmatprep.subr.mxu0 0.0
  %2620 = vmatpush2.msra.mxu0 0.0
  %2621 = vmatprep.subr.mxu0 0.0
  %2622 = vmatpush2.msra.mxu0 0.0
  %2623 = vmatprep.subr.mxu0 0.0
  %2624 = vmatpush2.msra.mxu0 0.0
  %2625 = vmatprep.subr.mxu0 0.0
  %2626 = vmatpush2.msra.mxu0 0.0
  %2627 = vmatprep.mubr.f32.mxu0 0.0
  %2628 = vmatmul.mubr.f32.gmra.mxu0 %v2561
  %v2629 = vpop.f32.mrf.mxu0
  %v2630 = vadd.f32 0.0, %v2629
  %v2631 = vpop.f32.mrf.mxu0
  %v2632 = vadd.f32 0.0, %v2631
  %2633 = vdwg.mxu0
  %v2634 = vadd.f32 %v2098, %v2630
  %v2635 = vadd.f32 %v2100, %v2632
  %v2636 = vxor.u32 %v2634, 2147483648
  %v2637 = vxor.u32 %v2635, 2147483648
  %v2638 = vmul.f32 %v2636, 1.442695
  %v2639 = vpow.pop %v2638
  %v2640 = vmul.f32 %v2637, 1.442695
  %v2641 = vpow.pop %v2640
  %v2642 = vadd.f32 %v2639, 1.0
  %v2643 = vadd.f32 %v2641, 1.0
  %v2644 = vrcp.pop %v2642
  %v2645 = vmul.f32 1.0, %v2644
  %v2646 = vrcp.pop %v2643
  %v2647 = vmul.f32 1.0, %v2646
  %v2648 = vtanh.pop %v2635
  %v2649 = vmul.f32 %v2645, %v2553
  %2651 = vrot.lane.b32.xlu0 %v2648, 64
  %v2652 = vpop.permute.xlu0 %2651
  %v2654 = vmul.f32 %v2645, %v2652
  %2656 = vrot.lane.b32.xlu0 %v2654, 64
  %v2657 = vpop.permute.xlu0 %2656
  %v2659 = vadd.f32 %v2649, %v2657
  %v2660 = vtanh.pop %v2659
  %2662 = vrot.lane.b32.xlu0 %v2660, 64
  %v2663 = vpop.permute.xlu0 %2662
  %v2665 = vmul.f32 %v2647, %v2663
  %v2667 = vsel %vm264, %v2665, 0
  %2669 = vmatprep.subr.mxu0 0.0
  %2670 = vmatpush1.msra.mxu0 0.0
  %2671 = vmatprep.subr.mxu0 0.0
  %2672 = vmatpush1.msra.mxu0 0.0
  %2673 = vmatprep.subr.mxu0 0.0
  %2674 = vmatpush1.msra.mxu0 0.0
  %2675 = vmatprep.subr.mxu0 0.0
  %2676 = vmatpush1.msra.mxu0 0.0
  %2677 = vmatprep.subr.mxu0 0.0
  %2678 = vmatpush1.msra.mxu0 0.0
  %2679 = vmatprep.subr.mxu0 0.0
  %2680 = vmatpush1.msra.mxu0 0.0
  %2681 = vmatprep.subr.mxu0 0.0
  %2682 = vmatpush1.msra.mxu0 0.0
  %2683 = vmatprep.subr.mxu0 0.0
  %2684 = vmatpush1.msra.mxu0 0.0
  %2685 = vmatprep.subr.mxu0 %v2135
  %2686 = vmatpush1.msra.mxu0 %v2134
  %2687 = vmatprep.subr.mxu0 %v2133
  %2688 = vmatpush1.msra.mxu0 %v2132
  %2689 = vmatprep.subr.mxu0 %v2131
  %2690 = vmatpush1.msra.mxu0 %v2130
  %2691 = vmatprep.subr.mxu0 %v2129
  %2692 = vmatpush1.msra.mxu0 %v2128
  %2693 = vmatprep.subr.mxu0 %v2127
  %2694 = vmatpush1.msra.mxu0 %v2126
  %2695 = vmatprep.subr.mxu0 %v2125
  %2696 = vmatpush1.msra.mxu0 %v2124
  %2697 = vmatprep.subr.mxu0 %v2123
  %2698 = vmatpush1.msra.mxu0 %v2122
  %2699 = vmatprep.subr.mxu0 %v2121
  %2700 = vmatpush1.msra.mxu0 %v2120
  %2701 = vmatprep.subr.mxu0 0.0
  %2702 = vmatpush2.msra.mxu0 0.0
  %2703 = vmatprep.subr.mxu0 0.0
  %2704 = vmatpush2.msra.mxu0 0.0
  %2705 = vmatprep.subr.mxu0 0.0
  %2706 = vmatpush2.msra.mxu0 0.0
  %2707 = vmatprep.subr.mxu0 0.0
  %2708 = vmatpush2.msra.mxu0 0.0
  %2709 = vmatprep.subr.mxu0 0.0
  %2710 = vmatpush2.msra.mxu0 0.0
  %2711 = vmatprep.subr.mxu0 0.0
  %2712 = vmatpush2.msra.mxu0 0.0
  %2713 = vmatprep.subr.mxu0 0.0
  %2714 = vmatpush2.msra.mxu0 0.0
  %2715 = vmatprep.subr.mxu0 0.0
  %2716 = vmatpush2.msra.mxu0 0.0
  %2717 = vmatprep.subr.mxu0 0.0
  %2718 = vmatpush2.msra.mxu0 0.0
  %2719 = vmatprep.subr.mxu0 0.0
  %2720 = vmatpush2.msra.mxu0 0.0
  %2721 = vmatprep.subr.mxu0 0.0
  %2722 = vmatpush2.msra.mxu0 0.0
  %2723 = vmatprep.subr.mxu0 0.0
  %2724 = vmatpush2.msra.mxu0 0.0
  %2725 = vmatprep.subr.mxu0 0.0
  %2726 = vmatpush2.msra.mxu0 0.0
  %2727 = vmatprep.subr.mxu0 0.0
  %2728 = vmatpush2.msra.mxu0 0.0
  %2729 = vmatprep.subr.mxu0 0.0
  %2730 = vmatpush2.msra.mxu0 0.0
  %2731 = vmatprep.subr.mxu0 0.0
  %2732 = vmatpush2.msra.mxu0 0.0
  %2733 = vmatprep.mubr.f32.mxu0 0.0
  %2734 = vmatmul.mubr.f32.gmra.mxu0 %v2667
  %v2735 = vpop.f32.mrf.mxu0
  %v2736 = vadd.f32 0.0, %v2735
  %v2737 = vpop.f32.mrf.mxu0
  %v2738 = vadd.f32 0.0, %v2737
  %2739 = vdwg.mxu0
  %v2740 = vadd.f32 %v2104, %v2736
  %v2741 = vadd.f32 %v2106, %v2738
  %v2742 = vxor.u32 %v2740, 2147483648
  %v2743 = vxor.u32 %v2741, 2147483648
  %v2744 = vmul.f32 %v2742, 1.442695
  %v2745 = vpow.pop %v2744
  %v2746 = vmul.f32 %v2743, 1.442695
  %v2747 = vpow.pop %v2746
  %v2748 = vadd.f32 %v2745, 1.0
  %v2749 = vadd.f32 %v2747, 1.0
  %v2750 = vrcp.pop %v2748
  %v2751 = vmul.f32 1.0, %v2750
  %v2752 = vrcp.pop %v2749
  %v2753 = vmul.f32 1.0, %v2752
  %v2754 = vtanh.pop %v2741
  %v2755 = vmul.f32 %v2751, %v2659
  %2757 = vrot.lane.b32.xlu0 %v2754, 64
  %v2758 = vpop.permute.xlu0 %2757
  %v2760 = vmul.f32 %v2751, %v2758
  %2762 = vrot.lane.b32.xlu0 %v2760, 64
  %v2763 = vpop.permute.xlu0 %2762
  %v2765 = vadd.f32 %v2755, %v2763
  %v2766 = vtanh.pop %v2765
  %2768 = vrot.lane.b32.xlu0 %v2766, 64
  %v2769 = vpop.permute.xlu0 %2768
  %v2771 = vmul.f32 %v2753, %v2769
  %v2773 = vsel %vm264, %v2771, 0
  %2775 = vmatprep.subr.mxu0 0.0
  %2776 = vmatpush1.msra.mxu0 0.0
  %2777 = vmatprep.subr.mxu0 0.0
  %2778 = vmatpush1.msra.mxu0 0.0
  %2779 = vmatprep.subr.mxu0 0.0
  %2780 = vmatpush1.msra.mxu0 0.0
  %2781 = vmatprep.subr.mxu0 0.0
  %2782 = vmatpush1.msra.mxu0 0.0
  %2783 = vmatprep.subr.mxu0 0.0
  %2784 = vmatpush1.msra.mxu0 0.0
  %2785 = vmatprep.subr.mxu0 0.0
  %2786 = vmatpush1.msra.mxu0 0.0
  %2787 = vmatprep.subr.mxu0 0.0
  %2788 = vmatpush1.msra.mxu0 0.0
  %2789 = vmatprep.subr.mxu0 0.0
  %2790 = vmatpush1.msra.mxu0 0.0
  %2791 = vmatprep.subr.mxu0 %v2135
  %2792 = vmatpush1.msra.mxu0 %v2134
  %2793 = vmatprep.subr.mxu0 %v2133
  %2794 = vmatpush1.msra.mxu0 %v2132
  %2795 = vmatprep.subr.mxu0 %v2131
  %2796 = vmatpush1.msra.mxu0 %v2130
  %2797 = vmatprep.subr.mxu0 %v2129
  %2798 = vmatpush1.msra.mxu0 %v2128
  %2799 = vmatprep.subr.mxu0 %v2127
  %2800 = vmatpush1.msra.mxu0 %v2126
  %2801 = vmatprep.subr.mxu0 %v2125
  %2802 = vmatpush1.msra.mxu0 %v2124
  %2803 = vmatprep.subr.mxu0 %v2123
  %2804 = vmatpush1.msra.mxu0 %v2122
  %2805 = vmatprep.subr.mxu0 %v2121
  %2806 = vmatpush1.msra.mxu0 %v2120
  %2807 = vmatprep.subr.mxu0 0.0
  %2808 = vmatpush2.msra.mxu0 0.0
  %2809 = vmatprep.subr.mxu0 0.0
  %2810 = vmatpush2.msra.mxu0 0.0
  %2811 = vmatprep.subr.mxu0 0.0
  %2812 = vmatpush2.msra.mxu0 0.0
  %2813 = vmatprep.subr.mxu0 0.0
  %2814 = vmatpush2.msra.mxu0 0.0
  %2815 = vmatprep.subr.mxu0 0.0
  %2816 = vmatpush2.msra.mxu0 0.0
  %2817 = vmatprep.subr.mxu0 0.0
  %2818 = vmatpush2.msra.mxu0 0.0
  %2819 = vmatprep.subr.mxu0 0.0
  %2820 = vmatpush2.msra.mxu0 0.0
  %2821 = vmatprep.subr.mxu0 0.0
  %2822 = vmatpush2.msra.mxu0 0.0
  %2823 = vmatprep.subr.mxu0 0.0
  %2824 = vmatpush2.msra.mxu0 0.0
  %2825 = vmatprep.subr.mxu0 0.0
  %2826 = vmatpush2.msra.mxu0 0.0
  %2827 = vmatprep.subr.mxu0 0.0
  %2828 = vmatpush2.msra.mxu0 0.0
  %2829 = vmatprep.subr.mxu0 0.0
  %2830 = vmatpush2.msra.mxu0 0.0
  %2831 = vmatprep.subr.mxu0 0.0
  %2832 = vmatpush2.msra.mxu0 0.0
  %2833 = vmatprep.subr.mxu0 0.0
  %2834 = vmatpush2.msra.mxu0 0.0
  %2835 = vmatprep.subr.mxu0 0.0
  %2836 = vmatpush2.msra.mxu0 0.0
  %2837 = vmatprep.subr.mxu0 0.0
  %2838 = vmatpush2.msra.mxu0 0.0
  %2839 = vmatprep.mubr.f32.mxu0 0.0
  %2840 = vmatmul.mubr.f32.gmra.mxu0 %v2773
  %v2841 = vpop.f32.mrf.mxu0
  %v2842 = vadd.f32 0.0, %v2841
  %v2843 = vpop.f32.mrf.mxu0
  %v2844 = vadd.f32 0.0, %v2843
  %2845 = vdwg.mxu0
  %v2846 = vadd.f32 %v2110, %v2842
  %v2847 = vadd.f32 %v2112, %v2844
  %v2848 = vxor.u32 %v2846, 2147483648
  %v2849 = vxor.u32 %v2847, 2147483648
  %v2850 = vmul.f32 %v2848, 1.442695
  %v2851 = vpow.pop %v2850
  %v2852 = vmul.f32 %v2849, 1.442695
  %v2853 = vpow.pop %v2852
  %v2854 = vadd.f32 %v2851, 1.0
  %v2855 = vadd.f32 %v2853, 1.0
  %v2856 = vrcp.pop %v2854
  %v2857 = vmul.f32 1.0, %v2856
  %v2858 = vrcp.pop %v2855
  %v2859 = vmul.f32 1.0, %v2858
  %v2860 = vtanh.pop %v2847
  %v2861 = vmul.f32 %v2857, %v2765
  %2863 = vrot.lane.b32.xlu0 %v2860, 64
  %v2864 = vpop.permute.xlu0 %2863
  %v2866 = vmul.f32 %v2857, %v2864
  %2868 = vrot.lane.b32.xlu0 %v2866, 64
  %v2869 = vpop.permute.xlu0 %2868
  %v2871 = vadd.f32 %v2861, %v2869
  %v2872 = vtanh.pop %v2871
  %2874 = vrot.lane.b32.xlu0 %v2872, 64
  %v2875 = vpop.permute.xlu0 %2874
  %v2877 = vmul.f32 %v2859, %v2875
  %v2879 = vsel %vm264, %v2877, 0
  %2881 = vmatprep.subr.mxu0 0.0
  %2882 = vmatpush1.msra.mxu0 0.0
  %2883 = vmatprep.subr.mxu0 0.0
  %2884 = vmatpush1.msra.mxu0 0.0
  %2885 = vmatprep.subr.mxu0 0.0
  %2886 = vmatpush1.msra.mxu0 0.0
  %2887 = vmatprep.subr.mxu0 0.0
  %2888 = vmatpush1.msra.mxu0 0.0
  %2889 = vmatprep.subr.mxu0 0.0
  %2890 = vmatpush1.msra.mxu0 0.0
  %2891 = vmatprep.subr.mxu0 0.0
  %2892 = vmatpush1.msra.mxu0 0.0
  %2893 = vmatprep.subr.mxu0 0.0
  %2894 = vmatpush1.msra.mxu0 0.0
  %2895 = vmatprep.subr.mxu0 0.0
  %2896 = vmatpush1.msra.mxu0 0.0
  %2897 = vmatprep.subr.mxu0 %v2135
  %2898 = vmatpush1.msra.mxu0 %v2134
  %2899 = vmatprep.subr.mxu0 %v2133
  %2900 = vmatpush1.msra.mxu0 %v2132
  %2901 = vmatprep.subr.mxu0 %v2131
  %2902 = vmatpush1.msra.mxu0 %v2130
  %2903 = vmatprep.subr.mxu0 %v2129
  %2904 = vmatpush1.msra.mxu0 %v2128
  %2905 = vmatprep.subr.mxu0 %v2127
  %2906 = vmatpush1.msra.mxu0 %v2126
  %2907 = vmatprep.subr.mxu0 %v2125
  %2908 = vmatpush1.msra.mxu0 %v2124
  %2909 = vmatprep.subr.mxu0 %v2123
  %2910 = vmatpush1.msra.mxu0 %v2122
  %2911 = vmatprep.subr.mxu0 %v2121
  %2912 = vmatpush1.msra.mxu0 %v2120
  %2913 = vmatprep.subr.mxu0 0.0
  %2914 = vmatpush2.msra.mxu0 0.0
  %2915 = vmatprep.subr.mxu0 0.0
  %2916 = vmatpush2.msra.mxu0 0.0
  %2917 = vmatprep.subr.mxu0 0.0
  %2918 = vmatpush2.msra.mxu0 0.0
  %2919 = vmatprep.subr.mxu0 0.0
  %2920 = vmatpush2.msra.mxu0 0.0
  %2921 = vmatprep.subr.mxu0 0.0
  %2922 = vmatpush2.msra.mxu0 0.0
  %2923 = vmatprep.subr.mxu0 0.0
  %2924 = vmatpush2.msra.mxu0 0.0
  %2925 = vmatprep.subr.mxu0 0.0
  %2926 = vmatpush2.msra.mxu0 0.0
  %2927 = vmatprep.subr.mxu0 0.0
  %2928 = vmatpush2.msra.mxu0 0.0
  %2929 = vmatprep.subr.mxu0 0.0
  %2930 = vmatpush2.msra.mxu0 0.0
  %2931 = vmatprep.subr.mxu0 0.0
  %2932 = vmatpush2.msra.mxu0 0.0
  %2933 = vmatprep.subr.mxu0 0.0
  %2934 = vmatpush2.msra.mxu0 0.0
  %2935 = vmatprep.subr.mxu0 0.0
  %2936 = vmatpush2.msra.mxu0 0.0
  %2937 = vmatprep.subr.mxu0 0.0
  %2938 = vmatpush2.msra.mxu0 0.0
  %2939 = vmatprep.subr.mxu0 0.0
  %2940 = vmatpush2.msra.mxu0 0.0
  %2941 = vmatprep.subr.mxu0 0.0
  %2942 = vmatpush2.msra.mxu0 0.0
  %2943 = vmatprep.subr.mxu0 0.0
  %2944 = vmatpush2.msra.mxu0 0.0
  %2945 = vmatprep.mubr.f32.mxu0 0.0
  %2946 = vmatmul.mubr.f32.gmra.mxu0 %v2879
  %v2947 = vpop.f32.mrf.mxu0
  %v2948 = vadd.f32 0.0, %v2947
  %v2949 = vpop.f32.mrf.mxu0
  %v2950 = vadd.f32 0.0, %v2949
  %2951 = vdwg.mxu0
  %v2952 = vadd.f32 %v2116, %v2948
  %v2953 = vadd.f32 %v2118, %v2950
  %v2954 = vxor.u32 %v2952, 2147483648
  %v2955 = vxor.u32 %v2953, 2147483648
  %v2956 = vmul.f32 %v2954, 1.442695
  %v2957 = vpow.pop %v2956
  %v2958 = vmul.f32 %v2955, 1.442695
  %v2959 = vpow.pop %v2958
  %v2960 = vadd.f32 %v2957, 1.0
  %v2961 = vadd.f32 %v2959, 1.0
  %v2962 = vrcp.pop %v2960
  %v2963 = vmul.f32 1.0, %v2962
  %v2964 = vrcp.pop %v2961
  %v2965 = vmul.f32 1.0, %v2964
  %v2966 = vtanh.pop %v2953
  %v2967 = vmul.f32 %v2963, %v2871
  %2969 = vrot.lane.b32.xlu0 %v2966, 64
  %v2970 = vpop.permute.xlu0 %2969
  %v2972 = vmul.f32 %v2963, %v2970
  %2974 = vrot.lane.b32.xlu0 %v2972, 64
  %v2975 = vpop.permute.xlu0 %2974
  %v2977 = vadd.f32 %v2967, %v2975
  %v2978 = vtanh.pop %v2977
  %2980 = vrot.lane.b32.xlu0 %v2978, 64
  %v2981 = vpop.permute.xlu0 %2980
  %v2983 = vmul.f32 %v2965, %v2981
  %v2984 = vld [vmem:[%s3] sm:$0xff]
  %v2985 = vld [vmem:[%s3 + $0x8] sm:$0xff]
  %v2986 = vld [vmem:[%s3 + $0x10] sm:$0xff]
  %v2987 = vld [vmem:[%s3 + $0x18] sm:$0xff]
  %v2988 = vld [vmem:[%s3 + $0x20] sm:$0xff]
  %v2989 = vld [vmem:[%s3 + $0x28] sm:$0xff]
  %v2990 = vld [vmem:[%s3 + $0x30] sm:$0xff]
  %v2991 = vld [vmem:[%s3 + $0x38] sm:$0xff]
  %v2992 = vld [vmem:[%s3 + $0x40] sm:$0xff]
  %v2993 = vld [vmem:[%s3 + $0x48] sm:$0xff]
  %v2994 = vld [vmem:[%s3 + $0x50] sm:$0xff]
  %v2995 = vld [vmem:[%s3 + $0x58] sm:$0xff]
  %v2996 = vld [vmem:[%s3 + $0x60] sm:$0xff]
  %v2997 = vld [vmem:[%s3 + $0x68] sm:$0xff]
  %v2998 = vld [vmem:[%s3 + $0x70] sm:$0xff]
  %v2999 = vld [vmem:[%s3 + $0x78] sm:$0xff]
  %v3000 = vld [vmem:[%s3 + $0x80] sm:$0xff]
  %v3001 = vld [vmem:[%s3 + $0x88] sm:$0xff]
  %v3002 = vld [vmem:[%s3 + $0x90] sm:$0xff]
  %v3003 = vld [vmem:[%s3 + $0x98] sm:$0xff]
  %v3004 = vld [vmem:[%s3 + $0xa0] sm:$0xff]
  %v3005 = vld [vmem:[%s3 + $0xa8] sm:$0xff]
  %v3006 = vld [vmem:[%s3 + $0xb0] sm:$0xff]
  %v3007 = vld [vmem:[%s3 + $0xb8] sm:$0xff]
  %v3008 = vld [vmem:[%s3 + $0xc0] sm:$0xff]
  %v3009 = vld [vmem:[%s3 + $0xc8] sm:$0xff]
  %v3010 = vld [vmem:[%s3 + $0xd0] sm:$0xff]
  %v3011 = vld [vmem:[%s3 + $0xd8] sm:$0xff]
  %v3012 = vld [vmem:[%s3 + $0xe0] sm:$0xff]
  %v3013 = vld [vmem:[%s3 + $0xe8] sm:$0xff]
  %v3014 = vld [vmem:[%s3 + $0xf0] sm:$0xff]
  %v3015 = vld [vmem:[%s3 + $0xf8] sm:$0xff]
  %v3016 = vld [vmem:[%s6] sm:$0x3]
  %v3018 = vlaneseq
  %v3019 = vshrl.u32 %v3018, 7
  %v3020 = vsub.s32 0, %v3019
  %v3021 = vrot.slane %v3016, %v3020
  %v3022 = vlaneseq
  %v3023 = vshrl.u32 %v3022, 7
  %v3024 = vsub.s32 1, %v3023
  %v3025 = vrot.slane %v3016, %v3024
  %3028 = vmatprep.subr.mxu0 %v3015
  %3029 = vmatpush1.msra.mxu0 %v3014
  %3030 = vmatprep.subr.mxu0 %v3013
  %3031 = vmatpush1.msra.mxu0 %v3012
  %3032 = vmatprep.subr.mxu0 %v3011
  %3033 = vmatpush1.msra.mxu0 %v3010
  %3034 = vmatprep.subr.mxu0 %v3009
  %3035 = vmatpush1.msra.mxu0 %v3008
  %3036 = vmatprep.subr.mxu0 %v3007
  %3037 = vmatpush1.msra.mxu0 %v3006
  %3038 = vmatprep.subr.mxu0 %v3005
  %3039 = vmatpush1.msra.mxu0 %v3004
  %3040 = vmatprep.subr.mxu0 %v3003
  %3041 = vmatpush1.msra.mxu0 %v3002
  %3042 = vmatprep.subr.mxu0 %v3001
  %3043 = vmatpush1.msra.mxu0 %v3000
  %3044 = vmatprep.subr.mxu0 %v2999
  %3045 = vmatpush1.msra.mxu0 %v2998
  %3046 = vmatprep.subr.mxu0 %v2997
  %3047 = vmatpush1.msra.mxu0 %v2996
  %3048 = vmatprep.subr.mxu0 %v2995
  %3049 = vmatpush1.msra.mxu0 %v2994
  %3050 = vmatprep.subr.mxu0 %v2993
  %3051 = vmatpush1.msra.mxu0 %v2992
  %3052 = vmatprep.subr.mxu0 %v2991
  %3053 = vmatpush1.msra.mxu0 %v2990
  %3054 = vmatprep.subr.mxu0 %v2989
  %3055 = vmatpush1.msra.mxu0 %v2988
  %3056 = vmatprep.subr.mxu0 %v2987
  %3057 = vmatpush1.msra.mxu0 %v2986
  %3058 = vmatprep.subr.mxu0 %v2985
  %3059 = vmatpush1.msra.mxu0 %v2984
  %3060 = vmatprep.subr.mxu0 0.0
  %3061 = vmatpush2.msra.mxu0 0.0
  %3062 = vmatprep.subr.mxu0 0.0
  %3063 = vmatpush2.msra.mxu0 0.0
  %3064 = vmatprep.subr.mxu0 0.0
  %3065 = vmatpush2.msra.mxu0 0.0
  %3066 = vmatprep.subr.mxu0 0.0
  %3067 = vmatpush2.msra.mxu0 0.0
  %3068 = vmatprep.subr.mxu0 0.0
  %3069 = vmatpush2.msra.mxu0 0.0
  %3070 = vmatprep.subr.mxu0 0.0
  %3071 = vmatpush2.msra.mxu0 0.0
  %3072 = vmatprep.subr.mxu0 0.0
  %3073 = vmatpush2.msra.mxu0 0.0
  %3074 = vmatprep.subr.mxu0 0.0
  %3075 = vmatpush2.msra.mxu0 0.0
  %3076 = vmatprep.subr.mxu0 0.0
  %3077 = vmatpush2.msra.mxu0 0.0
  %3078 = vmatprep.subr.mxu0 0.0
  %3079 = vmatpush2.msra.mxu0 0.0
  %3080 = vmatprep.subr.mxu0 0.0
  %3081 = vmatpush2.msra.mxu0 0.0
  %3082 = vmatprep.subr.mxu0 0.0
  %3083 = vmatpush2.msra.mxu0 0.0
  %3084 = vmatprep.subr.mxu0 0.0
  %3085 = vmatpush2.msra.mxu0 0.0
  %3086 = vmatprep.subr.mxu0 0.0
  %3087 = vmatpush2.msra.mxu0 0.0
  %3088 = vmatprep.subr.mxu0 0.0
  %3089 = vmatpush2.msra.mxu0 0.0
  %3090 = vmatprep.subr.mxu0 0.0
  %3091 = vmatpush2.msra.mxu0 0.0
  %3092 = vmatprep.mubr.f32.mxu0 0.0
  %3093 = vmatmul.mubr.f32.gmra.mxu0 %v1962
  %v3094 = vpop.f32.mrf.mxu0
  %v3095 = vadd.f32 %v3021, %v3094
  %v3096 = vpop.f32.mrf.mxu0
  %v3097 = vadd.f32 %v3025, %v3096
  %3098 = vdwg.mxu0
  %v3099 = vxor.u32 %v3095, 2147483648
  %v3100 = vxor.u32 %v3097, 2147483648
  %v3101 = vmul.f32 %v3099, 1.442695
  %v3102 = vpow.pop %v3101
  %v3103 = vmul.f32 %v3100, 1.442695
  %v3104 = vpow.pop %v3103
  %v3105 = vadd.f32 %v3102, 1.0
  %v3106 = vadd.f32 %v3104, 1.0
  %v3107 = vrcp.pop %v3105
  %v3108 = vmul.f32 1.0, %v3107
  %v3109 = vrcp.pop %v3106
  %v3110 = vmul.f32 1.0, %v3109
  %v3111 = vtanh.pop %v3097
  %v3112 = vmul.f32 %v3108, 0.0
  %3114 = vrot.lane.b32.xlu0 %v3111, 64
  %v3115 = vpop.permute.xlu0 %3114
  %v3117 = vmul.f32 %v3108, %v3115
  %3119 = vrot.lane.b32.xlu0 %v3117, 64
  %v3120 = vpop.permute.xlu0 %3119
  %v3122 = vadd.f32 %v3112, %v3120
  %v3123 = vtanh.pop %v3122
  %3125 = vrot.lane.b32.xlu0 %v3123, 64
  %v3126 = vpop.permute.xlu0 %3125
  %v3128 = vmul.f32 %v3110, %v3126
  %3129 = vst.msk [vmem:[%s7] sm:$0xff] %vm264, %v2983
  %3131 = vrot.lane.b32.xlu0 %v3128, 64
  %v3132 = vpop.permute.xlu0 %3131
  %3134 = vst.msk [vmem:[%s7] sm:$0xff] %vm266, %v3132
  // Predicated region
  $region30: #{text_lstm_forward.1} parent=0 // pred_check
    _
  $region31: #{text_lstm_forward.1} parent=0 // pred_check_branch
    %3136 = sbr.rel (0) target = $region33
  $region32: #{text_lstm_forward.1} parent=0 // pred_region
    _
  $region33: #{text_lstm_forward.1} parent=0 // pred_fallthru
    _
  // Predicated region
  $region34: #{text_lstm_forward.1} parent=0 // pred_check
    _
  $region35: #{text_lstm_forward.1} parent=0 // pred_check_branch
    %3138 = sbr.rel (0) target = $region37
  $region36: #{text_lstm_forward.1} parent=0 // pred_region
    _
  $region37: #{text_lstm_forward.1} parent=0 // pred_fallthru
    _

</llo_original>
